<compile_context>
chip_gen: v6e
topology: v6e:2x2x1
jax: 0.10.0
libtpu: 0.0.40
codegen_flags: <defaults>
</compile_context>

<pallas_src>
import jax
import jax.numpy as jnp
from jax.experimental import pallas as pl
from jax.experimental.pallas import tpu as pltpu

LANE = 128
COMPUTE_DTYPE = jnp.bfloat16        # storage / matmul dtype; accumulation stays f32
VMEM_BUDGET = 24 * 1024 * 1024      # per-call working-set target (headroom on v7x's 64 MiB)
VMEM_LIMIT = 48 * 1024 * 1024       # raise v5e's 16 MiB scoped default; safe on all gens


def _round_up(n, m):
    return ((n + m - 1) // m) * m


def _itemsize(dt):
    return jnp.dtype(dt).itemsize


def _choose_block(m_rows, cap, per_row_bytes, fixed_bytes):
    """Largest sublane-aligned M tile under the VMEM budget and cap, guaranteeing
    >=2 grid steps when possible (so "parallel" semantics can use both v7x cores)."""
    budget_rows = max(8, (VMEM_BUDGET - fixed_bytes) // max(per_row_bytes, 1))
    blk = min(cap, budget_rows, _round_up(m_rows, 8))
    blk = max(8, (blk // 8) * 8)
    if _round_up(m_rows, blk) // blk < 2 and blk > 8:
        blk = max(8, _round_up(blk // 2, 8))
    return blk


# ----------------------------------------------------------------------------
# Kernel A: fused conv (im2col matmul) + bias + 2x2 max-pool + ReLU.
# p_ref holds the four pool-window parities; they are collapsed into one long
# weight-stationary MXU dot (layout-preserving leading-dim reshape), pooling is
# a 3-op elementwise max tree. Output is lane-dense (128 channels, bf16).
# ----------------------------------------------------------------------------
def _conv_pool_relu_kernel(p_ref, w_ref, b_ref, o_ref):
    four, m, k = p_ref.shape
    y = jnp.dot(p_ref[...].reshape(four * m, k), w_ref[...],
                preferred_element_type=jnp.float32)
    # 2x2 max-pool across the four parity slabs (sublane-aligned static slices).
    y = jnp.maximum(jnp.maximum(y[:m], y[m:2 * m]),
                    jnp.maximum(y[2 * m:3 * m], y[3 * m:]))
    # bias-before-max commutes (same bias per parity); relu(max) == max(relu)
    o_ref[...] = jnp.maximum(y + b_ref[...], 0.0).astype(o_ref.dtype)


# ----------------------------------------------------------------------------
# Kernel B: the full FC chain, all weights resident in VMEM, padded to 128 lanes.
# ----------------------------------------------------------------------------
def _fc_chain_kernel(x_ref, w1_ref, b1_ref, w2_ref, b2_ref, w3_ref, b3_ref, o_ref):
    h = jnp.dot(x_ref[...], w1_ref[...], preferred_element_type=jnp.float32) + b1_ref[...]
    h = jnp.maximum(h, 0.0).astype(w2_ref.dtype)
    h = jnp.dot(h, w2_ref[...], preferred_element_type=jnp.float32) + b2_ref[...]
    h = jnp.maximum(h, 0.0).astype(w3_ref.dtype)
    o_ref[...] = jnp.dot(h, w3_ref[...], preferred_element_type=jnp.float32) + b3_ref[...]


# ----------------------------------------------------------------------------
# Glue: parity-grouped im2col on NHWC input (XLA ops). Patch-feature ordering is
# (dy, dx, ci), matching the weight permutation done in prepare_params(). The 4
# leading "parity" slabs are the 4 members of each 2x2 pool window.
# ----------------------------------------------------------------------------
def _im2col_pool_parity(x, k, k_pad, m_block):
    B, H, W, C = x.shape
    Hp, Wp = (H - k + 1) // 2, (W - k + 1) // 2
    cols = [x[:, dy:dy + 2 * Hp, dx:dx + 2 * Wp, :]
            for dy in range(k) for dx in range(k)]
    p = jnp.stack(cols, axis=3)                        # [B, 2Hp, 2Wp, k*k, C]
    p = p.reshape(B, Hp, 2, Wp, 2, k * k * C)          # split pool parities
    p = p.transpose(2, 4, 0, 1, 3, 5)                  # [2, 2, B, Hp, Wp, k*k*C]
    p = p.reshape(4, B * Hp * Wp, k * k * C)
    M2 = B * Hp * Wp
    M_pad = _round_up(M2, m_block)
    p = jnp.pad(p, ((0, 0), (0, M_pad - M2), (0, k_pad - k * k * C)))
    return p, M2, Hp, Wp


def conv_relu_pool(x_nhwc, wmat, bvec, k):
    """x_nhwc: [B,H,W,C]. wmat: [K_pad,128] bf16 ((dy,dx,ci)-ordered rows, zero-padded).
    bvec: [1,128] f32. Returns pooled+ReLU'd activation [B, Hp, Wp, 128] (bf16)."""
    B, H, W, C = x_nhwc.shape
    K_pad = wmat.shape[0]
    Hp, Wp = (H - k + 1) // 2, (W - k + 1) // 2
    M2 = B * Hp * Wp
    eb = _itemsize(COMPUTE_DTYPE)
    per_row = 2 * 4 * K_pad * eb + 2 * LANE * eb               # dbl-buffered patches + out
    fixed = K_pad * LANE * eb + LANE * 4                       # resident weights + bias
    m_block = _choose_block(M2, 2048, per_row, fixed)

    patches, M2, Hp, Wp = _im2col_pool_parity(
        x_nhwc.astype(COMPUTE_DTYPE), k, K_pad, m_block)
    M_pad = patches.shape[1]

    cost = pl.CostEstimate(
        flops=2 * 4 * M_pad * K_pad * LANE,
        transcendentals=0,
        bytes_accessed=int(4 * M_pad * K_pad * eb + K_pad * LANE * eb
                           + LANE * 4 + M_pad * LANE * eb))

    out = pl.pallas_call(
        _conv_pool_relu_kernel,
        out_shape=jax.ShapeDtypeStruct((M_pad, LANE), COMPUTE_DTYPE),
        grid=(M_pad // m_block,),
        in_specs=[
            pl.BlockSpec((4, m_block, K_pad), lambda m: (0, m, 0)),
            pl.BlockSpec((K_pad, LANE), lambda m: (0, 0)),
            pl.BlockSpec((1, LANE), lambda m: (0, 0)),
        ],
        out_specs=pl.BlockSpec((m_block, LANE), lambda m: (m, 0)),
        compiler_params=pltpu.CompilerParams(
            dimension_semantics=("parallel",),
            vmem_limit_bytes=VMEM_LIMIT),
        cost_estimate=cost,
    )(patches, wmat, bvec)
    return out[:M2].reshape(B, Hp, Wp, LANE)


def fc_chain(feat, w1, b1, w2, b2, w3, b3):
    """feat: [B, 3200] (a2 reshaped, lane-padded layout). Returns [B, 10] f32 logits."""
    B, F = feat.shape
    K1 = w1.shape[0]                                   # 3200 = 5*5*128
    eb = _itemsize(COMPUTE_DTYPE)
    per_row = 2 * K1 * eb + 2 * LANE * 4
    fixed = (K1 * LANE + 2 * LANE * LANE) * eb + 3 * LANE * 4
    b_block = _choose_block(B, 1024, per_row, fixed)
    B_pad = _round_up(B, b_block)
    xp = jnp.pad(feat, ((0, B_pad - B), (0, K1 - F))).astype(COMPUTE_DTYPE)

    cost = pl.CostEstimate(
        flops=2 * B_pad * (K1 + 2 * LANE) * LANE,
        transcendentals=0,
        bytes_accessed=int(B_pad * K1 * eb + (K1 * LANE + 2 * LANE * LANE) * eb
                           + 3 * LANE * 4 + B_pad * LANE * 4))

    full = lambda i: (0, 0)
    out = pl.pallas_call(
        _fc_chain_kernel,
        out_shape=jax.ShapeDtypeStruct((B_pad, LANE), jnp.float32),
        grid=(B_pad // b_block,),
        in_specs=[
            pl.BlockSpec((b_block, K1), lambda i: (i, 0)),
            pl.BlockSpec((K1, LANE), full), pl.BlockSpec((1, LANE), full),
            pl.BlockSpec((LANE, LANE), full), pl.BlockSpec((1, LANE), full),
            pl.BlockSpec((LANE, LANE), full), pl.BlockSpec((1, LANE), full),
        ],
        out_specs=pl.BlockSpec((b_block, LANE), lambda i: (i, 0)),
        compiler_params=pltpu.CompilerParams(
            dimension_semantics=("parallel",),
            vmem_limit_bytes=VMEM_LIMIT),
        cost_estimate=cost,
    )(xp, w1, b1, w2, b2, w3, b3)
    return out[:B, :10]


# ----------------------------------------------------------------------------
# Parameter preparation (run ONCE, outside the jitted forward): permute conv
# weights to (dy, dx, ci) rows, re-permute fc1 rows to the lane-padded [Hp,Wp,128]
# activation layout, zero-pad everything to 128 lanes / 128-multiple K, cast bf16.
# ----------------------------------------------------------------------------
def prepare_params(params, compute_dtype=COMPUTE_DTYPE):
    def conv_wm(w):
        co, ci, kh, kw = w.shape
        m = w.transpose(2, 3, 1, 0).reshape(kh * kw * ci, co)     # rows = (dy, dx, ci)
        m = jnp.pad(m, ((0, _round_up(kh * kw * ci, LANE) - kh * kw * ci),
                        (0, LANE - co)))
        return m.astype(compute_dtype)

    def padb(b):
        return jnp.pad(b, (0, LANE - b.shape[0])).reshape(1, LANE).astype(jnp.float32)

    # fc1 rows re-permuted: torch flatten index is c*25 + h*5 + w; our a2 flatten
    # index is h*640 + w*128 + c (channels lane-padded to 128 with zero rows).
    fc1 = params["fc1_w"]                                          # [120, 400]
    fc1 = fc1.T.reshape(16, 5, 5, 120).transpose(1, 2, 0, 3)       # [h, w, c, out]
    fc1 = jnp.pad(fc1, ((0, 0), (0, 0), (0, LANE - 16), (0, LANE - 120)))
    fc1_wm = fc1.reshape(5 * 5 * LANE, LANE).astype(compute_dtype)

    def fc_wm(w):  # [out, in] -> [128, 128]
        m = w.T
        m = jnp.pad(m, ((0, LANE - m.shape[0]), (0, LANE - m.shape[1])))
        return m.astype(compute_dtype)

    return {
        "conv1_wm": conv_wm(params["conv1_w"]), "conv1_b": padb(params["conv1_b"]),
        "conv2_wm": conv_wm(params["conv2_w"]), "conv2_b": padb(params["conv2_b"]),
        "fc1_wm": fc1_wm, "fc1_b": padb(params["fc1_b"]),
        "fc2_wm": fc_wm(params["fc2_w"]), "fc2_b": padb(params["fc2_b"]),
        "fc3_wm": fc_wm(params["fc3_w"]), "fc3_b": padb(params["fc3_b"]),
    }


# ----------------------------------------------------------------------------
# Full forward pass (mirrors CNN.forward)
# ----------------------------------------------------------------------------
def cnn_forward(x, prep):
    B = x.shape[0]
    x = x.transpose(0, 2, 3, 1)                                     # NCHW -> NHWC, once
    # stage 1: conv1(3->6,k5) + ReLU + 2x2 maxpool, one kernel
    a1 = conv_relu_pool(x, prep["conv1_wm"], prep["conv1_b"], k=5)  # [B,14,14,128]
    # stage 2: conv2(6->16,k5) + ReLU + 2x2 maxpool, one kernel (reads 6 useful lanes)
    # TODO(synk): fuse conv1+conv2 into one batch-gridded pallas_call with in-kernel
    # im2col so the lane-padded a1 never round-trips through HBM.
    a2 = conv_relu_pool(a1[..., :6], prep["conv2_wm"], prep["conv2_b"], k=5)  # [B,5,5,128]
    # fc1 weights are pre-permuted to a2's native lane-padded layout -> plain reshape
    feat = a2.reshape(B, 5 * 5 * LANE)                              # [B, 3200]
    # stage 3: fc1 -> relu -> fc2 -> relu -> fc3, one kernel
    return fc_chain(feat, prep["fc1_wm"], prep["fc1_b"], prep["fc2_wm"],
                    prep["fc2_b"], prep["fc3_wm"], prep["fc3_b"])


# ----------------------------------------------------------------------------
# Pure-JAX f32 reference for the correctness check
# ----------------------------------------------------------------------------
def ref_forward(x, params):
    def conv(x, w, b):
        y = jax.lax.conv_general_dilated(
            x, w, window_strides=(1, 1), padding="VALID",
            dimension_numbers=("NCHW", "OIHW", "NCHW"))
        return y + b[None, :, None, None]

    def pool(x):
        return jax.lax.reduce_window(
            x, -jnp.inf, jax.lax.max, (1, 1, 2, 2), (1, 1, 2, 2), "VALID")

    x = pool(jax.nn.relu(conv(x, params["conv1_w"], params["conv1_b"])))
    x = pool(jax.nn.relu(conv(x, params["conv2_w"], params["conv2_b"])))
    x = x.reshape(x.shape[0], 16 * 5 * 5)
    x = jax.nn.relu(x @ params["fc1_w"].T + params["fc1_b"])
    x = jax.nn.relu(x @ params["fc2_w"].T + params["fc2_b"])
    x = x @ params["fc3_w"].T + params["fc3_b"]
    return x


def init_params(key):
    ks = jax.random.split(key, 10)
    n = lambda k, shape, s=0.1: (s * jax.random.normal(k, shape)).astype(jnp.float32)
    return {
        "conv1_w": n(ks[0], (6, 3, 5, 5)),
        "conv1_b": n(ks[1], (6,)),
        "conv2_w": n(ks[2], (16, 6, 5, 5)),
        "conv2_b": n(ks[3], (16,)),
        "fc1_w": n(ks[4], (120, 400)),   # torch Linear layout [out, in]
        "fc1_b": n(ks[5], (120,)),
        "fc2_w": n(ks[6], (84, 120)),
        "fc2_b": n(ks[7], (84,)),
        "fc3_w": n(ks[8], (10, 84)),
        "fc3_b": n(ks[9], (10,)),
    }


if __name__ == "__main__":
    key = jax.random.PRNGKey(0)
    pkey, xkey = jax.random.split(key)
    params = init_params(pkey)
    prep = prepare_params(params)        # once, outside the jitted forward

    # CIFAR-10 sized input (the 16*5*5 flatten in forward() implies 32x32).
    x = jax.random.normal(xkey, (2, 3, 32, 32), dtype=jnp.float32)

    out = jax.jit(cnn_forward)(x, prep)
    out = jax.block_until_ready(out)
    assert out.shape == (2, 10)

    ref = ref_forward(x, params)
    err = jnp.max(jnp.abs(out - ref))
    # bf16 storage/compute with f32 accumulation -> loosened tolerance vs pure f32.
    assert jnp.allclose(out, ref, rtol=5e-2, atol=5e-2), f"max abs err {err}"

    print("KERNEL_OK")
</pallas_src>

<mosaic_0001>
module attributes {stable_mosaic.version = 11 : i64} {
  func.func @_conv_pool_relu_kernel(%arg0: i32, %arg1: memref<4x200x128xbf16, #tpu.memory_space<vmem>>, %arg2: memref<128x128xbf16, #tpu.memory_space<vmem>>, %arg3: memref<1x128xf32, #tpu.memory_space<vmem>>, %arg4: memref<200x128xbf16, #tpu.memory_space<vmem>>) attributes {dimension_semantics = [#tpu.dimension_semantics<parallel>], iteration_bounds = array<i64: 2>, scalar_prefetch = 0 : i64, scratch_operands = 0 : i64, tpu.core_type = #tpu.core_type<tc>, window_params = [{transform_indices = @transform_0, window_bounds = array<i64: 4, 200, 128>}, {pipeline_mode = #tpu.pipeline_mode<synchronous>, transform_indices = @transform_1, window_bounds = array<i64: 128, 128>}, {pipeline_mode = #tpu.pipeline_mode<synchronous>, transform_indices = @transform_2, window_bounds = array<i64: 1, 128>}, {transform_indices = @transform_3, window_bounds = array<i64: 200, 128>}]} {
    %c0 = arith.constant 0 : index
    %c0_0 = arith.constant 0 : index
    %c0_1 = arith.constant 0 : index
    %0 = vector.load %arg1[%c0, %c0_0, %c0_1] : memref<4x200x128xbf16, #tpu.memory_space<vmem>>, vector<4x200x128xbf16>
    %1 = vector.shape_cast %0 : vector<4x200x128xbf16> to vector<800x128xbf16>
    %c0_2 = arith.constant 0 : index
    %c0_3 = arith.constant 0 : index
    %2 = vector.load %arg2[%c0_2, %c0_3] : memref<128x128xbf16, #tpu.memory_space<vmem>>, vector<128x128xbf16>
    %cst = arith.constant dense<0.000000e+00> : vector<800x128xf32>
    %3 = tpu.matmul %1, %2, %cst {dimension_numbers = #tpu.dot_dimension_numbers<[1], [0], [0], [1], [0, 0, 1, 1], [], []>} : vector<800x128xbf16>, vector<128x128xbf16>, vector<800x128xf32> -> vector<800x128xf32>
    %4 = vector.extract_strided_slice %3 {offsets = [0, 0], sizes = [200, 128], strides = [1, 1]} : vector<800x128xf32> to vector<200x128xf32>
    %5 = vector.extract_strided_slice %3 {offsets = [200, 0], sizes = [200, 128], strides = [1, 1]} : vector<800x128xf32> to vector<200x128xf32>
    %6 = arith.maximumf %4, %5 : vector<200x128xf32>
    %7 = vector.extract_strided_slice %3 {offsets = [400, 0], sizes = [200, 128], strides = [1, 1]} : vector<800x128xf32> to vector<200x128xf32>
    %8 = vector.extract_strided_slice %3 {offsets = [600, 0], sizes = [200, 128], strides = [1, 1]} : vector<800x128xf32> to vector<200x128xf32>
    %9 = arith.maximumf %7, %8 : vector<200x128xf32>
    %10 = arith.maximumf %6, %9 : vector<200x128xf32>
    %c0_4 = arith.constant 0 : index
    %c0_5 = arith.constant 0 : index
    %11 = vector.load %arg3[%c0_4, %c0_5] : memref<1x128xf32, #tpu.memory_space<vmem>>, vector<1x128xf32>
    %12 = vector.broadcast %11 : vector<1x128xf32> to vector<200x128xf32>
    %13 = arith.addf %10, %12 : vector<200x128xf32>
    %cst_6 = arith.constant 0.000000e+00 : f32
    %14 = vector.broadcast %cst_6 : f32 to vector<200x128xf32>
    %15 = arith.maximumf %13, %14 : vector<200x128xf32>
    %16 = arith.truncf %15 : vector<200x128xf32> to vector<200x128xbf16>
    %c0_7 = arith.constant 0 : index
    %c0_8 = arith.constant 0 : index
    %17 = vector.load %arg4[%c0_7, %c0_8] : memref<200x128xbf16, #tpu.memory_space<vmem>>, vector<200x128xbf16>
    tpu.vector_store %arg4[%c0_7, %c0_8], %16 {strides = array<i32>} : memref<200x128xbf16, #tpu.memory_space<vmem>>, vector<200x128xbf16>,
    return
  }
  func.func @transform_0(%arg0: i32) -> (i32, i32, i32) {
    %c0_i32 = arith.constant 0 : i32
    %c0_i32_0 = arith.constant 0 : i32
    %c0_i32_1 = arith.constant 0 : i32
    return %c0_i32, %arg0, %c0_i32_0 : i32, i32, i32
  }
  func.func @transform_1(%arg0: i32) -> (i32, i32) {
    %c0_i32 = arith.constant 0 : i32
    %c0_i32_0 = arith.constant 0 : i32
    %c0_i32_1 = arith.constant 0 : i32
    return %c0_i32, %c0_i32_0 : i32, i32
  }
  func.func @transform_2(%arg0: i32) -> (i32, i32) {
    %c0_i32 = arith.constant 0 : i32
    %c0_i32_0 = arith.constant 0 : i32
    %c0_i32_1 = arith.constant 0 : i32
    return %c0_i32, %c0_i32_0 : i32, i32
  }
  func.func @transform_3(%arg0: i32) -> (i32, i32) {
    %c0_i32 = arith.constant 0 : i32
    %c0_i32_0 = arith.constant 0 : i32
    return %arg0, %c0_i32 : i32, i32
  }
}

module attributes {stable_mosaic.version = 11 : i64} {
  func.func @_conv_pool_relu_kernel(%arg0: i32, %arg1: memref<4x32x256xbf16, #tpu.memory_space<vmem>>, %arg2: memref<256x128xbf16, #tpu.memory_space<vmem>>, %arg3: memref<1x128xf32, #tpu.memory_space<vmem>>, %arg4: memref<32x128xbf16, #tpu.memory_space<vmem>>) attributes {dimension_semantics = [#tpu.dimension_semantics<parallel>], iteration_bounds = array<i64: 2>, scalar_prefetch = 0 : i64, scratch_operands = 0 : i64, tpu.core_type = #tpu.core_type<tc>, window_params = [{transform_indices = @transform_0, window_bounds = array<i64: 4, 32, 256>}, {pipeline_mode = #tpu.pipeline_mode<synchronous>, transform_indices = @transform_1, window_bounds = array<i64: 256, 128>}, {pipeline_mode = #tpu.pipeline_mode<synchronous>, transform_indices = @transform_2, window_bounds = array<i64: 1, 128>}, {transform_indices = @transform_3, window_bounds = array<i64: 32, 128>}]} {
    %c0 = arith.constant 0 : index
    %c0_0 = arith.constant 0 : index
    %c0_1 = arith.constant 0 : index
    %0 = vector.load %arg1[%c0, %c0_0, %c0_1] : memref<4x32x256xbf16, #tpu.memory_space<vmem>>, vector<4x32x256xbf16>
    %1 = vector.shape_cast %0 : vector<4x32x256xbf16> to vector<128x256xbf16>
    %c0_2 = arith.constant 0 : index
    %c0_3 = arith.constant 0 : index
    %2 = vector.load %arg2[%c0_2, %c0_3] : memref<256x128xbf16, #tpu.memory_space<vmem>>, vector<256x128xbf16>
    %cst = arith.constant dense<0.000000e+00> : vector<128x128xf32>
    %3 = tpu.matmul %1, %2, %cst {dimension_numbers = #tpu.dot_dimension_numbers<[1], [0], [0], [1], [0, 0, 1, 1], [], []>} : vector<128x256xbf16>, vector<256x128xbf16>, vector<128x128xf32> -> vector<128x128xf32>
    %4 = vector.extract_strided_slice %3 {offsets = [0, 0], sizes = [32, 128], strides = [1, 1]} : vector<128x128xf32> to vector<32x128xf32>
    %5 = vector.extract_strided_slice %3 {offsets = [32, 0], sizes = [32, 128], strides = [1, 1]} : vector<128x128xf32> to vector<32x128xf32>
    %6 = arith.maximumf %4, %5 : vector<32x128xf32>
    %7 = vector.extract_strided_slice %3 {offsets = [64, 0], sizes = [32, 128], strides = [1, 1]} : vector<128x128xf32> to vector<32x128xf32>
    %8 = vector.extract_strided_slice %3 {offsets = [96, 0], sizes = [32, 128], strides = [1, 1]} : vector<128x128xf32> to vector<32x128xf32>
    %9 = arith.maximumf %7, %8 : vector<32x128xf32>
    %10 = arith.maximumf %6, %9 : vector<32x128xf32>
    %c0_4 = arith.constant 0 : index
    %c0_5 = arith.constant 0 : index
    %11 = vector.load %arg3[%c0_4, %c0_5] : memref<1x128xf32, #tpu.memory_space<vmem>>, vector<1x128xf32>
    %12 = vector.broadcast %11 : vector<1x128xf32> to vector<32x128xf32>
    %13 = arith.addf %10, %12 : vector<32x128xf32>
    %cst_6 = arith.constant 0.000000e+00 : f32
    %14 = vector.broadcast %cst_6 : f32 to vector<32x128xf32>
    %15 = arith.maximumf %13, %14 : vector<32x128xf32>
    %16 = arith.truncf %15 : vector<32x128xf32> to vector<32x128xbf16>
    %c0_7 = arith.constant 0 : index
    %c0_8 = arith.constant 0 : index
    %17 = vector.load %arg4[%c0_7, %c0_8] : memref<32x128xbf16, #tpu.memory_space<vmem>>, vector<32x128xbf16>
    tpu.vector_store %arg4[%c0_7, %c0_8], %16 {strides = array<i32>} : memref<32x128xbf16, #tpu.memory_space<vmem>>, vector<32x128xbf16>,
    return
  }
  func.func @transform_0(%arg0: i32) -> (i32, i32, i32) {
    %c0_i32 = arith.constant 0 : i32
    %c0_i32_0 = arith.constant 0 : i32
    %c0_i32_1 = arith.constant 0 : i32
    return %c0_i32, %arg0, %c0_i32_0 : i32, i32, i32
  }
  func.func @transform_1(%arg0: i32) -> (i32, i32) {
    %c0_i32 = arith.constant 0 : i32
    %c0_i32_0 = arith.constant 0 : i32
    %c0_i32_1 = arith.constant 0 : i32
    return %c0_i32, %c0_i32_0 : i32, i32
  }
  func.func @transform_2(%arg0: i32) -> (i32, i32) {
    %c0_i32 = arith.constant 0 : i32
    %c0_i32_0 = arith.constant 0 : i32
    %c0_i32_1 = arith.constant 0 : i32
    return %c0_i32, %c0_i32_0 : i32, i32
  }
  func.func @transform_3(%arg0: i32) -> (i32, i32) {
    %c0_i32 = arith.constant 0 : i32
    %c0_i32_0 = arith.constant 0 : i32
    return %arg0, %c0_i32 : i32, i32
  }
}

module attributes {stable_mosaic.version = 11 : i64} {
  func.func @_fc_chain_kernel(%arg0: i32, %arg1: memref<8x3200xbf16, #tpu.memory_space<vmem>>, %arg2: memref<3200x128xbf16, #tpu.memory_space<vmem>>, %arg3: memref<1x128xf32, #tpu.memory_space<vmem>>, %arg4: memref<128x128xbf16, #tpu.memory_space<vmem>>, %arg5: memref<1x128xf32, #tpu.memory_space<vmem>>, %arg6: memref<128x128xbf16, #tpu.memory_space<vmem>>, %arg7: memref<1x128xf32, #tpu.memory_space<vmem>>, %arg8: memref<8x128xf32, #tpu.memory_space<vmem>>) attributes {dimension_semantics = [#tpu.dimension_semantics<parallel>], iteration_bounds = array<i64: 1>, scalar_prefetch = 0 : i64, scratch_operands = 0 : i64, tpu.core_type = #tpu.core_type<tc>, window_params = [{transform_indices = @transform_0, window_bounds = array<i64: 8, 3200>}, {pipeline_mode = #tpu.pipeline_mode<synchronous>, transform_indices = @transform_1, window_bounds = array<i64: 3200, 128>}, {pipeline_mode = #tpu.pipeline_mode<synchronous>, transform_indices = @transform_2, window_bounds = array<i64: 1, 128>}, {pipeline_mode = #tpu.pipeline_mode<synchronous>, transform_indices = @transform_3, window_bounds = array<i64: 128, 128>}, {pipeline_mode = #tpu.pipeline_mode<synchronous>, transform_indices = @transform_4, window_bounds = array<i64: 1, 128>}, {pipeline_mode = #tpu.pipeline_mode<synchronous>, transform_indices = @transform_5, window_bounds = array<i64: 128, 128>}, {pipeline_mode = #tpu.pipeline_mode<synchronous>, transform_indices = @transform_6, window_bounds = array<i64: 1, 128>}, {transform_indices = @transform_7, window_bounds = array<i64: 8, 128>}]} {
    %c0 = arith.constant 0 : index
    %c0_0 = arith.constant 0 : index
    %0 = vector.load %arg1[%c0, %c0_0] : memref<8x3200xbf16, #tpu.memory_space<vmem>>, vector<8x3200xbf16>
    %c0_1 = arith.constant 0 : index
    %c0_2 = arith.constant 0 : index
    %1 = vector.load %arg2[%c0_1, %c0_2] : memref<3200x128xbf16, #tpu.memory_space<vmem>>, vector<3200x128xbf16>
    %cst = arith.constant dense<0.000000e+00> : vector<8x128xf32>
    %2 = tpu.matmul %0, %1, %cst {dimension_numbers = #tpu.dot_dimension_numbers<[1], [0], [0], [1], [0, 0, 1, 1], [], []>} : vector<8x3200xbf16>, vector<3200x128xbf16>, vector<8x128xf32> -> vector<8x128xf32>
    %c0_3 = arith.constant 0 : index
    %c0_4 = arith.constant 0 : index
    %3 = vector.load %arg3[%c0_3, %c0_4] : memref<1x128xf32, #tpu.memory_space<vmem>>, vector<1x128xf32>
    %4 = vector.broadcast %3 : vector<1x128xf32> to vector<8x128xf32>
    %5 = arith.addf %2, %4 : vector<8x128xf32>
    %cst_5 = arith.constant 0.000000e+00 : f32
    %6 = vector.broadcast %cst_5 : f32 to vector<8x128xf32>
    %7 = arith.maximumf %5, %6 : vector<8x128xf32>
    %8 = arith.truncf %7 : vector<8x128xf32> to vector<8x128xbf16>
    %c0_6 = arith.constant 0 : index
    %c0_7 = arith.constant 0 : index
    %9 = vector.load %arg4[%c0_6, %c0_7] : memref<128x128xbf16, #tpu.memory_space<vmem>>, vector<128x128xbf16>
    %cst_8 = arith.constant dense<0.000000e+00> : vector<8x128xf32>
    %10 = tpu.matmul %8, %9, %cst_8 {dimension_numbers = #tpu.dot_dimension_numbers<[1], [0], [0], [1], [0, 0, 1, 1], [], []>} : vector<8x128xbf16>, vector<128x128xbf16>, vector<8x128xf32> -> vector<8x128xf32>
    %c0_9 = arith.constant 0 : index
    %c0_10 = arith.constant 0 : index
    %11 = vector.load %arg5[%c0_9, %c0_10] : memref<1x128xf32, #tpu.memory_space<vmem>>, vector<1x128xf32>
    %12 = vector.broadcast %11 : vector<1x128xf32> to vector<8x128xf32>
    %13 = arith.addf %10, %12 : vector<8x128xf32>
    %cst_11 = arith.constant 0.000000e+00 : f32
    %14 = vector.broadcast %cst_11 : f32 to vector<8x128xf32>
    %15 = arith.maximumf %13, %14 : vector<8x128xf32>
    %16 = arith.truncf %15 : vector<8x128xf32> to vector<8x128xbf16>
    %c0_12 = arith.constant 0 : index
    %c0_13 = arith.constant 0 : index
    %17 = vector.load %arg6[%c0_12, %c0_13] : memref<128x128xbf16, #tpu.memory_space<vmem>>, vector<128x128xbf16>
    %cst_14 = arith.constant dense<0.000000e+00> : vector<8x128xf32>
    %18 = tpu.matmul %16, %17, %cst_14 {dimension_numbers = #tpu.dot_dimension_numbers<[1], [0], [0], [1], [0, 0, 1, 1], [], []>} : vector<8x128xbf16>, vector<128x128xbf16>, vector<8x128xf32> -> vector<8x128xf32>
    %c0_15 = arith.constant 0 : index
    %c0_16 = arith.constant 0 : index
    %19 = vector.load %arg7[%c0_15, %c0_16] : memref<1x128xf32, #tpu.memory_space<vmem>>, vector<1x128xf32>
    %20 = vector.broadcast %19 : vector<1x128xf32> to vector<8x128xf32>
    %21 = arith.addf %18, %20 : vector<8x128xf32>
    %c0_17 = arith.constant 0 : index
    %c0_18 = arith.constant 0 : index
    %22 = vector.load %arg8[%c0_17, %c0_18] : memref<8x128xf32, #tpu.memory_space<vmem>>, vector<8x128xf32>
    tpu.vector_store %arg8[%c0_17, %c0_18], %21 {strides = array<i32>} : memref<8x128xf32, #tpu.memory_space<vmem>>, vector<8x128xf32>,
    return
  }
  func.func @transform_0(%arg0: i32) -> (i32, i32) {
    %c0_i32 = arith.constant 0 : i32
    %c0_i32_0 = arith.constant 0 : i32
    return %arg0, %c0_i32 : i32, i32
  }
  func.func @transform_1(%arg0: i32) -> (i32, i32) {
    %c0_i32 = arith.constant 0 : i32
    %c0_i32_0 = arith.constant 0 : i32
    %c0_i32_1 = arith.constant 0 : i32
    return %c0_i32, %c0_i32_0 : i32, i32
  }
  func.func @transform_2(%arg0: i32) -> (i32, i32) {
    %c0_i32 = arith.constant 0 : i32
    %c0_i32_0 = arith.constant 0 : i32
    %c0_i32_1 = arith.constant 0 : i32
    return %c0_i32, %c0_i32_0 : i32, i32
  }
  func.func @transform_3(%arg0: i32) -> (i32, i32) {
    %c0_i32 = arith.constant 0 : i32
    %c0_i32_0 = arith.constant 0 : i32
    %c0_i32_1 = arith.constant 0 : i32
    return %c0_i32, %c0_i32_0 : i32, i32
  }
  func.func @transform_4(%arg0: i32) -> (i32, i32) {
    %c0_i32 = arith.constant 0 : i32
    %c0_i32_0 = arith.constant 0 : i32
    %c0_i32_1 = arith.constant 0 : i32
    return %c0_i32, %c0_i32_0 : i32, i32
  }
  func.func @transform_5(%arg0: i32) -> (i32, i32) {
    %c0_i32 = arith.constant 0 : i32
    %c0_i32_0 = arith.constant 0 : i32
    %c0_i32_1 = arith.constant 0 : i32
    return %c0_i32, %c0_i32_0 : i32, i32
  }
  func.func @transform_6(%arg0: i32) -> (i32, i32) {
    %c0_i32 = arith.constant 0 : i32
    %c0_i32_0 = arith.constant 0 : i32
    %c0_i32_1 = arith.constant 0 : i32
    return %c0_i32, %c0_i32_0 : i32, i32
  }
  func.func @transform_7(%arg0: i32) -> (i32, i32) {
    %c0_i32 = arith.constant 0 : i32
    %c0_i32_0 = arith.constant 0 : i32
    return %arg0, %c0_i32 : i32, i32
  }
}

</mosaic_0001>

<llo_original>
// kernel: cnn_forward.3
$region0: #{cnn_forward.3}
  #allocation0 [shape = 'u32[]', space=smem, size = 0x4, offset = 0x4, fixed_abs, tag = 'smem constant byte address 0x4 - core index']
  #allocation1 [shape = 'u32[144,128]{1,0:T(1,128)}', space=vmem, size = 0x12000, scoped, tag = 'internal scratch']
  %s0 = inlined_call_operand.vmem [shape: bf16[4,400,128], index: 0, kind: input, shape index: {}]
  %s1 = inlined_call_operand.vmem [shape: bf16[128,128], index: 1, kind: input, shape index: {}]
  %s2 = inlined_call_operand.vmem [shape: f32[1,128], index: 2, kind: input, shape index: {}]
  %s3 = inlined_call_operand.vmem [shape: bf16[400,128], index: 3, kind: output, shape index: {}]
  %s4 = sld [smem:[#allocation0]]
  $region86: #{cnn_forward.3} parent=0
    _
  %s6 = ssub.s32 1, %s4
  %s7 = scalar_select 0, %s6, %s4
  $region1: #{cnn_forward.3} parent=0
    #allocation2 [shape = 'u8[409600]{0}', space=vmem, size = 0x64000, scoped, tag = 'input window, operand 0']
    loop: start=0, step=1, limit=4
    $region2: #{cnn_forward.3} parent=1 // loop_pre_header
      _
    $region3: #{cnn_forward.3} parent=1 // loop_header
      %s9 = sphi 0, %s13
      %p10 = scmp.ge.s32.totalorder %s9, 4
      %s19 = sphi 0, %s21
      %s22 = sphi 0, %s19
      %s23 = sphi 0, %s22
      %s39 = sphi 0, %s23
      %s43 = sphi 0, %s43
      %s45 = sphi 0, %s43
      %s46 = sphi 0, %s45
      %s60 = sphi 0, %s46
      %s64 = sphi 0, %s64
      %s66 = sphi 0, %s64
      %s67 = sphi 0, %s66
      %s81 = sphi 0, %s67
      %s87 = sphi 0, %s89
      %s90 = sphi 0, %s87
      %s91 = sphi 0, %s90
      %s107 = sphi 0, %s91
    $region4: #{cnn_forward.3} parent=1 // loop_header_branch
      %12 = sbr.rel (%p10) target = $region8
    $region5: #{cnn_forward.3} parent=1 // loop_body
      %s14 = ssub.s32 %s9, 1
      %s15 = ssub.s32 %s9, 2
      %s16 = sadd.s32 %s9, 1
      %s17 = ssub.s32 %s9, %s16
      %p18 = scmp.eq.s32.totalorder %s17, 0
      %s20 = sadd.s32 %s19, 1
      %s21 = scalar_select %p18, %s19, %s20
      %p24 = pneg %p18
      %p25 = scmp.eq.s32.totalorder %s9, 1
      %p26 = por %p24, %p25
      %p27 = scmp.ne.s32.totalorder %s19, %s22
      %p28 = scmp.eq.s32.totalorder %s9, 0
      %p29 = por %p27, %p28
      %p30 = scmp.ne.s32.totalorder %s19, %s22
      %p31 = scmp.eq.s32.totalorder %s14, 1
      %p32 = por %p30, %p31
      %p33 = scmp.ne.s32.totalorder %s22, %s23
      %p34 = scmp.eq.s32.totalorder %s14, 0
      %p35 = por %p33, %p34
      %p36 = scmp.ne.s32.totalorder %s22, %s23
      %p37 = scmp.eq.s32.totalorder %s15, 1
      %p38 = por %p36, %p37
      %p40 = scmp.ne.s32.totalorder %s23, %s39
      %p41 = scmp.eq.s32.totalorder %s15, 0
      %p42 = por %p40, %p41
      %s44 = sadd.s32 %s43, 1
      %p47 = scmp.eq.s32.totalorder %s9, 1
      %p48 = scmp.ne.s32.totalorder %s43, %s45
      %p49 = scmp.eq.s32.totalorder %s9, 0
      %p50 = por %p48, %p49
      %p51 = scmp.ne.s32.totalorder %s43, %s45
      %p52 = scmp.eq.s32.totalorder %s14, 1
      %p53 = por %p51, %p52
      %p54 = scmp.ne.s32.totalorder %s45, %s46
      %p55 = scmp.eq.s32.totalorder %s14, 0
      %p56 = por %p54, %p55
      %p57 = scmp.ne.s32.totalorder %s45, %s46
      %p58 = scmp.eq.s32.totalorder %s15, 1
      %p59 = por %p57, %p58
      %p61 = scmp.ne.s32.totalorder %s46, %s60
      %p62 = scmp.eq.s32.totalorder %s15, 0
      %p63 = por %p61, %p62
      %s65 = sadd.s32 %s64, 1
      %p68 = scmp.eq.s32.totalorder %s9, 1
      %p69 = scmp.ne.s32.totalorder %s64, %s66
      %p70 = scmp.eq.s32.totalorder %s9, 0
      %p71 = por %p69, %p70
      %p72 = scmp.ne.s32.totalorder %s64, %s66
      %p73 = scmp.eq.s32.totalorder %s14, 1
      %p74 = por %p72, %p73
      %p75 = scmp.ne.s32.totalorder %s66, %s67
      %p76 = scmp.eq.s32.totalorder %s14, 0
      %p77 = por %p75, %p76
      %p78 = scmp.ne.s32.totalorder %s66, %s67
      %p79 = scmp.eq.s32.totalorder %s15, 1
      %p80 = por %p78, %p79
      %p82 = scmp.ne.s32.totalorder %s67, %s81
      %p83 = scmp.eq.s32.totalorder %s15, 0
      %p84 = por %p82, %p83
      %s85 = ssub.s32 %s9, %s16
      %p86 = scmp.eq.s32.totalorder %s85, 0
      %s88 = sadd.s32 %s87, 1
      %s89 = scalar_select %p86, %s87, %s88
      %p92 = pneg %p86
      %p93 = scmp.eq.s32.totalorder %s9, 1
      %p94 = por %p92, %p93
      %p95 = scmp.ne.s32.totalorder %s87, %s90
      %p96 = scmp.eq.s32.totalorder %s9, 0
      %p97 = por %p95, %p96
      %p98 = scmp.ne.s32.totalorder %s87, %s90
      %p99 = scmp.eq.s32.totalorder %s14, 1
      %p100 = por %p98, %p99
      %p101 = scmp.ne.s32.totalorder %s90, %s91
      %p102 = scmp.eq.s32.totalorder %s14, 0
      %p103 = por %p101, %p102
      %p104 = scmp.ne.s32.totalorder %s90, %s91
      %p105 = scmp.eq.s32.totalorder %s15, 1
      %p106 = por %p104, %p105
      %p108 = scmp.ne.s32.totalorder %s91, %s107
      %p109 = scmp.eq.s32.totalorder %s15, 0
      %p110 = por %p108, %p109
      %p111 = scmp.le.s32.totalorder 1, %s9
      %p112 = scmp.lt.s32.totalorder %s9, 3
      %p113 = pnand %p111, %p112
      %p114 = pneg %p113
      // Predicated region
      $region9: #{cnn_forward.3} parent=5 // pred_check
        _
      $region10: #{cnn_forward.3} parent=5 // pred_check_branch
        %116 = sbr.rel (%p113) target = $region12
      $region11: #{cnn_forward.3} parent=5 // pred_region
        %s117 = ssub.s32 %s9, 1
        // Predicated region
        $region13: #{cnn_forward.3} parent=11 // pred_check
          %p118 = pneg %p56
        $region14: #{cnn_forward.3} parent=11 // pred_check_branch
          %120 = sbr.rel (%p118) target = $region16
        $region15: #{cnn_forward.3} parent=11 // pred_region
          _
        $region16: #{cnn_forward.3} parent=11 // pred_fallthru
          _
        // Predicated region
        $region17: #{cnn_forward.3} parent=11 // pred_check
          %p121 = pneg %p77
        $region18: #{cnn_forward.3} parent=11 // pred_check_branch
          %123 = sbr.rel (%p121) target = $region20
        $region19: #{cnn_forward.3} parent=11 // pred_region
          _
        $region20: #{cnn_forward.3} parent=11 // pred_fallthru
          _
      $region12: #{cnn_forward.3} parent=5 // pred_fallthru
        _
      %p124 = scmp.lt.s32.totalorder %s9, 2
      // Predicated region
      $region21: #{cnn_forward.3} parent=5 // pred_check
        %p125 = pneg %p124
      $region22: #{cnn_forward.3} parent=5 // pred_check_branch
        %127 = sbr.rel (%p125) target = $region24
      $region23: #{cnn_forward.3} parent=5 // pred_region
        // Predicated region
        $region25: #{cnn_forward.3} parent=23 // pred_check
          %p128 = pneg %p29
        $region26: #{cnn_forward.3} parent=23 // pred_check_branch
          %130 = sbr.rel (%p128) target = $region28
        $region27: #{cnn_forward.3} parent=23 // pred_region
          %s131 = sand.u32 %s19, 1
          %s132 = sand.u32 %s19, 1
          %s133 = smul.addr %s132, 400
          %s134 = scalar_lea.vmem [#allocation2], %s133
          %s135 = smul.u32 25, %s9
          %s136 = smul.addr %s135, 4
          %s137 = scalar_lea.vmem %s0, %s136
          // Predicated region
          $region29: #{cnn_forward.3} parent=27 // pred_check
            _
          $region30: #{cnn_forward.3} parent=27 // pred_check_branch
            %139 = sbr.rel (0) target = $region32
          $region31: #{cnn_forward.3} parent=27 // pred_region
            // Predicated region
            $region33: #{cnn_forward.3} parent=31 // pred_check
              _
            $region34: #{cnn_forward.3} parent=31 // pred_check_branch
              %141 = sbr.rel target = $region36
            $region35: #{cnn_forward.3} parent=31 // pred_region
              // Predicated region
              $region48: #{cnn_forward.3} parent=35 // pred_check
                _
              $region49: #{cnn_forward.3} parent=35 // pred_check_branch
                %355 = sbr.rel (0) target = $region51
              $region50: #{cnn_forward.3} parent=35 // pred_region
                loop: start=0, step=1, limit=1
                $region52: #{cnn_forward.3} parent=50 // loop_pre_header
                  _
                $region53: #{cnn_forward.3} parent=50 // loop_header
                  %s357 = sphi 0, %s361
                  %p358 = scmp.ge.s32.totalorder %s357, 1
                  %s362 = sphi %s137, %s137
                  %s363 = sphi %s134, %s134
                $region54: #{cnn_forward.3} parent=50 // loop_header_branch
                  %360 = sbr.rel (%p358) target = $region58
                $region55: #{cnn_forward.3} parent=50 // loop_body
                  _
                $region56: #{cnn_forward.3} parent=50 // loop_footer
                  %s361 = sadd.s32 1, %s357
                $region57: #{cnn_forward.3} parent=50 // loop_footer_branch
                  %356 = sbr.rel target = $region53
                $region58: #{cnn_forward.3} parent=50 // loop_exit
                  _
                %s365 = ssub.s32 16, 1
                loop: start=0, step=1, limit=1
                $region59: #{cnn_forward.3} parent=50 // loop_pre_header
                  _
                $region60: #{cnn_forward.3} parent=50 // loop_header
                  %s367 = sphi 0, %s371
                  %p368 = scmp.ge.s32.totalorder %s367, 1
                  %s372 = sphi %s137, %s137
                  %s373 = sphi %s134, %s134
                $region61: #{cnn_forward.3} parent=50 // loop_header_branch
                  %370 = sbr.rel (%p368) target = $region65
                $region62: #{cnn_forward.3} parent=50 // loop_body
                  %v374 = vld [vmem:[%s372] sm:%s365]
                  %375 = vst [vmem:[%s373] sm:%s365] %v374
                  %v376 = vld [vmem:[%s372 + $0x4] sm:%s365]
                  %377 = vst [vmem:[%s373 + $0x4] sm:%s365] %v376
                  %v378 = vld [vmem:[%s372 + $0x8] sm:%s365]
                  %379 = vst [vmem:[%s373 + $0x8] sm:%s365] %v378
                  %v380 = vld [vmem:[%s372 + $0xc] sm:%s365]
                  %381 = vst [vmem:[%s373 + $0xc] sm:%s365] %v380
                  %v382 = vld [vmem:[%s372 + $0x10] sm:%s365]
                  %383 = vst [vmem:[%s373 + $0x10] sm:%s365] %v382
                  %v384 = vld [vmem:[%s372 + $0x14] sm:%s365]
                  %385 = vst [vmem:[%s373 + $0x14] sm:%s365] %v384
                  %v386 = vld [vmem:[%s372 + $0x18] sm:%s365]
                  %387 = vst [vmem:[%s373 + $0x18] sm:%s365] %v386
                  %v388 = vld [vmem:[%s372 + $0x1c] sm:%s365]
                  %389 = vst [vmem:[%s373 + $0x1c] sm:%s365] %v388
                  %v390 = vld [vmem:[%s372 + $0x20] sm:%s365]
                  %391 = vst [vmem:[%s373 + $0x20] sm:%s365] %v390
                  %v392 = vld [vmem:[%s372 + $0x24] sm:%s365]
                  %393 = vst [vmem:[%s373 + $0x24] sm:%s365] %v392
                  %v394 = vld [vmem:[%s372 + $0x28] sm:%s365]
                  %395 = vst [vmem:[%s373 + $0x28] sm:%s365] %v394
                  %v396 = vld [vmem:[%s372 + $0x2c] sm:%s365]
                  %397 = vst [vmem:[%s373 + $0x2c] sm:%s365] %v396
                  %v398 = vld [vmem:[%s372 + $0x30] sm:%s365]
                  %399 = vst [vmem:[%s373 + $0x30] sm:%s365] %v398
                  %v400 = vld [vmem:[%s372 + $0x34] sm:%s365]
                  %401 = vst [vmem:[%s373 + $0x34] sm:%s365] %v400
                  %v402 = vld [vmem:[%s372 + $0x38] sm:%s365]
                  %403 = vst [vmem:[%s373 + $0x38] sm:%s365] %v402
                  %v404 = vld [vmem:[%s372 + $0x3c] sm:%s365]
                  %405 = vst [vmem:[%s373 + $0x3c] sm:%s365] %v404
                  %v406 = vld [vmem:[%s372 + $0x40] sm:%s365]
                  %407 = vst [vmem:[%s373 + $0x40] sm:%s365] %v406
                  %v408 = vld [vmem:[%s372 + $0x44] sm:%s365]
                  %409 = vst [vmem:[%s373 + $0x44] sm:%s365] %v408
                  %v410 = vld [vmem:[%s372 + $0x48] sm:%s365]
                  %411 = vst [vmem:[%s373 + $0x48] sm:%s365] %v410
                  %v412 = vld [vmem:[%s372 + $0x4c] sm:%s365]
                  %413 = vst [vmem:[%s373 + $0x4c] sm:%s365] %v412
                  %v414 = vld [vmem:[%s372 + $0x50] sm:%s365]
                  %415 = vst [vmem:[%s373 + $0x50] sm:%s365] %v414
                  %v416 = vld [vmem:[%s372 + $0x54] sm:%s365]
                  %417 = vst [vmem:[%s373 + $0x54] sm:%s365] %v416
                  %v418 = vld [vmem:[%s372 + $0x58] sm:%s365]
                  %419 = vst [vmem:[%s373 + $0x58] sm:%s365] %v418
                  %v420 = vld [vmem:[%s372 + $0x5c] sm:%s365]
                  %421 = vst [vmem:[%s373 + $0x5c] sm:%s365] %v420
                  %v422 = vld [vmem:[%s372 + $0x60] sm:%s365]
                  %423 = vst [vmem:[%s373 + $0x60] sm:%s365] %v422
                  %v424 = vld [vmem:[%s372 + $0xc8] sm:%s365]
                  %425 = vst [vmem:[%s373 + $0x64] sm:%s365] %v424
                  %v426 = vld [vmem:[%s372 + $0xcc] sm:%s365]
                  %427 = vst [vmem:[%s373 + $0x68] sm:%s365] %v426
                  %v428 = vld [vmem:[%s372 + $0xd0] sm:%s365]
                  %429 = vst [vmem:[%s373 + $0x6c] sm:%s365] %v428
                  %v430 = vld [vmem:[%s372 + $0xd4] sm:%s365]
                  %431 = vst [vmem:[%s373 + $0x70] sm:%s365] %v430
                  %v432 = vld [vmem:[%s372 + $0xd8] sm:%s365]
                  %433 = vst [vmem:[%s373 + $0x74] sm:%s365] %v432
                  %v434 = vld [vmem:[%s372 + $0xdc] sm:%s365]
                  %435 = vst [vmem:[%s373 + $0x78] sm:%s365] %v434
                  %v436 = vld [vmem:[%s372 + $0xe0] sm:%s365]
                  %437 = vst [vmem:[%s373 + $0x7c] sm:%s365] %v436
                  %v438 = vld [vmem:[%s372 + $0xe4] sm:%s365]
                  %439 = vst [vmem:[%s373 + $0x80] sm:%s365] %v438
                  %v440 = vld [vmem:[%s372 + $0xe8] sm:%s365]
                  %441 = vst [vmem:[%s373 + $0x84] sm:%s365] %v440
                  %v442 = vld [vmem:[%s372 + $0xec] sm:%s365]
                  %443 = vst [vmem:[%s373 + $0x88] sm:%s365] %v442
                  %v444 = vld [vmem:[%s372 + $0xf0] sm:%s365]
                  %445 = vst [vmem:[%s373 + $0x8c] sm:%s365] %v444
                  %v446 = vld [vmem:[%s372 + $0xf4] sm:%s365]
                  %447 = vst [vmem:[%s373 + $0x90] sm:%s365] %v446
                  %v448 = vld [vmem:[%s372 + $0xf8] sm:%s365]
                  %449 = vst [vmem:[%s373 + $0x94] sm:%s365] %v448
                  %v450 = vld [vmem:[%s372 + $0xfc] sm:%s365]
                  %451 = vst [vmem:[%s373 + $0x98] sm:%s365] %v450
                  %v452 = vld [vmem:[%s372 + $0x100] sm:%s365]
                  %453 = vst [vmem:[%s373 + $0x9c] sm:%s365] %v452
                  %v454 = vld [vmem:[%s372 + $0x104] sm:%s365]
                  %455 = vst [vmem:[%s373 + $0xa0] sm:%s365] %v454
                  %v456 = vld [vmem:[%s372 + $0x108] sm:%s365]
                  %457 = vst [vmem:[%s373 + $0xa4] sm:%s365] %v456
                  %v458 = vld [vmem:[%s372 + $0x10c] sm:%s365]
                  %459 = vst [vmem:[%s373 + $0xa8] sm:%s365] %v458
                  %v460 = vld [vmem:[%s372 + $0x110] sm:%s365]
                  %461 = vst [vmem:[%s373 + $0xac] sm:%s365] %v460
                  %v462 = vld [vmem:[%s372 + $0x114] sm:%s365]
                  %463 = vst [vmem:[%s373 + $0xb0] sm:%s365] %v462
                  %v464 = vld [vmem:[%s372 + $0x118] sm:%s365]
                  %465 = vst [vmem:[%s373 + $0xb4] sm:%s365] %v464
                  %v466 = vld [vmem:[%s372 + $0x11c] sm:%s365]
                  %467 = vst [vmem:[%s373 + $0xb8] sm:%s365] %v466
                  %v468 = vld [vmem:[%s372 + $0x120] sm:%s365]
                  %469 = vst [vmem:[%s373 + $0xbc] sm:%s365] %v468
                  %v470 = vld [vmem:[%s372 + $0x124] sm:%s365]
                  %471 = vst [vmem:[%s373 + $0xc0] sm:%s365] %v470
                  %v472 = vld [vmem:[%s372 + $0x128] sm:%s365]
                  %473 = vst [vmem:[%s373 + $0xc4] sm:%s365] %v472
                  %v474 = vld [vmem:[%s372 + $0x190] sm:%s365]
                  %475 = vst [vmem:[%s373 + $0xc8] sm:%s365] %v474
                  %v476 = vld [vmem:[%s372 + $0x194] sm:%s365]
                  %477 = vst [vmem:[%s373 + $0xcc] sm:%s365] %v476
                  %v478 = vld [vmem:[%s372 + $0x198] sm:%s365]
                  %479 = vst [vmem:[%s373 + $0xd0] sm:%s365] %v478
                  %v480 = vld [vmem:[%s372 + $0x19c] sm:%s365]
                  %481 = vst [vmem:[%s373 + $0xd4] sm:%s365] %v480
                  %v482 = vld [vmem:[%s372 + $0x1a0] sm:%s365]
                  %483 = vst [vmem:[%s373 + $0xd8] sm:%s365] %v482
                  %v484 = vld [vmem:[%s372 + $0x1a4] sm:%s365]
                  %485 = vst [vmem:[%s373 + $0xdc] sm:%s365] %v484
                  %v486 = vld [vmem:[%s372 + $0x1a8] sm:%s365]
                  %487 = vst [vmem:[%s373 + $0xe0] sm:%s365] %v486
                  %v488 = vld [vmem:[%s372 + $0x1ac] sm:%s365]
                  %489 = vst [vmem:[%s373 + $0xe4] sm:%s365] %v488
                  %v490 = vld [vmem:[%s372 + $0x1b0] sm:%s365]
                  %491 = vst [vmem:[%s373 + $0xe8] sm:%s365] %v490
                  %v492 = vld [vmem:[%s372 + $0x1b4] sm:%s365]
                  %493 = vst [vmem:[%s373 + $0xec] sm:%s365] %v492
                  %v494 = vld [vmem:[%s372 + $0x1b8] sm:%s365]
                  %495 = vst [vmem:[%s373 + $0xf0] sm:%s365] %v494
                  %v496 = vld [vmem:[%s372 + $0x1bc] sm:%s365]
                  %497 = vst [vmem:[%s373 + $0xf4] sm:%s365] %v496
                  %v498 = vld [vmem:[%s372 + $0x1c0] sm:%s365]
                  %499 = vst [vmem:[%s373 + $0xf8] sm:%s365] %v498
                  %v500 = vld [vmem:[%s372 + $0x1c4] sm:%s365]
                  %501 = vst [vmem:[%s373 + $0xfc] sm:%s365] %v500
                  %v502 = vld [vmem:[%s372 + $0x1c8] sm:%s365]
                  %503 = vst [vmem:[%s373 + $0x100] sm:%s365] %v502
                  %v504 = vld [vmem:[%s372 + $0x1cc] sm:%s365]
                  %505 = vst [vmem:[%s373 + $0x104] sm:%s365] %v504
                  %v506 = vld [vmem:[%s372 + $0x1d0] sm:%s365]
                  %507 = vst [vmem:[%s373 + $0x108] sm:%s365] %v506
                  %v508 = vld [vmem:[%s372 + $0x1d4] sm:%s365]
                  %509 = vst [vmem:[%s373 + $0x10c] sm:%s365] %v508
                  %v510 = vld [vmem:[%s372 + $0x1d8] sm:%s365]
                  %511 = vst [vmem:[%s373 + $0x110] sm:%s365] %v510
                  %v512 = vld [vmem:[%s372 + $0x1dc] sm:%s365]
                  %513 = vst [vmem:[%s373 + $0x114] sm:%s365] %v512
                  %v514 = vld [vmem:[%s372 + $0x1e0] sm:%s365]
                  %515 = vst [vmem:[%s373 + $0x118] sm:%s365] %v514
                  %v516 = vld [vmem:[%s372 + $0x1e4] sm:%s365]
                  %517 = vst [vmem:[%s373 + $0x11c] sm:%s365] %v516
                  %v518 = vld [vmem:[%s372 + $0x1e8] sm:%s365]
                  %519 = vst [vmem:[%s373 + $0x120] sm:%s365] %v518
                  %v520 = vld [vmem:[%s372 + $0x1ec] sm:%s365]
                  %521 = vst [vmem:[%s373 + $0x124] sm:%s365] %v520
                  %v522 = vld [vmem:[%s372 + $0x1f0] sm:%s365]
                  %523 = vst [vmem:[%s373 + $0x128] sm:%s365] %v522
                  %v524 = vld [vmem:[%s372 + $0x258] sm:%s365]
                  %525 = vst [vmem:[%s373 + $0x12c] sm:%s365] %v524
                  %v526 = vld [vmem:[%s372 + $0x25c] sm:%s365]
                  %527 = vst [vmem:[%s373 + $0x130] sm:%s365] %v526
                  %v528 = vld [vmem:[%s372 + $0x260] sm:%s365]
                  %529 = vst [vmem:[%s373 + $0x134] sm:%s365] %v528
                  %v530 = vld [vmem:[%s372 + $0x264] sm:%s365]
                  %531 = vst [vmem:[%s373 + $0x138] sm:%s365] %v530
                  %v532 = vld [vmem:[%s372 + $0x268] sm:%s365]
                  %533 = vst [vmem:[%s373 + $0x13c] sm:%s365] %v532
                  %v534 = vld [vmem:[%s372 + $0x26c] sm:%s365]
                  %535 = vst [vmem:[%s373 + $0x140] sm:%s365] %v534
                  %v536 = vld [vmem:[%s372 + $0x270] sm:%s365]
                  %537 = vst [vmem:[%s373 + $0x144] sm:%s365] %v536
                  %v538 = vld [vmem:[%s372 + $0x274] sm:%s365]
                  %539 = vst [vmem:[%s373 + $0x148] sm:%s365] %v538
                  %v540 = vld [vmem:[%s372 + $0x278] sm:%s365]
                  %541 = vst [vmem:[%s373 + $0x14c] sm:%s365] %v540
                  %v542 = vld [vmem:[%s372 + $0x27c] sm:%s365]
                  %543 = vst [vmem:[%s373 + $0x150] sm:%s365] %v542
                  %v544 = vld [vmem:[%s372 + $0x280] sm:%s365]
                  %545 = vst [vmem:[%s373 + $0x154] sm:%s365] %v544
                  %v546 = vld [vmem:[%s372 + $0x284] sm:%s365]
                  %547 = vst [vmem:[%s373 + $0x158] sm:%s365] %v546
                  %v548 = vld [vmem:[%s372 + $0x288] sm:%s365]
                  %549 = vst [vmem:[%s373 + $0x15c] sm:%s365] %v548
                  %v550 = vld [vmem:[%s372 + $0x28c] sm:%s365]
                  %551 = vst [vmem:[%s373 + $0x160] sm:%s365] %v550
                  %v552 = vld [vmem:[%s372 + $0x290] sm:%s365]
                  %553 = vst [vmem:[%s373 + $0x164] sm:%s365] %v552
                  %v554 = vld [vmem:[%s372 + $0x294] sm:%s365]
                  %555 = vst [vmem:[%s373 + $0x168] sm:%s365] %v554
                  %v556 = vld [vmem:[%s372 + $0x298] sm:%s365]
                  %557 = vst [vmem:[%s373 + $0x16c] sm:%s365] %v556
                  %v558 = vld [vmem:[%s372 + $0x29c] sm:%s365]
                  %559 = vst [vmem:[%s373 + $0x170] sm:%s365] %v558
                  %v560 = vld [vmem:[%s372 + $0x2a0] sm:%s365]
                  %561 = vst [vmem:[%s373 + $0x174] sm:%s365] %v560
                  %v562 = vld [vmem:[%s372 + $0x2a4] sm:%s365]
                  %563 = vst [vmem:[%s373 + $0x178] sm:%s365] %v562
                  %v564 = vld [vmem:[%s372 + $0x2a8] sm:%s365]
                  %565 = vst [vmem:[%s373 + $0x17c] sm:%s365] %v564
                  %v566 = vld [vmem:[%s372 + $0x2ac] sm:%s365]
                  %567 = vst [vmem:[%s373 + $0x180] sm:%s365] %v566
                  %v568 = vld [vmem:[%s372 + $0x2b0] sm:%s365]
                  %569 = vst [vmem:[%s373 + $0x184] sm:%s365] %v568
                  %v570 = vld [vmem:[%s372 + $0x2b4] sm:%s365]
                  %571 = vst [vmem:[%s373 + $0x188] sm:%s365] %v570
                  %v572 = vld [vmem:[%s372 + $0x2b8] sm:%s365]
                  %573 = vst [vmem:[%s373 + $0x18c] sm:%s365] %v572
                $region63: #{cnn_forward.3} parent=50 // loop_footer
                  %s371 = sadd.s32 1, %s367
                $region64: #{cnn_forward.3} parent=50 // loop_footer_branch
                  %366 = sbr.rel target = $region60
                $region65: #{cnn_forward.3} parent=50 // loop_exit
                  _
              $region51: #{cnn_forward.3} parent=35 // pred_fallthru
                _
            $region36: #{cnn_forward.3} parent=31 // pred_fallthru
              _
            // Predicated region
            $region37: #{cnn_forward.3} parent=31 // pred_check
              _
            $region38: #{cnn_forward.3} parent=31 // pred_check_branch
              %143 = sbr.rel (0) target = $region40
            $region39: #{cnn_forward.3} parent=31 // pred_region
              %s145 = ssub.s32 16, 1
              loop: start=0, step=1, limit=1
              $region41: #{cnn_forward.3} parent=39 // loop_pre_header
                _
              $region42: #{cnn_forward.3} parent=39 // loop_header
                %s147 = sphi 0, %s151
                %p148 = scmp.ge.s32.totalorder %s147, 1
                %s152 = sphi %s137, %s137
                %s153 = sphi %s134, %s134
              $region43: #{cnn_forward.3} parent=39 // loop_header_branch
                %150 = sbr.rel (%p148) target = $region47
              $region44: #{cnn_forward.3} parent=39 // loop_body
                %v154 = vld [vmem:[%s152] sm:%s145]
                %155 = vst [vmem:[%s153] sm:%s145] %v154
                %v156 = vld [vmem:[%s152 + $0x4] sm:%s145]
                %157 = vst [vmem:[%s153 + $0x4] sm:%s145] %v156
                %v158 = vld [vmem:[%s152 + $0x8] sm:%s145]
                %159 = vst [vmem:[%s153 + $0x8] sm:%s145] %v158
                %v160 = vld [vmem:[%s152 + $0xc] sm:%s145]
                %161 = vst [vmem:[%s153 + $0xc] sm:%s145] %v160
                %v162 = vld [vmem:[%s152 + $0x10] sm:%s145]
                %163 = vst [vmem:[%s153 + $0x10] sm:%s145] %v162
                %v164 = vld [vmem:[%s152 + $0x14] sm:%s145]
                %165 = vst [vmem:[%s153 + $0x14] sm:%s145] %v164
                %v166 = vld [vmem:[%s152 + $0x18] sm:%s145]
                %167 = vst [vmem:[%s153 + $0x18] sm:%s145] %v166
                %v168 = vld [vmem:[%s152 + $0x1c] sm:%s145]
                %169 = vst [vmem:[%s153 + $0x1c] sm:%s145] %v168
                %v170 = vld [vmem:[%s152 + $0x20] sm:%s145]
                %171 = vst [vmem:[%s153 + $0x20] sm:%s145] %v170
                %v172 = vld [vmem:[%s152 + $0x24] sm:%s145]
                %173 = vst [vmem:[%s153 + $0x24] sm:%s145] %v172
                %v174 = vld [vmem:[%s152 + $0x28] sm:%s145]
                %175 = vst [vmem:[%s153 + $0x28] sm:%s145] %v174
                %v176 = vld [vmem:[%s152 + $0x2c] sm:%s145]
                %177 = vst [vmem:[%s153 + $0x2c] sm:%s145] %v176
                %v178 = vld [vmem:[%s152 + $0x30] sm:%s145]
                %179 = vst [vmem:[%s153 + $0x30] sm:%s145] %v178
                %v180 = vld [vmem:[%s152 + $0x34] sm:%s145]
                %181 = vst [vmem:[%s153 + $0x34] sm:%s145] %v180
                %v182 = vld [vmem:[%s152 + $0x38] sm:%s145]
                %183 = vst [vmem:[%s153 + $0x38] sm:%s145] %v182
                %v184 = vld [vmem:[%s152 + $0x3c] sm:%s145]
                %185 = vst [vmem:[%s153 + $0x3c] sm:%s145] %v184
                %v186 = vld [vmem:[%s152 + $0x40] sm:%s145]
                %187 = vst [vmem:[%s153 + $0x40] sm:%s145] %v186
                %v188 = vld [vmem:[%s152 + $0x44] sm:%s145]
                %189 = vst [vmem:[%s153 + $0x44] sm:%s145] %v188
                %v190 = vld [vmem:[%s152 + $0x48] sm:%s145]
                %191 = vst [vmem:[%s153 + $0x48] sm:%s145] %v190
                %v192 = vld [vmem:[%s152 + $0x4c] sm:%s145]
                %193 = vst [vmem:[%s153 + $0x4c] sm:%s145] %v192
                %v194 = vld [vmem:[%s152 + $0x50] sm:%s145]
                %195 = vst [vmem:[%s153 + $0x50] sm:%s145] %v194
                %v196 = vld [vmem:[%s152 + $0x54] sm:%s145]
                %197 = vst [vmem:[%s153 + $0x54] sm:%s145] %v196
                %v198 = vld [vmem:[%s152 + $0x58] sm:%s145]
                %199 = vst [vmem:[%s153 + $0x58] sm:%s145] %v198
                %v200 = vld [vmem:[%s152 + $0x5c] sm:%s145]
                %201 = vst [vmem:[%s153 + $0x5c] sm:%s145] %v200
                %v202 = vld [vmem:[%s152 + $0x60] sm:%s145]
                %203 = vst [vmem:[%s153 + $0x60] sm:%s145] %v202
                %v204 = vld [vmem:[%s152 + $0xc8] sm:%s145]
                %205 = vst [vmem:[%s153 + $0x64] sm:%s145] %v204
                %v206 = vld [vmem:[%s152 + $0xcc] sm:%s145]
                %207 = vst [vmem:[%s153 + $0x68] sm:%s145] %v206
                %v208 = vld [vmem:[%s152 + $0xd0] sm:%s145]
                %209 = vst [vmem:[%s153 + $0x6c] sm:%s145] %v208
                %v210 = vld [vmem:[%s152 + $0xd4] sm:%s145]
                %211 = vst [vmem:[%s153 + $0x70] sm:%s145] %v210
                %v212 = vld [vmem:[%s152 + $0xd8] sm:%s145]
                %213 = vst [vmem:[%s153 + $0x74] sm:%s145] %v212
                %v214 = vld [vmem:[%s152 + $0xdc] sm:%s145]
                %215 = vst [vmem:[%s153 + $0x78] sm:%s145] %v214
                %v216 = vld [vmem:[%s152 + $0xe0] sm:%s145]
                %217 = vst [vmem:[%s153 + $0x7c] sm:%s145] %v216
                %v218 = vld [vmem:[%s152 + $0xe4] sm:%s145]
                %219 = vst [vmem:[%s153 + $0x80] sm:%s145] %v218
                %v220 = vld [vmem:[%s152 + $0xe8] sm:%s145]
                %221 = vst [vmem:[%s153 + $0x84] sm:%s145] %v220
                %v222 = vld [vmem:[%s152 + $0xec] sm:%s145]
                %223 = vst [vmem:[%s153 + $0x88] sm:%s145] %v222
                %v224 = vld [vmem:[%s152 + $0xf0] sm:%s145]
                %225 = vst [vmem:[%s153 + $0x8c] sm:%s145] %v224
                %v226 = vld [vmem:[%s152 + $0xf4] sm:%s145]
                %227 = vst [vmem:[%s153 + $0x90] sm:%s145] %v226
                %v228 = vld [vmem:[%s152 + $0xf8] sm:%s145]
                %229 = vst [vmem:[%s153 + $0x94] sm:%s145] %v228
                %v230 = vld [vmem:[%s152 + $0xfc] sm:%s145]
                %231 = vst [vmem:[%s153 + $0x98] sm:%s145] %v230
                %v232 = vld [vmem:[%s152 + $0x100] sm:%s145]
                %233 = vst [vmem:[%s153 + $0x9c] sm:%s145] %v232
                %v234 = vld [vmem:[%s152 + $0x104] sm:%s145]
                %235 = vst [vmem:[%s153 + $0xa0] sm:%s145] %v234
                %v236 = vld [vmem:[%s152 + $0x108] sm:%s145]
                %237 = vst [vmem:[%s153 + $0xa4] sm:%s145] %v236
                %v238 = vld [vmem:[%s152 + $0x10c] sm:%s145]
                %239 = vst [vmem:[%s153 + $0xa8] sm:%s145] %v238
                %v240 = vld [vmem:[%s152 + $0x110] sm:%s145]
                %241 = vst [vmem:[%s153 + $0xac] sm:%s145] %v240
                %v242 = vld [vmem:[%s152 + $0x114] sm:%s145]
                %243 = vst [vmem:[%s153 + $0xb0] sm:%s145] %v242
                %v244 = vld [vmem:[%s152 + $0x118] sm:%s145]
                %245 = vst [vmem:[%s153 + $0xb4] sm:%s145] %v244
                %v246 = vld [vmem:[%s152 + $0x11c] sm:%s145]
                %247 = vst [vmem:[%s153 + $0xb8] sm:%s145] %v246
                %v248 = vld [vmem:[%s152 + $0x120] sm:%s145]
                %249 = vst [vmem:[%s153 + $0xbc] sm:%s145] %v248
                %v250 = vld [vmem:[%s152 + $0x124] sm:%s145]
                %251 = vst [vmem:[%s153 + $0xc0] sm:%s145] %v250
                %v252 = vld [vmem:[%s152 + $0x128] sm:%s145]
                %253 = vst [vmem:[%s153 + $0xc4] sm:%s145] %v252
                %v254 = vld [vmem:[%s152 + $0x190] sm:%s145]
                %255 = vst [vmem:[%s153 + $0xc8] sm:%s145] %v254
                %v256 = vld [vmem:[%s152 + $0x194] sm:%s145]
                %257 = vst [vmem:[%s153 + $0xcc] sm:%s145] %v256
                %v258 = vld [vmem:[%s152 + $0x198] sm:%s145]
                %259 = vst [vmem:[%s153 + $0xd0] sm:%s145] %v258
                %v260 = vld [vmem:[%s152 + $0x19c] sm:%s145]
                %261 = vst [vmem:[%s153 + $0xd4] sm:%s145] %v260
                %v262 = vld [vmem:[%s152 + $0x1a0] sm:%s145]
                %263 = vst [vmem:[%s153 + $0xd8] sm:%s145] %v262
                %v264 = vld [vmem:[%s152 + $0x1a4] sm:%s145]
                %265 = vst [vmem:[%s153 + $0xdc] sm:%s145] %v264
                %v266 = vld [vmem:[%s152 + $0x1a8] sm:%s145]
                %267 = vst [vmem:[%s153 + $0xe0] sm:%s145] %v266
                %v268 = vld [vmem:[%s152 + $0x1ac] sm:%s145]
                %269 = vst [vmem:[%s153 + $0xe4] sm:%s145] %v268
                %v270 = vld [vmem:[%s152 + $0x1b0] sm:%s145]
                %271 = vst [vmem:[%s153 + $0xe8] sm:%s145] %v270
                %v272 = vld [vmem:[%s152 + $0x1b4] sm:%s145]
                %273 = vst [vmem:[%s153 + $0xec] sm:%s145] %v272
                %v274 = vld [vmem:[%s152 + $0x1b8] sm:%s145]
                %275 = vst [vmem:[%s153 + $0xf0] sm:%s145] %v274
                %v276 = vld [vmem:[%s152 + $0x1bc] sm:%s145]
                %277 = vst [vmem:[%s153 + $0xf4] sm:%s145] %v276
                %v278 = vld [vmem:[%s152 + $0x1c0] sm:%s145]
                %279 = vst [vmem:[%s153 + $0xf8] sm:%s145] %v278
                %v280 = vld [vmem:[%s152 + $0x1c4] sm:%s145]
                %281 = vst [vmem:[%s153 + $0xfc] sm:%s145] %v280
                %v282 = vld [vmem:[%s152 + $0x1c8] sm:%s145]
                %283 = vst [vmem:[%s153 + $0x100] sm:%s145] %v282
                %v284 = vld [vmem:[%s152 + $0x1cc] sm:%s145]
                %285 = vst [vmem:[%s153 + $0x104] sm:%s145] %v284
                %v286 = vld [vmem:[%s152 + $0x1d0] sm:%s145]
                %287 = vst [vmem:[%s153 + $0x108] sm:%s145] %v286
                %v288 = vld [vmem:[%s152 + $0x1d4] sm:%s145]
                %289 = vst [vmem:[%s153 + $0x10c] sm:%s145] %v288
                %v290 = vld [vmem:[%s152 + $0x1d8] sm:%s145]
                %291 = vst [vmem:[%s153 + $0x110] sm:%s145] %v290
                %v292 = vld [vmem:[%s152 + $0x1dc] sm:%s145]
                %293 = vst [vmem:[%s153 + $0x114] sm:%s145] %v292
                %v294 = vld [vmem:[%s152 + $0x1e0] sm:%s145]
                %295 = vst [vmem:[%s153 + $0x118] sm:%s145] %v294
                %v296 = vld [vmem:[%s152 + $0x1e4] sm:%s145]
                %297 = vst [vmem:[%s153 + $0x11c] sm:%s145] %v296
                %v298 = vld [vmem:[%s152 + $0x1e8] sm:%s145]
                %299 = vst [vmem:[%s153 + $0x120] sm:%s145] %v298
                %v300 = vld [vmem:[%s152 + $0x1ec] sm:%s145]
                %301 = vst [vmem:[%s153 + $0x124] sm:%s145] %v300
                %v302 = vld [vmem:[%s152 + $0x1f0] sm:%s145]
                %303 = vst [vmem:[%s153 + $0x128] sm:%s145] %v302
                %v304 = vld [vmem:[%s152 + $0x258] sm:%s145]
                %305 = vst [vmem:[%s153 + $0x12c] sm:%s145] %v304
                %v306 = vld [vmem:[%s152 + $0x25c] sm:%s145]
                %307 = vst [vmem:[%s153 + $0x130] sm:%s145] %v306
                %v308 = vld [vmem:[%s152 + $0x260] sm:%s145]
                %309 = vst [vmem:[%s153 + $0x134] sm:%s145] %v308
                %v310 = vld [vmem:[%s152 + $0x264] sm:%s145]
                %311 = vst [vmem:[%s153 + $0x138] sm:%s145] %v310
                %v312 = vld [vmem:[%s152 + $0x268] sm:%s145]
                %313 = vst [vmem:[%s153 + $0x13c] sm:%s145] %v312
                %v314 = vld [vmem:[%s152 + $0x26c] sm:%s145]
                %315 = vst [vmem:[%s153 + $0x140] sm:%s145] %v314
                %v316 = vld [vmem:[%s152 + $0x270] sm:%s145]
                %317 = vst [vmem:[%s153 + $0x144] sm:%s145] %v316
                %v318 = vld [vmem:[%s152 + $0x274] sm:%s145]
                %319 = vst [vmem:[%s153 + $0x148] sm:%s145] %v318
                %v320 = vld [vmem:[%s152 + $0x278] sm:%s145]
                %321 = vst [vmem:[%s153 + $0x14c] sm:%s145] %v320
                %v322 = vld [vmem:[%s152 + $0x27c] sm:%s145]
                %323 = vst [vmem:[%s153 + $0x150] sm:%s145] %v322
                %v324 = vld [vmem:[%s152 + $0x280] sm:%s145]
                %325 = vst [vmem:[%s153 + $0x154] sm:%s145] %v324
                %v326 = vld [vmem:[%s152 + $0x284] sm:%s145]
                %327 = vst [vmem:[%s153 + $0x158] sm:%s145] %v326
                %v328 = vld [vmem:[%s152 + $0x288] sm:%s145]
                %329 = vst [vmem:[%s153 + $0x15c] sm:%s145] %v328
                %v330 = vld [vmem:[%s152 + $0x28c] sm:%s145]
                %331 = vst [vmem:[%s153 + $0x160] sm:%s145] %v330
                %v332 = vld [vmem:[%s152 + $0x290] sm:%s145]
                %333 = vst [vmem:[%s153 + $0x164] sm:%s145] %v332
                %v334 = vld [vmem:[%s152 + $0x294] sm:%s145]
                %335 = vst [vmem:[%s153 + $0x168] sm:%s145] %v334
                %v336 = vld [vmem:[%s152 + $0x298] sm:%s145]
                %337 = vst [vmem:[%s153 + $0x16c] sm:%s145] %v336
                %v338 = vld [vmem:[%s152 + $0x29c] sm:%s145]
                %339 = vst [vmem:[%s153 + $0x170] sm:%s145] %v338
                %v340 = vld [vmem:[%s152 + $0x2a0] sm:%s145]
                %341 = vst [vmem:[%s153 + $0x174] sm:%s145] %v340
                %v342 = vld [vmem:[%s152 + $0x2a4] sm:%s145]
                %343 = vst [vmem:[%s153 + $0x178] sm:%s145] %v342
                %v344 = vld [vmem:[%s152 + $0x2a8] sm:%s145]
                %345 = vst [vmem:[%s153 + $0x17c] sm:%s145] %v344
                %v346 = vld [vmem:[%s152 + $0x2ac] sm:%s145]
                %347 = vst [vmem:[%s153 + $0x180] sm:%s145] %v346
                %v348 = vld [vmem:[%s152 + $0x2b0] sm:%s145]
                %349 = vst [vmem:[%s153 + $0x184] sm:%s145] %v348
                %v350 = vld [vmem:[%s152 + $0x2b4] sm:%s145]
                %351 = vst [vmem:[%s153 + $0x188] sm:%s145] %v350
                %v352 = vld [vmem:[%s152 + $0x2b8] sm:%s145]
                %353 = vst [vmem:[%s153 + $0x18c] sm:%s145] %v352
              $region45: #{cnn_forward.3} parent=39 // loop_footer
                %s151 = sadd.s32 1, %s147
              $region46: #{cnn_forward.3} parent=39 // loop_footer_branch
                %146 = sbr.rel target = $region42
              $region47: #{cnn_forward.3} parent=39 // loop_exit
                _
            $region40: #{cnn_forward.3} parent=31 // pred_fallthru
              _
          $region32: #{cnn_forward.3} parent=27 // pred_fallthru
            _
          %574 = vnop
        $region28: #{cnn_forward.3} parent=23 // pred_fallthru
          _
      $region24: #{cnn_forward.3} parent=5 // pred_fallthru
        _
      %p575 = scmp.le.s32.totalorder 1, %s9
      %p576 = scmp.lt.s32.totalorder %s9, 3
      %p577 = pnand %p575, %p576
      %p578 = pneg %p577
      // Predicated region
      $region66: #{cnn_forward.3} parent=5 // pred_check
        _
      $region67: #{cnn_forward.3} parent=5 // pred_check_branch
        %580 = sbr.rel (%p577) target = $region69
      $region68: #{cnn_forward.3} parent=5 // pred_region
        %s581 = ssub.s32 %s9, 1
        %s582 = sand.u32 %s22, 1
        %s583 = sand.u32 %s22, 1
        %s584 = smul.addr %s583, 400
        %s585 = scalar_lea.vmem [#allocation2], %s584
        // Predicated region
        $region70: #{cnn_forward.3} parent=68 // pred_check
          %p586 = pneg %p35
        $region71: #{cnn_forward.3} parent=68 // pred_check_branch
          %588 = sbr.rel (%p586) target = $region73
        $region72: #{cnn_forward.3} parent=68 // pred_region
          _
        $region73: #{cnn_forward.3} parent=68 // pred_fallthru
          _
        %s589 = sand.u32 %s22, 1
        %s590 = sand.u32 %s22, 1
        %s591 = smul.addr %s590, 400
        %s592 = scalar_lea.vmem [#allocation2], %s591
        %p593 = pneg %p35
        %p594 = pneg %p32
        %p595 = pneg %p56
        %p596 = pneg %p53
        %p597 = pneg %p77
        %p598 = pneg %p74
        %p599 = pneg %p103
        %p600 = pneg %p100
        %s601 = smul.u32 25, %s14
        %p602 = scmp.lt.s32.totalorder %s601, 49
        %s603 = scalar_select %p602, %s601, 49
        %s604 = smul.addr %s603, 4
        %s605 = scalar_lea.vmem %s3, %s604
        %s606 = smul.u32 25, %s14
        %s607 = smul.u32 25, %s14
        %p608 = scmp.lt.s32.totalorder %s607, 49
        %s609 = scalar_select %p608, %s607, 49
        %s610 = smul.addr %s609, 4
        %s611 = scalar_lea.vmem %s3, %s610
        %s612 = smul.u32 25, %s14
        %v614 = vld [vmem:[%s585] sm:$0xf]
        %v615 = vld [vmem:[%s585 + $0x4] sm:$0xf]
        %v616 = vld [vmem:[%s585 + $0x8] sm:$0xf]
        %v617 = vld [vmem:[%s585 + $0xc] sm:$0xf]
        %v618 = vld [vmem:[%s585 + $0x10] sm:$0xf]
        %v619 = vld [vmem:[%s585 + $0x14] sm:$0xf]
        %v620 = vld [vmem:[%s585 + $0x18] sm:$0xf]
        %v621 = vld [vmem:[%s585 + $0x1c] sm:$0xf]
        %v622 = vld [vmem:[%s585 + $0x20] sm:$0xf]
        %v623 = vld [vmem:[%s585 + $0x24] sm:$0xf]
        %v624 = vld [vmem:[%s585 + $0x28] sm:$0xf]
        %v625 = vld [vmem:[%s585 + $0x2c] sm:$0xf]
        %v626 = vld [vmem:[%s585 + $0x30] sm:$0xf]
        %v627 = vld [vmem:[%s585 + $0x34] sm:$0xf]
        %v628 = vld [vmem:[%s585 + $0x38] sm:$0xf]
        %v629 = vld [vmem:[%s585 + $0x3c] sm:$0xf]
        %v630 = vld [vmem:[%s585 + $0x40] sm:$0xf]
        %v631 = vld [vmem:[%s585 + $0x44] sm:$0xf]
        %v632 = vld [vmem:[%s585 + $0x48] sm:$0xf]
        %v633 = vld [vmem:[%s585 + $0x4c] sm:$0xf]
        %v634 = vld [vmem:[%s585 + $0x50] sm:$0xf]
        %v635 = vld [vmem:[%s585 + $0x54] sm:$0xf]
        %v636 = vld [vmem:[%s585 + $0x58] sm:$0xf]
        %v637 = vld [vmem:[%s585 + $0x5c] sm:$0xf]
        %v638 = vld [vmem:[%s585 + $0x60] sm:$0xf]
        %v639 = vld [vmem:[%s585 + $0x64] sm:$0xf]
        %v640 = vld [vmem:[%s585 + $0x68] sm:$0xf]
        %v641 = vld [vmem:[%s585 + $0x6c] sm:$0xf]
        %v642 = vld [vmem:[%s585 + $0x70] sm:$0xf]
        %v643 = vld [vmem:[%s585 + $0x74] sm:$0xf]
        %v644 = vld [vmem:[%s585 + $0x78] sm:$0xf]
        %v645 = vld [vmem:[%s585 + $0x7c] sm:$0xf]
        %v646 = vld [vmem:[%s585 + $0x80] sm:$0xf]
        %v647 = vld [vmem:[%s585 + $0x84] sm:$0xf]
        %v648 = vld [vmem:[%s585 + $0x88] sm:$0xf]
        %v649 = vld [vmem:[%s585 + $0x8c] sm:$0xf]
        %v650 = vld [vmem:[%s585 + $0x90] sm:$0xf]
        %v651 = vld [vmem:[%s585 + $0x94] sm:$0xf]
        %v652 = vld [vmem:[%s585 + $0x98] sm:$0xf]
        %v653 = vld [vmem:[%s585 + $0x9c] sm:$0xf]
        %v654 = vld [vmem:[%s585 + $0xa0] sm:$0xf]
        %v655 = vld [vmem:[%s585 + $0xa4] sm:$0xf]
        %v656 = vld [vmem:[%s585 + $0xa8] sm:$0xf]
        %v657 = vld [vmem:[%s585 + $0xac] sm:$0xf]
        %v658 = vld [vmem:[%s585 + $0xb0] sm:$0xf]
        %v659 = vld [vmem:[%s585 + $0xb4] sm:$0xf]
        %v660 = vld [vmem:[%s585 + $0xb8] sm:$0xf]
        %v661 = vld [vmem:[%s585 + $0xbc] sm:$0xf]
        %v662 = vld [vmem:[%s585 + $0xc0] sm:$0xf]
        %v663 = vld [vmem:[%s585 + $0xc4] sm:$0xf]
        %v664 = vld [vmem:[%s585 + $0xc8] sm:$0xf]
        %v665 = vld [vmem:[%s585 + $0xcc] sm:$0xf]
        %v666 = vld [vmem:[%s585 + $0xd0] sm:$0xf]
        %v667 = vld [vmem:[%s585 + $0xd4] sm:$0xf]
        %v668 = vld [vmem:[%s585 + $0xd8] sm:$0xf]
        %v669 = vld [vmem:[%s585 + $0xdc] sm:$0xf]
        %v670 = vld [vmem:[%s585 + $0xe0] sm:$0xf]
        %v671 = vld [vmem:[%s585 + $0xe4] sm:$0xf]
        %v672 = vld [vmem:[%s585 + $0xe8] sm:$0xf]
        %v673 = vld [vmem:[%s585 + $0xec] sm:$0xf]
        %v674 = vld [vmem:[%s585 + $0xf0] sm:$0xf]
        %v675 = vld [vmem:[%s585 + $0xf4] sm:$0xf]
        %v676 = vld [vmem:[%s585 + $0xf8] sm:$0xf]
        %v677 = vld [vmem:[%s585 + $0xfc] sm:$0xf]
        %v678 = vld [vmem:[%s585 + $0x100] sm:$0xf]
        %v679 = vld [vmem:[%s585 + $0x104] sm:$0xf]
        %v680 = vld [vmem:[%s585 + $0x108] sm:$0xf]
        %v681 = vld [vmem:[%s585 + $0x10c] sm:$0xf]
        %v682 = vld [vmem:[%s585 + $0x110] sm:$0xf]
        %v683 = vld [vmem:[%s585 + $0x114] sm:$0xf]
        %v684 = vld [vmem:[%s585 + $0x118] sm:$0xf]
        %v685 = vld [vmem:[%s585 + $0x11c] sm:$0xf]
        %v686 = vld [vmem:[%s585 + $0x120] sm:$0xf]
        %v687 = vld [vmem:[%s585 + $0x124] sm:$0xf]
        %v688 = vld [vmem:[%s585 + $0x128] sm:$0xf]
        %v689 = vld [vmem:[%s585 + $0x12c] sm:$0xf]
        %v690 = vld [vmem:[%s585 + $0x130] sm:$0xf]
        %v691 = vld [vmem:[%s585 + $0x134] sm:$0xf]
        %v692 = vld [vmem:[%s585 + $0x138] sm:$0xf]
        %v693 = vld [vmem:[%s585 + $0x13c] sm:$0xf]
        %v694 = vld [vmem:[%s585 + $0x140] sm:$0xf]
        %v695 = vld [vmem:[%s585 + $0x144] sm:$0xf]
        %v696 = vld [vmem:[%s585 + $0x148] sm:$0xf]
        %v697 = vld [vmem:[%s585 + $0x14c] sm:$0xf]
        %v698 = vld [vmem:[%s585 + $0x150] sm:$0xf]
        %v699 = vld [vmem:[%s585 + $0x154] sm:$0xf]
        %v700 = vld [vmem:[%s585 + $0x158] sm:$0xf]
        %v701 = vld [vmem:[%s585 + $0x15c] sm:$0xf]
        %v702 = vld [vmem:[%s585 + $0x160] sm:$0xf]
        %v703 = vld [vmem:[%s585 + $0x164] sm:$0xf]
        %v704 = vld [vmem:[%s585 + $0x168] sm:$0xf]
        %v705 = vld [vmem:[%s585 + $0x16c] sm:$0xf]
        %v706 = vld [vmem:[%s585 + $0x170] sm:$0xf]
        %v707 = vld [vmem:[%s585 + $0x174] sm:$0xf]
        %v708 = vld [vmem:[%s585 + $0x178] sm:$0xf]
        %v709 = vld [vmem:[%s585 + $0x17c] sm:$0xf]
        %v710 = vld [vmem:[%s585 + $0x180] sm:$0xf]
        %v711 = vld [vmem:[%s585 + $0x184] sm:$0xf]
        %v712 = vld [vmem:[%s585 + $0x188] sm:$0xf]
        %v713 = vld [vmem:[%s585 + $0x18c] sm:$0xf]
        %v714 = vld [vmem:[%s1] sm:$0xf]
        %v715 = vld [vmem:[%s1 + $0x4] sm:$0xf]
        %v716 = vld [vmem:[%s1 + $0x8] sm:$0xf]
        %v717 = vld [vmem:[%s1 + $0xc] sm:$0xf]
        %v718 = vld [vmem:[%s1 + $0x10] sm:$0xf]
        %v719 = vld [vmem:[%s1 + $0x14] sm:$0xf]
        %v720 = vld [vmem:[%s1 + $0x18] sm:$0xf]
        %v721 = vld [vmem:[%s1 + $0x1c] sm:$0xf]
        %v722 = vld [vmem:[%s1 + $0x20] sm:$0xf]
        %v723 = vld [vmem:[%s1 + $0x24] sm:$0xf]
        %v724 = vld [vmem:[%s1 + $0x28] sm:$0xf]
        %v725 = vld [vmem:[%s1 + $0x2c] sm:$0xf]
        %v726 = vld [vmem:[%s1 + $0x30] sm:$0xf]
        %v727 = vld [vmem:[%s1 + $0x34] sm:$0xf]
        %v728 = vld [vmem:[%s1 + $0x38] sm:$0xf]
        %v729 = vld [vmem:[%s1 + $0x3c] sm:$0xf]
        %v830 = vunpack.c.l.b16 %v614
        %v831 = vunpack.c.l.b16 %v615
        %v832 = vunpack.c.l.b16 %v616
        %v833 = vunpack.c.l.b16 %v617
        %v834 = vunpack.c.l.b16 %v618
        %v835 = vunpack.c.l.b16 %v619
        %v836 = vunpack.c.l.b16 %v620
        %v837 = vunpack.c.l.b16 %v621
        %v838 = vunpack.c.l.b16 %v622
        %v839 = vunpack.c.l.b16 %v623
        %v840 = vunpack.c.l.b16 %v624
        %v841 = vunpack.c.l.b16 %v625
        %v842 = vunpack.c.l.b16 %v626
        %v843 = vunpack.c.l.b16 %v627
        %v844 = vunpack.c.l.b16 %v628
        %v845 = vunpack.c.l.b16 %v629
        %v846 = vunpack.c.l.b16 %v630
        %v847 = vunpack.c.l.b16 %v631
        %v848 = vunpack.c.l.b16 %v632
        %v849 = vunpack.c.l.b16 %v633
        %v850 = vunpack.c.l.b16 %v634
        %v851 = vunpack.c.l.b16 %v635
        %v852 = vunpack.c.l.b16 %v636
        %v853 = vunpack.c.l.b16 %v637
        %v854 = vunpack.c.l.b16 %v638
        %v855 = vunpack.c.l.b16 %v639
        %v856 = vunpack.c.l.b16 %v640
        %v857 = vunpack.c.l.b16 %v641
        %v858 = vunpack.c.l.b16 %v642
        %v859 = vunpack.c.l.b16 %v643
        %v860 = vunpack.c.l.b16 %v644
        %v861 = vunpack.c.l.b16 %v645
        %v862 = vunpack.c.l.b16 %v646
        %v863 = vunpack.c.l.b16 %v647
        %v864 = vunpack.c.l.b16 %v648
        %v865 = vunpack.c.l.b16 %v649
        %v866 = vunpack.c.l.b16 %v650
        %v867 = vunpack.c.l.b16 %v651
        %v868 = vunpack.c.l.b16 %v652
        %v869 = vunpack.c.l.b16 %v653
        %v870 = vunpack.c.l.b16 %v654
        %v871 = vunpack.c.l.b16 %v655
        %v872 = vunpack.c.l.b16 %v656
        %v873 = vunpack.c.l.b16 %v657
        %v874 = vunpack.c.l.b16 %v658
        %v875 = vunpack.c.l.b16 %v659
        %v876 = vunpack.c.l.b16 %v660
        %v877 = vunpack.c.l.b16 %v661
        %v878 = vunpack.c.l.b16 %v662
        %v879 = vunpack.c.l.b16 %v663
        %v880 = vunpack.c.l.b16 %v664
        %v881 = vunpack.c.l.b16 %v665
        %v882 = vunpack.c.l.b16 %v666
        %v883 = vunpack.c.l.b16 %v667
        %v884 = vunpack.c.l.b16 %v668
        %v885 = vunpack.c.l.b16 %v669
        %v886 = vunpack.c.l.b16 %v670
        %v887 = vunpack.c.l.b16 %v671
        %v888 = vunpack.c.l.b16 %v672
        %v889 = vunpack.c.l.b16 %v673
        %v890 = vunpack.c.l.b16 %v674
        %v891 = vunpack.c.l.b16 %v675
        %v892 = vunpack.c.l.b16 %v676
        %v893 = vunpack.c.l.b16 %v677
        %v894 = vunpack.c.l.b16 %v678
        %v895 = vunpack.c.l.b16 %v679
        %v896 = vunpack.c.l.b16 %v680
        %v897 = vunpack.c.l.b16 %v681
        %v898 = vunpack.c.l.b16 %v682
        %v899 = vunpack.c.l.b16 %v683
        %v900 = vunpack.c.l.b16 %v684
        %v901 = vunpack.c.l.b16 %v685
        %v902 = vunpack.c.l.b16 %v686
        %v903 = vunpack.c.l.b16 %v687
        %v904 = vunpack.c.l.b16 %v688
        %v905 = vunpack.c.l.b16 %v689
        %v906 = vunpack.c.l.b16 %v690
        %v907 = vunpack.c.l.b16 %v691
        %v908 = vunpack.c.l.b16 %v692
        %v909 = vunpack.c.l.b16 %v693
        %v910 = vunpack.c.l.b16 %v694
        %v911 = vunpack.c.l.b16 %v695
        %v912 = vunpack.c.l.b16 %v696
        %v913 = vunpack.c.l.b16 %v697
        %v914 = vunpack.c.l.b16 %v698
        %v915 = vunpack.c.l.b16 %v699
        %v916 = vunpack.c.l.b16 %v700
        %v917 = vunpack.c.l.b16 %v701
        %v918 = vunpack.c.l.b16 %v702
        %v919 = vunpack.c.l.b16 %v703
        %v920 = vunpack.c.l.b16 %v704
        %v921 = vunpack.c.l.b16 %v705
        %v922 = vunpack.c.l.b16 %v706
        %v923 = vunpack.c.l.b16 %v707
        %v924 = vunpack.c.l.b16 %v708
        %v925 = vunpack.c.l.b16 %v709
        %v926 = vunpack.c.l.b16 %v710
        %v927 = vunpack.c.l.b16 %v711
        %v928 = vunpack.c.l.b16 %v712
        %v929 = vunpack.c.l.b16 %v713
        %v930 = vpack.c.b16 %v831, %v830
        %v931 = vpack.c.b16 %v833, %v832
        %v932 = vpack.c.b16 %v835, %v834
        %v933 = vpack.c.b16 %v837, %v836
        %v934 = vpack.c.b16 %v839, %v838
        %v935 = vpack.c.b16 %v841, %v840
        %v936 = vpack.c.b16 %v843, %v842
        %v937 = vpack.c.b16 %v845, %v844
        %v938 = vpack.c.b16 %v847, %v846
        %v939 = vpack.c.b16 %v849, %v848
        %v940 = vpack.c.b16 %v851, %v850
        %v941 = vpack.c.b16 %v853, %v852
        %v942 = vpack.c.b16 %v855, %v854
        %v943 = vpack.c.b16 %v857, %v856
        %v944 = vpack.c.b16 %v859, %v858
        %v945 = vpack.c.b16 %v861, %v860
        %v946 = vpack.c.b16 %v863, %v862
        %v947 = vpack.c.b16 %v865, %v864
        %v948 = vpack.c.b16 %v867, %v866
        %v949 = vpack.c.b16 %v869, %v868
        %v950 = vpack.c.b16 %v871, %v870
        %v951 = vpack.c.b16 %v873, %v872
        %v952 = vpack.c.b16 %v875, %v874
        %v953 = vpack.c.b16 %v877, %v876
        %v954 = vpack.c.b16 %v879, %v878
        %v955 = vpack.c.b16 %v881, %v880
        %v956 = vpack.c.b16 %v883, %v882
        %v957 = vpack.c.b16 %v885, %v884
        %v958 = vpack.c.b16 %v887, %v886
        %v959 = vpack.c.b16 %v889, %v888
        %v960 = vpack.c.b16 %v891, %v890
        %v961 = vpack.c.b16 %v893, %v892
        %v962 = vpack.c.b16 %v895, %v894
        %v963 = vpack.c.b16 %v897, %v896
        %v964 = vpack.c.b16 %v899, %v898
        %v965 = vpack.c.b16 %v901, %v900
        %v966 = vpack.c.b16 %v903, %v902
        %v967 = vpack.c.b16 %v905, %v904
        %v968 = vpack.c.b16 %v907, %v906
        %v969 = vpack.c.b16 %v909, %v908
        %v970 = vpack.c.b16 %v911, %v910
        %v971 = vpack.c.b16 %v913, %v912
        %v972 = vpack.c.b16 %v915, %v914
        %v973 = vpack.c.b16 %v917, %v916
        %v974 = vpack.c.b16 %v919, %v918
        %v975 = vpack.c.b16 %v921, %v920
        %v976 = vpack.c.b16 %v923, %v922
        %v977 = vpack.c.b16 %v925, %v924
        %v978 = vpack.c.b16 %v927, %v926
        %v979 = vpack.c.b16 %v929, %v928
        %v1046 = vunpack.c.l.b16 %v714
        %v1047 = vunpack.c.l.b16 %v715
        %v1048 = vunpack.c.l.b16 %v716
        %v1049 = vunpack.c.l.b16 %v717
        %v1050 = vunpack.c.l.b16 %v718
        %v1051 = vunpack.c.l.b16 %v719
        %v1052 = vunpack.c.l.b16 %v720
        %v1053 = vunpack.c.l.b16 %v721
        %v1054 = vunpack.c.l.b16 %v722
        %v1055 = vunpack.c.l.b16 %v723
        %v1056 = vunpack.c.l.b16 %v724
        %v1057 = vunpack.c.l.b16 %v725
        %v1058 = vunpack.c.l.b16 %v726
        %v1059 = vunpack.c.l.b16 %v727
        %v1060 = vunpack.c.l.b16 %v728
        %v1061 = vunpack.c.l.b16 %v729
        %v1062 = vpack.c.b16 %v1047, %v1046
        %v1063 = vpack.c.b16 %v1049, %v1048
        %v1064 = vpack.c.b16 %v1051, %v1050
        %v1065 = vpack.c.b16 %v1053, %v1052
        %v1066 = vpack.c.b16 %v1055, %v1054
        %v1067 = vpack.c.b16 %v1057, %v1056
        %v1068 = vpack.c.b16 %v1059, %v1058
        %v1069 = vpack.c.b16 %v1061, %v1060
        %1078 = vmatprep.subr.bf16.mxu0 0
        %1079 = vmatpush1.bf16.msra.mxu0 %v1069
        %1080 = vmatprep.subr.bf16.mxu0 0
        %1081 = vmatpush1.bf16.msra.mxu0 %v1068
        %1082 = vmatprep.subr.bf16.mxu0 0
        %1083 = vmatpush1.bf16.msra.mxu0 %v1067
        %1084 = vmatprep.subr.bf16.mxu0 0
        %1085 = vmatpush1.bf16.msra.mxu0 %v1066
        %1086 = vmatprep.subr.bf16.mxu0 0
        %1087 = vmatpush1.bf16.msra.mxu0 %v1065
        %1088 = vmatprep.subr.bf16.mxu0 0
        %1089 = vmatpush1.bf16.msra.mxu0 %v1064
        %1090 = vmatprep.subr.bf16.mxu0 0
        %1091 = vmatpush1.bf16.msra.mxu0 %v1063
        %1092 = vmatprep.subr.bf16.mxu0 0
        %1093 = vmatpush1.bf16.msra.mxu0 %v1062
        %1094 = vmatprep.subr.bf16.mxu0 0
        %1095 = vmatpush2.bf16.msra.mxu0 0
        %1096 = vmatprep.subr.bf16.mxu0 0
        %1097 = vmatpush2.bf16.msra.mxu0 0
        %1098 = vmatprep.subr.bf16.mxu0 0
        %1099 = vmatpush2.bf16.msra.mxu0 0
        %1100 = vmatprep.subr.bf16.mxu0 0
        %1101 = vmatpush2.bf16.msra.mxu0 0
        %1102 = vmatprep.subr.bf16.mxu0 0
        %1103 = vmatpush2.bf16.msra.mxu0 0
        %1104 = vmatprep.subr.bf16.mxu0 0
        %1105 = vmatpush2.bf16.msra.mxu0 0
        %1106 = vmatprep.subr.bf16.mxu0 0
        %1107 = vmatpush2.bf16.msra.mxu0 0
        %1108 = vmatprep.subr.bf16.mxu0 0
        %1109 = vmatpush2.bf16.msra.mxu0 0
        %1110 = vmatprep.mubr.bf16.mxu0 0
        %1111 = vmatmul.mubr.bf16.gmra.mxu0 %v930
        %v1112 = vpop.f32.mrf.mxu0
        %v1113 = vadd.f32 0.0, %v1112
        %v1114 = vpop.f32.mrf.mxu0
        %v1115 = vpop.f32.mrf.mxu0
        %v1116 = vadd.f32 0.0, %v1115
        %v1117 = vpop.f32.mrf.mxu0
        %1118 = vmatprep.mubr.bf16.mxu0 0
        %1119 = vmatmul.mubr.bf16.gmra.mxu0 %v931
        %v1120 = vpop.f32.mrf.mxu0
        %v1121 = vadd.f32 0.0, %v1120
        %v1122 = vpop.f32.mrf.mxu0
        %v1123 = vpop.f32.mrf.mxu0
        %v1124 = vadd.f32 0.0, %v1123
        %v1125 = vpop.f32.mrf.mxu0
        %1126 = vmatprep.mubr.bf16.mxu0 0
        %1127 = vmatmul.mubr.bf16.gmra.mxu0 %v932
        %v1128 = vpop.f32.mrf.mxu0
        %v1129 = vadd.f32 0.0, %v1128
        %v1130 = vpop.f32.mrf.mxu0
        %v1131 = vpop.f32.mrf.mxu0
        %v1132 = vadd.f32 0.0, %v1131
        %v1133 = vpop.f32.mrf.mxu0
        %1134 = vmatprep.mubr.bf16.mxu0 0
        %1135 = vmatmul.mubr.bf16.gmra.mxu0 %v933
        %v1136 = vpop.f32.mrf.mxu0
        %v1137 = vadd.f32 0.0, %v1136
        %v1138 = vpop.f32.mrf.mxu0
        %v1139 = vpop.f32.mrf.mxu0
        %v1140 = vadd.f32 0.0, %v1139
        %v1141 = vpop.f32.mrf.mxu0
        %1142 = vmatprep.mubr.bf16.mxu0 0
        %1143 = vmatmul.mubr.bf16.gmra.mxu0 %v934
        %v1144 = vpop.f32.mrf.mxu0
        %v1145 = vadd.f32 0.0, %v1144
        %v1146 = vpop.f32.mrf.mxu0
        %v1147 = vpop.f32.mrf.mxu0
        %v1148 = vadd.f32 0.0, %v1147
        %v1149 = vpop.f32.mrf.mxu0
        %1150 = vmatprep.mubr.bf16.mxu0 0
        %1151 = vmatmul.mubr.bf16.gmra.mxu0 %v935
        %v1152 = vpop.f32.mrf.mxu0
        %v1153 = vadd.f32 0.0, %v1152
        %v1154 = vpop.f32.mrf.mxu0
        %v1155 = vpop.f32.mrf.mxu0
        %v1156 = vadd.f32 0.0, %v1155
        %v1157 = vpop.f32.mrf.mxu0
        %1158 = vmatprep.mubr.bf16.mxu0 0
        %1159 = vmatmul.mubr.bf16.gmra.mxu0 %v936
        %v1160 = vpop.f32.mrf.mxu0
        %v1161 = vadd.f32 0.0, %v1160
        %v1162 = vpop.f32.mrf.mxu0
        %v1163 = vpop.f32.mrf.mxu0
        %v1164 = vadd.f32 0.0, %v1163
        %v1165 = vpop.f32.mrf.mxu0
        %1166 = vmatprep.mubr.bf16.mxu0 0
        %1167 = vmatmul.mubr.bf16.gmra.mxu0 %v937
        %v1168 = vpop.f32.mrf.mxu0
        %v1169 = vadd.f32 0.0, %v1168
        %v1170 = vpop.f32.mrf.mxu0
        %v1171 = vpop.f32.mrf.mxu0
        %v1172 = vadd.f32 0.0, %v1171
        %v1173 = vpop.f32.mrf.mxu0
        %1174 = vmatprep.mubr.bf16.mxu0 0
        %1175 = vmatmul.mubr.bf16.gmra.mxu0 %v938
        %v1176 = vpop.f32.mrf.mxu0
        %v1177 = vadd.f32 0.0, %v1176
        %v1178 = vpop.f32.mrf.mxu0
        %v1179 = vpop.f32.mrf.mxu0
        %v1180 = vadd.f32 0.0, %v1179
        %v1181 = vpop.f32.mrf.mxu0
        %1182 = vmatprep.mubr.bf16.mxu0 0
        %1183 = vmatmul.mubr.bf16.gmra.mxu0 %v939
        %v1184 = vpop.f32.mrf.mxu0
        %v1185 = vadd.f32 0.0, %v1184
        %v1186 = vpop.f32.mrf.mxu0
        %v1187 = vpop.f32.mrf.mxu0
        %v1188 = vadd.f32 0.0, %v1187
        %v1189 = vpop.f32.mrf.mxu0
        %1190 = vmatprep.mubr.bf16.mxu0 0
        %1191 = vmatmul.mubr.bf16.gmra.mxu0 %v940
        %v1192 = vpop.f32.mrf.mxu0
        %v1193 = vadd.f32 0.0, %v1192
        %v1194 = vpop.f32.mrf.mxu0
        %v1195 = vpop.f32.mrf.mxu0
        %v1196 = vadd.f32 0.0, %v1195
        %v1197 = vpop.f32.mrf.mxu0
        %1198 = vmatprep.mubr.bf16.mxu0 0
        %1199 = vmatmul.mubr.bf16.gmra.mxu0 %v941
        %v1200 = vpop.f32.mrf.mxu0
        %v1201 = vadd.f32 0.0, %v1200
        %v1202 = vpop.f32.mrf.mxu0
        %v1203 = vpop.f32.mrf.mxu0
        %v1204 = vadd.f32 0.0, %v1203
        %v1205 = vpop.f32.mrf.mxu0
        %1206 = vmatprep.mubr.bf16.mxu0 0
        %1207 = vmatmul.mubr.bf16.gmra.mxu0 %v942
        %v1208 = vpop.f32.mrf.mxu0
        %v1209 = vadd.f32 0.0, %v1208
        %v1210 = vpop.f32.mrf.mxu0
        %v1211 = vpop.f32.mrf.mxu0
        %v1212 = vadd.f32 0.0, %v1211
        %v1213 = vpop.f32.mrf.mxu0
        %1214 = vmatprep.mubr.bf16.mxu0 0
        %1215 = vmatmul.mubr.bf16.gmra.mxu0 %v943
        %v1216 = vpop.f32.mrf.mxu0
        %v1217 = vadd.f32 0.0, %v1216
        %v1218 = vpop.f32.mrf.mxu0
        %v1219 = vpop.f32.mrf.mxu0
        %v1220 = vadd.f32 0.0, %v1219
        %v1221 = vpop.f32.mrf.mxu0
        %1222 = vmatprep.mubr.bf16.mxu0 0
        %1223 = vmatmul.mubr.bf16.gmra.mxu0 %v944
        %v1224 = vpop.f32.mrf.mxu0
        %v1225 = vadd.f32 0.0, %v1224
        %v1226 = vpop.f32.mrf.mxu0
        %v1227 = vpop.f32.mrf.mxu0
        %v1228 = vadd.f32 0.0, %v1227
        %v1229 = vpop.f32.mrf.mxu0
        %1230 = vmatprep.mubr.bf16.mxu0 0
        %1231 = vmatmul.mubr.bf16.gmra.mxu0 %v945
        %v1232 = vpop.f32.mrf.mxu0
        %v1233 = vadd.f32 0.0, %v1232
        %v1234 = vpop.f32.mrf.mxu0
        %v1235 = vpop.f32.mrf.mxu0
        %v1236 = vadd.f32 0.0, %v1235
        %v1237 = vpop.f32.mrf.mxu0
        %1238 = vmatprep.mubr.bf16.mxu0 0
        %1239 = vmatmul.mubr.bf16.gmra.mxu0 %v946
        %v1240 = vpop.f32.mrf.mxu0
        %v1241 = vadd.f32 0.0, %v1240
        %v1242 = vpop.f32.mrf.mxu0
        %v1243 = vpop.f32.mrf.mxu0
        %v1244 = vadd.f32 0.0, %v1243
        %v1245 = vpop.f32.mrf.mxu0
        %1246 = vmatprep.mubr.bf16.mxu0 0
        %1247 = vmatmul.mubr.bf16.gmra.mxu0 %v947
        %v1248 = vpop.f32.mrf.mxu0
        %v1249 = vadd.f32 0.0, %v1248
        %v1250 = vpop.f32.mrf.mxu0
        %v1251 = vpop.f32.mrf.mxu0
        %v1252 = vadd.f32 0.0, %v1251
        %v1253 = vpop.f32.mrf.mxu0
        %1254 = vmatprep.mubr.bf16.mxu0 0
        %1255 = vmatmul.mubr.bf16.gmra.mxu0 %v948
        %v1256 = vpop.f32.mrf.mxu0
        %v1257 = vadd.f32 0.0, %v1256
        %v1258 = vpop.f32.mrf.mxu0
        %v1259 = vpop.f32.mrf.mxu0
        %v1260 = vadd.f32 0.0, %v1259
        %v1261 = vpop.f32.mrf.mxu0
        %1262 = vmatprep.mubr.bf16.mxu0 0
        %1263 = vmatmul.mubr.bf16.gmra.mxu0 %v949
        %v1264 = vpop.f32.mrf.mxu0
        %v1265 = vadd.f32 0.0, %v1264
        %v1266 = vpop.f32.mrf.mxu0
        %v1267 = vpop.f32.mrf.mxu0
        %v1268 = vadd.f32 0.0, %v1267
        %v1269 = vpop.f32.mrf.mxu0
        %1270 = vmatprep.mubr.bf16.mxu0 0
        %1271 = vmatmul.mubr.bf16.gmra.mxu0 %v950
        %v1272 = vpop.f32.mrf.mxu0
        %v1273 = vadd.f32 0.0, %v1272
        %v1274 = vpop.f32.mrf.mxu0
        %v1275 = vpop.f32.mrf.mxu0
        %v1276 = vadd.f32 0.0, %v1275
        %v1277 = vpop.f32.mrf.mxu0
        %1278 = vmatprep.mubr.bf16.mxu0 0
        %1279 = vmatmul.mubr.bf16.gmra.mxu0 %v951
        %v1280 = vpop.f32.mrf.mxu0
        %v1281 = vadd.f32 0.0, %v1280
        %v1282 = vpop.f32.mrf.mxu0
        %v1283 = vpop.f32.mrf.mxu0
        %v1284 = vadd.f32 0.0, %v1283
        %v1285 = vpop.f32.mrf.mxu0
        %1286 = vmatprep.mubr.bf16.mxu0 0
        %1287 = vmatmul.mubr.bf16.gmra.mxu0 %v952
        %v1288 = vpop.f32.mrf.mxu0
        %v1289 = vadd.f32 0.0, %v1288
        %v1290 = vpop.f32.mrf.mxu0
        %v1291 = vpop.f32.mrf.mxu0
        %v1292 = vadd.f32 0.0, %v1291
        %v1293 = vpop.f32.mrf.mxu0
        %1294 = vmatprep.mubr.bf16.mxu0 0
        %1295 = vmatmul.mubr.bf16.gmra.mxu0 %v953
        %v1296 = vpop.f32.mrf.mxu0
        %v1297 = vadd.f32 0.0, %v1296
        %v1298 = vpop.f32.mrf.mxu0
        %v1299 = vpop.f32.mrf.mxu0
        %v1300 = vadd.f32 0.0, %v1299
        %v1301 = vpop.f32.mrf.mxu0
        %1302 = vmatprep.mubr.bf16.mxu0 0
        %1303 = vmatmul.mubr.bf16.gmra.mxu0 %v954
        %v1304 = vpop.f32.mrf.mxu0
        %v1305 = vadd.f32 0.0, %v1304
        %v1306 = vpop.f32.mrf.mxu0
        %v1307 = vpop.f32.mrf.mxu0
        %v1308 = vadd.f32 0.0, %v1307
        %v1309 = vpop.f32.mrf.mxu0
        %1310 = vmatprep.mubr.bf16.mxu0 0
        %1311 = vmatmul.mubr.bf16.gmra.mxu0 %v955
        %v1312 = vpop.f32.mrf.mxu0
        %v1313 = vadd.f32 0.0, %v1312
        %v1314 = vpop.f32.mrf.mxu0
        %v1315 = vpop.f32.mrf.mxu0
        %v1316 = vadd.f32 0.0, %v1315
        %v1317 = vpop.f32.mrf.mxu0
        %1318 = vmatprep.mubr.bf16.mxu0 0
        %1319 = vmatmul.mubr.bf16.gmra.mxu0 %v956
        %v1320 = vpop.f32.mrf.mxu0
        %v1321 = vadd.f32 0.0, %v1320
        %v1322 = vpop.f32.mrf.mxu0
        %v1323 = vpop.f32.mrf.mxu0
        %v1324 = vadd.f32 0.0, %v1323
        %v1325 = vpop.f32.mrf.mxu0
        %1326 = vmatprep.mubr.bf16.mxu0 0
        %1327 = vmatmul.mubr.bf16.gmra.mxu0 %v957
        %v1328 = vpop.f32.mrf.mxu0
        %v1329 = vadd.f32 0.0, %v1328
        %v1330 = vpop.f32.mrf.mxu0
        %v1331 = vpop.f32.mrf.mxu0
        %v1332 = vadd.f32 0.0, %v1331
        %v1333 = vpop.f32.mrf.mxu0
        %1334 = vmatprep.mubr.bf16.mxu0 0
        %1335 = vmatmul.mubr.bf16.gmra.mxu0 %v958
        %v1336 = vpop.f32.mrf.mxu0
        %v1337 = vadd.f32 0.0, %v1336
        %v1338 = vpop.f32.mrf.mxu0
        %v1339 = vpop.f32.mrf.mxu0
        %v1340 = vadd.f32 0.0, %v1339
        %v1341 = vpop.f32.mrf.mxu0
        %1342 = vmatprep.mubr.bf16.mxu0 0
        %1343 = vmatmul.mubr.bf16.gmra.mxu0 %v959
        %v1344 = vpop.f32.mrf.mxu0
        %v1345 = vadd.f32 0.0, %v1344
        %v1346 = vpop.f32.mrf.mxu0
        %v1347 = vpop.f32.mrf.mxu0
        %v1348 = vadd.f32 0.0, %v1347
        %v1349 = vpop.f32.mrf.mxu0
        %1350 = vmatprep.mubr.bf16.mxu0 0
        %1351 = vmatmul.mubr.bf16.gmra.mxu0 %v960
        %v1352 = vpop.f32.mrf.mxu0
        %v1353 = vadd.f32 0.0, %v1352
        %v1354 = vpop.f32.mrf.mxu0
        %v1355 = vpop.f32.mrf.mxu0
        %v1356 = vadd.f32 0.0, %v1355
        %v1357 = vpop.f32.mrf.mxu0
        %1358 = vmatprep.mubr.bf16.mxu0 0
        %1359 = vmatmul.mubr.bf16.gmra.mxu0 %v961
        %v1360 = vpop.f32.mrf.mxu0
        %v1361 = vadd.f32 0.0, %v1360
        %v1362 = vpop.f32.mrf.mxu0
        %v1363 = vpop.f32.mrf.mxu0
        %v1364 = vadd.f32 0.0, %v1363
        %v1365 = vpop.f32.mrf.mxu0
        %1366 = vmatprep.mubr.bf16.mxu0 0
        %1367 = vmatmul.mubr.bf16.gmra.mxu0 %v962
        %v1368 = vpop.f32.mrf.mxu0
        %v1369 = vadd.f32 0.0, %v1368
        %v1370 = vpop.f32.mrf.mxu0
        %v1371 = vpop.f32.mrf.mxu0
        %v1372 = vadd.f32 0.0, %v1371
        %v1373 = vpop.f32.mrf.mxu0
        %1374 = vmatprep.mubr.bf16.mxu0 0
        %1375 = vmatmul.mubr.bf16.gmra.mxu0 %v963
        %v1376 = vpop.f32.mrf.mxu0
        %v1377 = vadd.f32 0.0, %v1376
        %v1378 = vpop.f32.mrf.mxu0
        %v1379 = vpop.f32.mrf.mxu0
        %v1380 = vadd.f32 0.0, %v1379
        %v1381 = vpop.f32.mrf.mxu0
        %1382 = vmatprep.mubr.bf16.mxu0 0
        %1383 = vmatmul.mubr.bf16.gmra.mxu0 %v964
        %v1384 = vpop.f32.mrf.mxu0
        %v1385 = vadd.f32 0.0, %v1384
        %v1386 = vpop.f32.mrf.mxu0
        %v1387 = vpop.f32.mrf.mxu0
        %v1388 = vadd.f32 0.0, %v1387
        %v1389 = vpop.f32.mrf.mxu0
        %1390 = vmatprep.mubr.bf16.mxu0 0
        %1391 = vmatmul.mubr.bf16.gmra.mxu0 %v965
        %v1392 = vpop.f32.mrf.mxu0
        %v1393 = vadd.f32 0.0, %v1392
        %v1394 = vpop.f32.mrf.mxu0
        %v1395 = vpop.f32.mrf.mxu0
        %v1396 = vadd.f32 0.0, %v1395
        %v1397 = vpop.f32.mrf.mxu0
        %1398 = vmatprep.mubr.bf16.mxu0 0
        %1399 = vmatmul.mubr.bf16.gmra.mxu0 %v966
        %v1400 = vpop.f32.mrf.mxu0
        %v1401 = vadd.f32 0.0, %v1400
        %v1402 = vpop.f32.mrf.mxu0
        %v1403 = vpop.f32.mrf.mxu0
        %v1404 = vadd.f32 0.0, %v1403
        %v1405 = vpop.f32.mrf.mxu0
        %1406 = vmatprep.mubr.bf16.mxu0 0
        %1407 = vmatmul.mubr.bf16.gmra.mxu0 %v967
        %v1408 = vpop.f32.mrf.mxu0
        %v1409 = vadd.f32 0.0, %v1408
        %v1410 = vpop.f32.mrf.mxu0
        %v1411 = vpop.f32.mrf.mxu0
        %v1412 = vadd.f32 0.0, %v1411
        %v1413 = vpop.f32.mrf.mxu0
        %1414 = vmatprep.mubr.bf16.mxu0 0
        %1415 = vmatmul.mubr.bf16.gmra.mxu0 %v968
        %v1416 = vpop.f32.mrf.mxu0
        %v1417 = vadd.f32 0.0, %v1416
        %v1418 = vpop.f32.mrf.mxu0
        %v1419 = vpop.f32.mrf.mxu0
        %v1420 = vadd.f32 0.0, %v1419
        %v1421 = vpop.f32.mrf.mxu0
        %1422 = vmatprep.mubr.bf16.mxu0 0
        %1423 = vmatmul.mubr.bf16.gmra.mxu0 %v969
        %v1424 = vpop.f32.mrf.mxu0
        %v1425 = vadd.f32 0.0, %v1424
        %v1426 = vpop.f32.mrf.mxu0
        %v1427 = vpop.f32.mrf.mxu0
        %v1428 = vadd.f32 0.0, %v1427
        %v1429 = vpop.f32.mrf.mxu0
        %1430 = vmatprep.mubr.bf16.mxu0 0
        %1431 = vmatmul.mubr.bf16.gmra.mxu0 %v970
        %v1432 = vpop.f32.mrf.mxu0
        %v1433 = vadd.f32 0.0, %v1432
        %v1434 = vpop.f32.mrf.mxu0
        %v1435 = vpop.f32.mrf.mxu0
        %v1436 = vadd.f32 0.0, %v1435
        %v1437 = vpop.f32.mrf.mxu0
        %1438 = vmatprep.mubr.bf16.mxu0 0
        %1439 = vmatmul.mubr.bf16.gmra.mxu0 %v971
        %v1440 = vpop.f32.mrf.mxu0
        %v1441 = vadd.f32 0.0, %v1440
        %v1442 = vpop.f32.mrf.mxu0
        %v1443 = vpop.f32.mrf.mxu0
        %v1444 = vadd.f32 0.0, %v1443
        %v1445 = vpop.f32.mrf.mxu0
        %1446 = vmatprep.mubr.bf16.mxu0 0
        %1447 = vmatmul.mubr.bf16.gmra.mxu0 %v972
        %v1448 = vpop.f32.mrf.mxu0
        %v1449 = vadd.f32 0.0, %v1448
        %v1450 = vpop.f32.mrf.mxu0
        %v1451 = vpop.f32.mrf.mxu0
        %v1452 = vadd.f32 0.0, %v1451
        %v1453 = vpop.f32.mrf.mxu0
        %1454 = vmatprep.mubr.bf16.mxu0 0
        %1455 = vmatmul.mubr.bf16.gmra.mxu0 %v973
        %v1456 = vpop.f32.mrf.mxu0
        %v1457 = vadd.f32 0.0, %v1456
        %v1458 = vpop.f32.mrf.mxu0
        %v1459 = vpop.f32.mrf.mxu0
        %v1460 = vadd.f32 0.0, %v1459
        %v1461 = vpop.f32.mrf.mxu0
        %1462 = vmatprep.mubr.bf16.mxu0 0
        %1463 = vmatmul.mubr.bf16.gmra.mxu0 %v974
        %v1464 = vpop.f32.mrf.mxu0
        %v1465 = vadd.f32 0.0, %v1464
        %v1466 = vpop.f32.mrf.mxu0
        %v1467 = vpop.f32.mrf.mxu0
        %v1468 = vadd.f32 0.0, %v1467
        %v1469 = vpop.f32.mrf.mxu0
        %1470 = vmatprep.mubr.bf16.mxu0 0
        %1471 = vmatmul.mubr.bf16.gmra.mxu0 %v975
        %v1472 = vpop.f32.mrf.mxu0
        %v1473 = vadd.f32 0.0, %v1472
        %v1474 = vpop.f32.mrf.mxu0
        %v1475 = vpop.f32.mrf.mxu0
        %v1476 = vadd.f32 0.0, %v1475
        %v1477 = vpop.f32.mrf.mxu0
        %1478 = vmatprep.mubr.bf16.mxu0 0
        %1479 = vmatmul.mubr.bf16.gmra.mxu0 %v976
        %v1480 = vpop.f32.mrf.mxu0
        %v1481 = vadd.f32 0.0, %v1480
        %v1482 = vpop.f32.mrf.mxu0
        %v1483 = vpop.f32.mrf.mxu0
        %v1484 = vadd.f32 0.0, %v1483
        %v1485 = vpop.f32.mrf.mxu0
        %1486 = vmatprep.mubr.bf16.mxu0 0
        %1487 = vmatmul.mubr.bf16.gmra.mxu0 %v977
        %v1488 = vpop.f32.mrf.mxu0
        %v1489 = vadd.f32 0.0, %v1488
        %v1490 = vpop.f32.mrf.mxu0
        %v1491 = vpop.f32.mrf.mxu0
        %v1492 = vadd.f32 0.0, %v1491
        %v1493 = vpop.f32.mrf.mxu0
        %1494 = vmatprep.mubr.bf16.mxu0 0
        %1495 = vmatmul.mubr.bf16.gmra.mxu0 %v978
        %v1496 = vpop.f32.mrf.mxu0
        %v1497 = vadd.f32 0.0, %v1496
        %v1498 = vpop.f32.mrf.mxu0
        %v1499 = vpop.f32.mrf.mxu0
        %v1500 = vadd.f32 0.0, %v1499
        %v1501 = vpop.f32.mrf.mxu0
        %1502 = vmatprep.mubr.bf16.mxu0 0
        %1503 = vmatmul.mubr.bf16.gmra.mxu0 %v979
        %v1504 = vpop.f32.mrf.mxu0
        %v1505 = vadd.f32 0.0, %v1504
        %v1506 = vpop.f32.mrf.mxu0
        %v1507 = vpop.f32.mrf.mxu0
        %v1508 = vadd.f32 0.0, %v1507
        %v1509 = vpop.f32.mrf.mxu0
        %1510 = vdwg.mxu0
        %v1511 = vmax.f32 %v1113, %v1212
        %v1512 = vmax.f32 %v1116, %v1217
        %v1513 = vmax.f32 %v1121, %v1220
        %v1514 = vmax.f32 %v1124, %v1225
        %v1515 = vmax.f32 %v1129, %v1228
        %v1516 = vmax.f32 %v1132, %v1233
        %v1517 = vmax.f32 %v1137, %v1236
        %v1518 = vmax.f32 %v1140, %v1241
        %v1519 = vmax.f32 %v1145, %v1244
        %v1520 = vmax.f32 %v1148, %v1249
        %v1521 = vmax.f32 %v1153, %v1252
        %v1522 = vmax.f32 %v1156, %v1257
        %v1523 = vmax.f32 %v1161, %v1260
        %v1524 = vmax.f32 %v1164, %v1265
        %v1525 = vmax.f32 %v1169, %v1268
        %v1526 = vmax.f32 %v1172, %v1273
        %v1527 = vmax.f32 %v1177, %v1276
        %v1528 = vmax.f32 %v1180, %v1281
        %v1529 = vmax.f32 %v1185, %v1284
        %v1530 = vmax.f32 %v1188, %v1289
        %v1531 = vmax.f32 %v1193, %v1292
        %v1532 = vmax.f32 %v1196, %v1297
        %v1533 = vmax.f32 %v1201, %v1300
        %v1534 = vmax.f32 %v1204, %v1305
        %v1535 = vmax.f32 %v1209, %v1308
        %v1536 = vmax.f32 %v1313, %v1412
        %v1537 = vmax.f32 %v1316, %v1417
        %v1538 = vmax.f32 %v1321, %v1420
        %v1539 = vmax.f32 %v1324, %v1425
        %v1540 = vmax.f32 %v1329, %v1428
        %v1541 = vmax.f32 %v1332, %v1433
        %v1542 = vmax.f32 %v1337, %v1436
        %v1543 = vmax.f32 %v1340, %v1441
        %v1544 = vmax.f32 %v1345, %v1444
        %v1545 = vmax.f32 %v1348, %v1449
        %v1546 = vmax.f32 %v1353, %v1452
        %v1547 = vmax.f32 %v1356, %v1457
        %v1548 = vmax.f32 %v1361, %v1460
        %v1549 = vmax.f32 %v1364, %v1465
        %v1550 = vmax.f32 %v1369, %v1468
        %v1551 = vmax.f32 %v1372, %v1473
        %v1552 = vmax.f32 %v1377, %v1476
        %v1553 = vmax.f32 %v1380, %v1481
        %v1554 = vmax.f32 %v1385, %v1484
        %v1555 = vmax.f32 %v1388, %v1489
        %v1556 = vmax.f32 %v1393, %v1492
        %v1557 = vmax.f32 %v1396, %v1497
        %v1558 = vmax.f32 %v1401, %v1500
        %v1559 = vmax.f32 %v1404, %v1505
        %v1560 = vmax.f32 %v1409, %v1508
        %v1561 = vmax.f32 %v1511, %v1536
        %v1562 = vmax.f32 %v1512, %v1537
        %v1563 = vmax.f32 %v1513, %v1538
        %v1564 = vmax.f32 %v1514, %v1539
        %v1565 = vmax.f32 %v1515, %v1540
        %v1566 = vmax.f32 %v1516, %v1541
        %v1567 = vmax.f32 %v1517, %v1542
        %v1568 = vmax.f32 %v1518, %v1543
        %v1569 = vmax.f32 %v1519, %v1544
        %v1570 = vmax.f32 %v1520, %v1545
        %v1571 = vmax.f32 %v1521, %v1546
        %v1572 = vmax.f32 %v1522, %v1547
        %v1573 = vmax.f32 %v1523, %v1548
        %v1574 = vmax.f32 %v1524, %v1549
        %v1575 = vmax.f32 %v1525, %v1550
        %v1576 = vmax.f32 %v1526, %v1551
        %v1577 = vmax.f32 %v1527, %v1552
        %v1578 = vmax.f32 %v1528, %v1553
        %v1579 = vmax.f32 %v1529, %v1554
        %v1580 = vmax.f32 %v1530, %v1555
        %v1581 = vmax.f32 %v1531, %v1556
        %v1582 = vmax.f32 %v1532, %v1557
        %v1583 = vmax.f32 %v1533, %v1558
        %v1584 = vmax.f32 %v1534, %v1559
        %v1585 = vmax.f32 %v1535, %v1560
        %v1586 = vld [vmem:[%s2] sm:$0x1]
        %v1588 = vlaneseq
        %v1589 = vshrl.u32 %v1588, 7
        %v1590 = vsub.s32 0, %v1589
        %v1591 = vrot.slane %v1586, %v1590
        %v1593 = vadd.f32 %v1561, %v1591
        %v1594 = vadd.f32 %v1562, %v1591
        %v1595 = vadd.f32 %v1563, %v1591
        %v1596 = vadd.f32 %v1564, %v1591
        %v1597 = vadd.f32 %v1565, %v1591
        %v1598 = vadd.f32 %v1566, %v1591
        %v1599 = vadd.f32 %v1567, %v1591
        %v1600 = vadd.f32 %v1568, %v1591
        %v1601 = vadd.f32 %v1569, %v1591
        %v1602 = vadd.f32 %v1570, %v1591
        %v1603 = vadd.f32 %v1571, %v1591
        %v1604 = vadd.f32 %v1572, %v1591
        %v1605 = vadd.f32 %v1573, %v1591
        %v1606 = vadd.f32 %v1574, %v1591
        %v1607 = vadd.f32 %v1575, %v1591
        %v1608 = vadd.f32 %v1576, %v1591
        %v1609 = vadd.f32 %v1577, %v1591
        %v1610 = vadd.f32 %v1578, %v1591
        %v1611 = vadd.f32 %v1579, %v1591
        %v1612 = vadd.f32 %v1580, %v1591
        %v1613 = vadd.f32 %v1581, %v1591
        %v1614 = vadd.f32 %v1582, %v1591
        %v1615 = vadd.f32 %v1583, %v1591
        %v1616 = vadd.f32 %v1584, %v1591
        %v1617 = vadd.f32 %v1585, %v1591
        %v1618 = vmax.f32 %v1593, 0.0
        %v1619 = vmax.f32 %v1594, 0.0
        %v1620 = vmax.f32 %v1595, 0.0
        %v1621 = vmax.f32 %v1596, 0.0
        %v1622 = vmax.f32 %v1597, 0.0
        %v1623 = vmax.f32 %v1598, 0.0
        %v1624 = vmax.f32 %v1599, 0.0
        %v1625 = vmax.f32 %v1600, 0.0
        %v1626 = vmax.f32 %v1601, 0.0
        %v1627 = vmax.f32 %v1602, 0.0
        %v1628 = vmax.f32 %v1603, 0.0
        %v1629 = vmax.f32 %v1604, 0.0
        %v1630 = vmax.f32 %v1605, 0.0
        %v1631 = vmax.f32 %v1606, 0.0
        %v1632 = vmax.f32 %v1607, 0.0
        %v1633 = vmax.f32 %v1608, 0.0
        %v1634 = vmax.f32 %v1609, 0.0
        %v1635 = vmax.f32 %v1610, 0.0
        %v1636 = vmax.f32 %v1611, 0.0
        %v1637 = vmax.f32 %v1612, 0.0
        %v1638 = vmax.f32 %v1613, 0.0
        %v1639 = vmax.f32 %v1614, 0.0
        %v1640 = vmax.f32 %v1615, 0.0
        %v1641 = vmax.f32 %v1616, 0.0
        %v1642 = vmax.f32 %v1617, 0.0
        %v1643 = vpack.c.bf16 %v1619, %v1618
        %v1644 = vpack.c.bf16 %v1621, %v1620
        %v1645 = vpack.c.bf16 %v1623, %v1622
        %v1646 = vpack.c.bf16 %v1625, %v1624
        %v1647 = vpack.c.bf16 %v1627, %v1626
        %v1648 = vpack.c.bf16 %v1629, %v1628
        %v1649 = vpack.c.bf16 %v1631, %v1630
        %v1650 = vpack.c.bf16 %v1633, %v1632
        %v1651 = vpack.c.bf16 %v1635, %v1634
        %v1652 = vpack.c.bf16 %v1637, %v1636
        %v1653 = vpack.c.bf16 %v1639, %v1638
        %v1654 = vpack.c.bf16 %v1641, %v1640
        %v1655 = vpack.c.bf16 %v1642, %v1642
        %v1669 = vunpack.c.l.b16 %v1643
        %v1670 = vunpack.c.h.b16 %v1643
        %v1671 = vunpack.c.l.b16 %v1644
        %v1672 = vunpack.c.h.b16 %v1644
        %v1673 = vunpack.c.l.b16 %v1645
        %v1674 = vunpack.c.h.b16 %v1645
        %v1675 = vunpack.c.l.b16 %v1646
        %v1676 = vunpack.c.h.b16 %v1646
        %v1677 = vunpack.c.l.b16 %v1647
        %v1678 = vunpack.c.h.b16 %v1647
        %v1679 = vunpack.c.l.b16 %v1648
        %v1680 = vunpack.c.h.b16 %v1648
        %v1681 = vunpack.c.l.b16 %v1649
        %v1682 = vunpack.c.h.b16 %v1649
        %v1683 = vunpack.c.l.b16 %v1650
        %v1684 = vunpack.c.h.b16 %v1650
        %v1685 = vunpack.c.l.b16 %v1651
        %v1686 = vunpack.c.h.b16 %v1651
        %v1687 = vunpack.c.l.b16 %v1652
        %v1688 = vunpack.c.h.b16 %v1652
        %v1689 = vunpack.c.l.b16 %v1653
        %v1690 = vunpack.c.h.b16 %v1653
        %v1691 = vunpack.c.l.b16 %v1654
        %v1692 = vunpack.c.h.b16 %v1654
        %v1693 = vunpack.c.l.b16 %v1655
        %v1694 = vpack.c.b16 %v1669, %v1669
        %v1695 = vpack.c.b16 %v1670, %v1670
        %v1696 = vpack.c.b16 %v1671, %v1671
        %v1697 = vpack.c.b16 %v1672, %v1672
        %v1698 = vpack.c.b16 %v1673, %v1673
        %v1699 = vpack.c.b16 %v1674, %v1674
        %v1700 = vpack.c.b16 %v1675, %v1675
        %v1701 = vpack.c.b16 %v1676, %v1676
        %v1702 = vpack.c.b16 %v1677, %v1677
        %v1703 = vpack.c.b16 %v1678, %v1678
        %v1704 = vpack.c.b16 %v1679, %v1679
        %v1705 = vpack.c.b16 %v1680, %v1680
        %v1706 = vpack.c.b16 %v1681, %v1681
        %v1707 = vpack.c.b16 %v1682, %v1682
        %v1708 = vpack.c.b16 %v1683, %v1683
        %v1709 = vpack.c.b16 %v1684, %v1684
        %v1710 = vpack.c.b16 %v1685, %v1685
        %v1711 = vpack.c.b16 %v1686, %v1686
        %v1712 = vpack.c.b16 %v1687, %v1687
        %v1713 = vpack.c.b16 %v1688, %v1688
        %v1714 = vpack.c.b16 %v1689, %v1689
        %v1715 = vpack.c.b16 %v1690, %v1690
        %v1716 = vpack.c.b16 %v1691, %v1691
        %v1717 = vpack.c.b16 %v1692, %v1692
        %v1718 = vpack.c.b16 %v1693, %v1693
        %1744 = vst [vmem:[%s611] sm:$0xf] %v1694
        %1745 = vst [vmem:[%s611 + $0x4] sm:$0xf] %v1695
        %1746 = vst [vmem:[%s611 + $0x8] sm:$0xf] %v1696
        %1747 = vst [vmem:[%s611 + $0xc] sm:$0xf] %v1697
        %1748 = vst [vmem:[%s611 + $0x10] sm:$0xf] %v1698
        %1749 = vst [vmem:[%s611 + $0x14] sm:$0xf] %v1699
        %1750 = vst [vmem:[%s611 + $0x18] sm:$0xf] %v1700
        %1751 = vst [vmem:[%s611 + $0x1c] sm:$0xf] %v1701
        %1752 = vst [vmem:[%s611 + $0x20] sm:$0xf] %v1702
        %1753 = vst [vmem:[%s611 + $0x24] sm:$0xf] %v1703
        %1754 = vst [vmem:[%s611 + $0x28] sm:$0xf] %v1704
        %1755 = vst [vmem:[%s611 + $0x2c] sm:$0xf] %v1705
        %1756 = vst [vmem:[%s611 + $0x30] sm:$0xf] %v1706
        %1757 = vst [vmem:[%s611 + $0x34] sm:$0xf] %v1707
        %1758 = vst [vmem:[%s611 + $0x38] sm:$0xf] %v1708
        %1759 = vst [vmem:[%s611 + $0x3c] sm:$0xf] %v1709
        %1760 = vst [vmem:[%s611 + $0x40] sm:$0xf] %v1710
        %1761 = vst [vmem:[%s611 + $0x44] sm:$0xf] %v1711
        %1762 = vst [vmem:[%s611 + $0x48] sm:$0xf] %v1712
        %1763 = vst [vmem:[%s611 + $0x4c] sm:$0xf] %v1713
        %1764 = vst [vmem:[%s611 + $0x50] sm:$0xf] %v1714
        %1765 = vst [vmem:[%s611 + $0x54] sm:$0xf] %v1715
        %1766 = vst [vmem:[%s611 + $0x58] sm:$0xf] %v1716
        %1767 = vst [vmem:[%s611 + $0x5c] sm:$0xf] %v1717
        %1768 = vst [vmem:[%s611 + $0x60] sm:$0xf] %v1718
        %s1769 = smul.u32 25, %s14
        %p1770 = scmp.lt.s32.totalorder %s1769, 49
        %s1771 = scalar_select %p1770, %s1769, 49
        %s1772 = smul.addr %s1771, 4
        %s1773 = scalar_lea.vmem %s3, %s1772
        // Predicated region
        $region74: #{cnn_forward.3} parent=68 // pred_check
          %p1774 = pneg %p100
        $region75: #{cnn_forward.3} parent=68 // pred_check_branch
          %1776 = sbr.rel (%p1774) target = $region77
        $region76: #{cnn_forward.3} parent=68 // pred_region
          %s1777 = smul.u32 25, %s14
        $region77: #{cnn_forward.3} parent=68 // pred_fallthru
          _
      $region69: #{cnn_forward.3} parent=5 // pred_fallthru
        _
      %p1778 = scmp.le.s32.totalorder 2, %s9
      // Predicated region
      $region78: #{cnn_forward.3} parent=5 // pred_check
        %p1779 = pneg %p1778
      $region79: #{cnn_forward.3} parent=5 // pred_check_branch
        %1781 = sbr.rel (%p1779) target = $region81
      $region80: #{cnn_forward.3} parent=5 // pred_region
        %s1782 = ssub.s32 %s9, 2
        // Predicated region
        $region82: #{cnn_forward.3} parent=80 // pred_check
          %p1783 = pneg %p106
        $region83: #{cnn_forward.3} parent=80 // pred_check_branch
          %1785 = sbr.rel (%p1783) target = $region85
        $region84: #{cnn_forward.3} parent=80 // pred_region
          %s1786 = smul.u32 25, %s15
          %p1787 = scmp.lt.s32.totalorder %s1786, 49
          %s1788 = scalar_select %p1787, %s1786, 49
          %s1789 = smul.addr %s1788, 4
          %s1790 = scalar_lea.vmem %s3, %s1789
        $region85: #{cnn_forward.3} parent=80 // pred_fallthru
          _
      $region81: #{cnn_forward.3} parent=5 // pred_fallthru
        _
    $region6: #{cnn_forward.3} parent=1 // loop_footer
      %s13 = sadd.s32 1, %s9
    $region7: #{cnn_forward.3} parent=1 // loop_footer_branch
      %8 = sbr.rel target = $region3
    $region8: #{cnn_forward.3} parent=1 // loop_exit
      _

// kernel: cnn_forward.4
$region0: #{cnn_forward.4}
  #allocation0 [shape = 'u32[]', space=smem, size = 0x4, offset = 0x4, fixed_abs, tag = 'smem constant byte address 0x4 - core index']
  #allocation1 [shape = 'u32[144,128]{1,0:T(1,128)}', space=vmem, size = 0x12000, scoped, tag = 'internal scratch']
  %s0 = inlined_call_operand.vmem [shape: bf16[4,64,256], index: 0, kind: input, shape index: {}]
  %s1 = inlined_call_operand.vmem [shape: bf16[256,128], index: 1, kind: input, shape index: {}]
  %s2 = inlined_call_operand.vmem [shape: f32[1,128], index: 2, kind: input, shape index: {}]
  %s3 = inlined_call_operand.vmem [shape: bf16[64,128], index: 3, kind: output, shape index: {}]
  %s4 = sld [smem:[#allocation0]]
  $region83: #{cnn_forward.4} parent=0
    _
  %s6 = ssub.s32 1, %s4
  %s7 = scalar_select 0, %s6, %s4
  $region1: #{cnn_forward.4} parent=0
    #allocation2 [shape = 'u8[131072]{0}', space=vmem, size = 0x20000, scoped, tag = 'input window, operand 0']
    loop: start=0, step=1, limit=4
    $region2: #{cnn_forward.4} parent=1 // loop_pre_header
      _
    $region3: #{cnn_forward.4} parent=1 // loop_header
      %s9 = sphi 0, %s13
      %p10 = scmp.ge.s32.totalorder %s9, 4
      %s19 = sphi 0, %s21
      %s22 = sphi 0, %s19
      %s23 = sphi 0, %s22
      %s39 = sphi 0, %s23
      %s43 = sphi 0, %s43
      %s45 = sphi 0, %s43
      %s46 = sphi 0, %s45
      %s60 = sphi 0, %s46
      %s64 = sphi 0, %s64
      %s66 = sphi 0, %s64
      %s67 = sphi 0, %s66
      %s81 = sphi 0, %s67
      %s87 = sphi 0, %s89
      %s90 = sphi 0, %s87
      %s91 = sphi 0, %s90
      %s107 = sphi 0, %s91
    $region4: #{cnn_forward.4} parent=1 // loop_header_branch
      %12 = sbr.rel (%p10) target = $region8
    $region5: #{cnn_forward.4} parent=1 // loop_body
      %s14 = ssub.s32 %s9, 1
      %s15 = ssub.s32 %s9, 2
      %s16 = sadd.s32 %s9, 1
      %s17 = ssub.s32 %s9, %s16
      %p18 = scmp.eq.s32.totalorder %s17, 0
      %s20 = sadd.s32 %s19, 1
      %s21 = scalar_select %p18, %s19, %s20
      %p24 = pneg %p18
      %p25 = scmp.eq.s32.totalorder %s9, 1
      %p26 = por %p24, %p25
      %p27 = scmp.ne.s32.totalorder %s19, %s22
      %p28 = scmp.eq.s32.totalorder %s9, 0
      %p29 = por %p27, %p28
      %p30 = scmp.ne.s32.totalorder %s19, %s22
      %p31 = scmp.eq.s32.totalorder %s14, 1
      %p32 = por %p30, %p31
      %p33 = scmp.ne.s32.totalorder %s22, %s23
      %p34 = scmp.eq.s32.totalorder %s14, 0
      %p35 = por %p33, %p34
      %p36 = scmp.ne.s32.totalorder %s22, %s23
      %p37 = scmp.eq.s32.totalorder %s15, 1
      %p38 = por %p36, %p37
      %p40 = scmp.ne.s32.totalorder %s23, %s39
      %p41 = scmp.eq.s32.totalorder %s15, 0
      %p42 = por %p40, %p41
      %s44 = sadd.s32 %s43, 1
      %p47 = scmp.eq.s32.totalorder %s9, 1
      %p48 = scmp.ne.s32.totalorder %s43, %s45
      %p49 = scmp.eq.s32.totalorder %s9, 0
      %p50 = por %p48, %p49
      %p51 = scmp.ne.s32.totalorder %s43, %s45
      %p52 = scmp.eq.s32.totalorder %s14, 1
      %p53 = por %p51, %p52
      %p54 = scmp.ne.s32.totalorder %s45, %s46
      %p55 = scmp.eq.s32.totalorder %s14, 0
      %p56 = por %p54, %p55
      %p57 = scmp.ne.s32.totalorder %s45, %s46
      %p58 = scmp.eq.s32.totalorder %s15, 1
      %p59 = por %p57, %p58
      %p61 = scmp.ne.s32.totalorder %s46, %s60
      %p62 = scmp.eq.s32.totalorder %s15, 0
      %p63 = por %p61, %p62
      %s65 = sadd.s32 %s64, 1
      %p68 = scmp.eq.s32.totalorder %s9, 1
      %p69 = scmp.ne.s32.totalorder %s64, %s66
      %p70 = scmp.eq.s32.totalorder %s9, 0
      %p71 = por %p69, %p70
      %p72 = scmp.ne.s32.totalorder %s64, %s66
      %p73 = scmp.eq.s32.totalorder %s14, 1
      %p74 = por %p72, %p73
      %p75 = scmp.ne.s32.totalorder %s66, %s67
      %p76 = scmp.eq.s32.totalorder %s14, 0
      %p77 = por %p75, %p76
      %p78 = scmp.ne.s32.totalorder %s66, %s67
      %p79 = scmp.eq.s32.totalorder %s15, 1
      %p80 = por %p78, %p79
      %p82 = scmp.ne.s32.totalorder %s67, %s81
      %p83 = scmp.eq.s32.totalorder %s15, 0
      %p84 = por %p82, %p83
      %s85 = ssub.s32 %s9, %s16
      %p86 = scmp.eq.s32.totalorder %s85, 0
      %s88 = sadd.s32 %s87, 1
      %s89 = scalar_select %p86, %s87, %s88
      %p92 = pneg %p86
      %p93 = scmp.eq.s32.totalorder %s9, 1
      %p94 = por %p92, %p93
      %p95 = scmp.ne.s32.totalorder %s87, %s90
      %p96 = scmp.eq.s32.totalorder %s9, 0
      %p97 = por %p95, %p96
      %p98 = scmp.ne.s32.totalorder %s87, %s90
      %p99 = scmp.eq.s32.totalorder %s14, 1
      %p100 = por %p98, %p99
      %p101 = scmp.ne.s32.totalorder %s90, %s91
      %p102 = scmp.eq.s32.totalorder %s14, 0
      %p103 = por %p101, %p102
      %p104 = scmp.ne.s32.totalorder %s90, %s91
      %p105 = scmp.eq.s32.totalorder %s15, 1
      %p106 = por %p104, %p105
      %p108 = scmp.ne.s32.totalorder %s91, %s107
      %p109 = scmp.eq.s32.totalorder %s15, 0
      %p110 = por %p108, %p109
      %p111 = scmp.le.s32.totalorder 1, %s9
      %p112 = scmp.lt.s32.totalorder %s9, 3
      %p113 = pnand %p111, %p112
      %p114 = pneg %p113
      // Predicated region
      $region9: #{cnn_forward.4} parent=5 // pred_check
        _
      $region10: #{cnn_forward.4} parent=5 // pred_check_branch
        %116 = sbr.rel (%p113) target = $region12
      $region11: #{cnn_forward.4} parent=5 // pred_region
        %s117 = ssub.s32 %s9, 1
        // Predicated region
        $region13: #{cnn_forward.4} parent=11 // pred_check
          %p118 = pneg %p56
        $region14: #{cnn_forward.4} parent=11 // pred_check_branch
          %120 = sbr.rel (%p118) target = $region16
        $region15: #{cnn_forward.4} parent=11 // pred_region
          _
        $region16: #{cnn_forward.4} parent=11 // pred_fallthru
          _
        // Predicated region
        $region17: #{cnn_forward.4} parent=11 // pred_check
          %p121 = pneg %p77
        $region18: #{cnn_forward.4} parent=11 // pred_check_branch
          %123 = sbr.rel (%p121) target = $region20
        $region19: #{cnn_forward.4} parent=11 // pred_region
          _
        $region20: #{cnn_forward.4} parent=11 // pred_fallthru
          _
      $region12: #{cnn_forward.4} parent=5 // pred_fallthru
        _
      %p124 = scmp.lt.s32.totalorder %s9, 2
      // Predicated region
      $region21: #{cnn_forward.4} parent=5 // pred_check
        %p125 = pneg %p124
      $region22: #{cnn_forward.4} parent=5 // pred_check_branch
        %127 = sbr.rel (%p125) target = $region24
      $region23: #{cnn_forward.4} parent=5 // pred_region
        // Predicated region
        $region25: #{cnn_forward.4} parent=23 // pred_check
          %p128 = pneg %p29
        $region26: #{cnn_forward.4} parent=23 // pred_check_branch
          %130 = sbr.rel (%p128) target = $region28
        $region27: #{cnn_forward.4} parent=23 // pred_region
          %s131 = sand.u32 %s19, 1
          %s132 = sand.u32 %s19, 1
          %s133 = smul.addr %s132, 128
          %s134 = scalar_lea.vmem [#allocation2], %s133
          %s135 = smul.u32 4, %s9
          %s136 = smul.addr %s135, 2
          %s137 = smul.addr %s136, 4
          %s138 = scalar_lea.vmem %s0, %s137
          // Predicated region
          $region29: #{cnn_forward.4} parent=27 // pred_check
            _
          $region30: #{cnn_forward.4} parent=27 // pred_check_branch
            %140 = sbr.rel (0) target = $region32
          $region31: #{cnn_forward.4} parent=27 // pred_region
            // Predicated region
            $region33: #{cnn_forward.4} parent=31 // pred_check
              _
            $region34: #{cnn_forward.4} parent=31 // pred_check_branch
              %142 = sbr.rel (0) target = $region36
            $region35: #{cnn_forward.4} parent=31 // pred_region
              // Predicated region
              $region48: #{cnn_forward.4} parent=35 // pred_check
                _
              $region49: #{cnn_forward.4} parent=35 // pred_check_branch
                %188 = sbr.rel (0) target = $region51
              $region50: #{cnn_forward.4} parent=35 // pred_region
                loop: start=0, step=1, limit=1
                $region52: #{cnn_forward.4} parent=50 // loop_pre_header
                  _
                $region53: #{cnn_forward.4} parent=50 // loop_header
                  %s190 = sphi 0, %s194
                  %p191 = scmp.ge.s32.totalorder %s190, 1
                  %s195 = sphi %s138, %s138
                  %s196 = sphi %s134, %s134
                $region54: #{cnn_forward.4} parent=50 // loop_header_branch
                  %193 = sbr.rel (%p191) target = $region58
                $region55: #{cnn_forward.4} parent=50 // loop_body
                  %v197 = vld [vmem:[%s195] sm:$0xff]
                  %198 = vst [vmem:[%s196] sm:$0xff] %v197
                  %v199 = vld [vmem:[%s195 + $0x8] sm:$0xff]
                  %200 = vst [vmem:[%s196 + $0x8] sm:$0xff] %v199
                  %v201 = vld [vmem:[%s195 + $0x10] sm:$0xff]
                  %202 = vst [vmem:[%s196 + $0x10] sm:$0xff] %v201
                  %v203 = vld [vmem:[%s195 + $0x18] sm:$0xff]
                  %204 = vst [vmem:[%s196 + $0x18] sm:$0xff] %v203
                  %v205 = vld [vmem:[%s195 + $0x40] sm:$0xff]
                  %206 = vst [vmem:[%s196 + $0x20] sm:$0xff] %v205
                  %v207 = vld [vmem:[%s195 + $0x48] sm:$0xff]
                  %208 = vst [vmem:[%s196 + $0x28] sm:$0xff] %v207
                  %v209 = vld [vmem:[%s195 + $0x50] sm:$0xff]
                  %210 = vst [vmem:[%s196 + $0x30] sm:$0xff] %v209
                  %v211 = vld [vmem:[%s195 + $0x58] sm:$0xff]
                  %212 = vst [vmem:[%s196 + $0x38] sm:$0xff] %v211
                  %v213 = vld [vmem:[%s195 + $0x80] sm:$0xff]
                  %214 = vst [vmem:[%s196 + $0x40] sm:$0xff] %v213
                  %v215 = vld [vmem:[%s195 + $0x88] sm:$0xff]
                  %216 = vst [vmem:[%s196 + $0x48] sm:$0xff] %v215
                  %v217 = vld [vmem:[%s195 + $0x90] sm:$0xff]
                  %218 = vst [vmem:[%s196 + $0x50] sm:$0xff] %v217
                  %v219 = vld [vmem:[%s195 + $0x98] sm:$0xff]
                  %220 = vst [vmem:[%s196 + $0x58] sm:$0xff] %v219
                  %v221 = vld [vmem:[%s195 + $0xc0] sm:$0xff]
                  %222 = vst [vmem:[%s196 + $0x60] sm:$0xff] %v221
                  %v223 = vld [vmem:[%s195 + $0xc8] sm:$0xff]
                  %224 = vst [vmem:[%s196 + $0x68] sm:$0xff] %v223
                  %v225 = vld [vmem:[%s195 + $0xd0] sm:$0xff]
                  %226 = vst [vmem:[%s196 + $0x70] sm:$0xff] %v225
                  %v227 = vld [vmem:[%s195 + $0xd8] sm:$0xff]
                  %228 = vst [vmem:[%s196 + $0x78] sm:$0xff] %v227
                $region56: #{cnn_forward.4} parent=50 // loop_footer
                  %s194 = sadd.s32 1, %s190
                $region57: #{cnn_forward.4} parent=50 // loop_footer_branch
                  %189 = sbr.rel target = $region53
                $region58: #{cnn_forward.4} parent=50 // loop_exit
                  _
              $region51: #{cnn_forward.4} parent=35 // pred_fallthru
                _
              // Predicated region
              $region59: #{cnn_forward.4} parent=35 // pred_check
                _
              $region60: #{cnn_forward.4} parent=35 // pred_check_branch
                %230 = sbr.rel target = $region62
              $region61: #{cnn_forward.4} parent=35 // pred_region
                _
              $region62: #{cnn_forward.4} parent=35 // pred_fallthru
                _
            $region36: #{cnn_forward.4} parent=31 // pred_fallthru
              _
            // Predicated region
            $region37: #{cnn_forward.4} parent=31 // pred_check
              _
            $region38: #{cnn_forward.4} parent=31 // pred_check_branch
              %144 = sbr.rel target = $region40
            $region39: #{cnn_forward.4} parent=31 // pred_region
              %s146 = ssub.s32 256, 1
              loop: start=0, step=1, limit=1
              $region41: #{cnn_forward.4} parent=39 // loop_pre_header
                _
              $region42: #{cnn_forward.4} parent=39 // loop_header
                %s148 = sphi 0, %s152
                %p149 = scmp.ge.s32.totalorder %s148, 1
                %s153 = sphi %s138, %s138
                %s154 = sphi %s134, %s134
              $region43: #{cnn_forward.4} parent=39 // loop_header_branch
                %151 = sbr.rel (%p149) target = $region47
              $region44: #{cnn_forward.4} parent=39 // loop_body
                %v155 = vld [vmem:[%s153] sm:%s146]
                %156 = vst [vmem:[%s154] sm:%s146] %v155
                %v157 = vld [vmem:[%s153 + $0x8] sm:%s146]
                %158 = vst [vmem:[%s154 + $0x8] sm:%s146] %v157
                %v159 = vld [vmem:[%s153 + $0x10] sm:%s146]
                %160 = vst [vmem:[%s154 + $0x10] sm:%s146] %v159
                %v161 = vld [vmem:[%s153 + $0x18] sm:%s146]
                %162 = vst [vmem:[%s154 + $0x18] sm:%s146] %v161
                %v163 = vld [vmem:[%s153 + $0x40] sm:%s146]
                %164 = vst [vmem:[%s154 + $0x20] sm:%s146] %v163
                %v165 = vld [vmem:[%s153 + $0x48] sm:%s146]
                %166 = vst [vmem:[%s154 + $0x28] sm:%s146] %v165
                %v167 = vld [vmem:[%s153 + $0x50] sm:%s146]
                %168 = vst [vmem:[%s154 + $0x30] sm:%s146] %v167
                %v169 = vld [vmem:[%s153 + $0x58] sm:%s146]
                %170 = vst [vmem:[%s154 + $0x38] sm:%s146] %v169
                %v171 = vld [vmem:[%s153 + $0x80] sm:%s146]
                %172 = vst [vmem:[%s154 + $0x40] sm:%s146] %v171
                %v173 = vld [vmem:[%s153 + $0x88] sm:%s146]
                %174 = vst [vmem:[%s154 + $0x48] sm:%s146] %v173
                %v175 = vld [vmem:[%s153 + $0x90] sm:%s146]
                %176 = vst [vmem:[%s154 + $0x50] sm:%s146] %v175
                %v177 = vld [vmem:[%s153 + $0x98] sm:%s146]
                %178 = vst [vmem:[%s154 + $0x58] sm:%s146] %v177
                %v179 = vld [vmem:[%s153 + $0xc0] sm:%s146]
                %180 = vst [vmem:[%s154 + $0x60] sm:%s146] %v179
                %v181 = vld [vmem:[%s153 + $0xc8] sm:%s146]
                %182 = vst [vmem:[%s154 + $0x68] sm:%s146] %v181
                %v183 = vld [vmem:[%s153 + $0xd0] sm:%s146]
                %184 = vst [vmem:[%s154 + $0x70] sm:%s146] %v183
                %v185 = vld [vmem:[%s153 + $0xd8] sm:%s146]
                %186 = vst [vmem:[%s154 + $0x78] sm:%s146] %v185
              $region45: #{cnn_forward.4} parent=39 // loop_footer
                %s152 = sadd.s32 1, %s148
              $region46: #{cnn_forward.4} parent=39 // loop_footer_branch
                %147 = sbr.rel target = $region42
              $region47: #{cnn_forward.4} parent=39 // loop_exit
                _
            $region40: #{cnn_forward.4} parent=31 // pred_fallthru
              _
          $region32: #{cnn_forward.4} parent=27 // pred_fallthru
            _
          %231 = vnop
        $region28: #{cnn_forward.4} parent=23 // pred_fallthru
          _
      $region24: #{cnn_forward.4} parent=5 // pred_fallthru
        _
      %p232 = scmp.le.s32.totalorder 1, %s9
      %p233 = scmp.lt.s32.totalorder %s9, 3
      %p234 = pnand %p232, %p233
      %p235 = pneg %p234
      // Predicated region
      $region63: #{cnn_forward.4} parent=5 // pred_check
        _
      $region64: #{cnn_forward.4} parent=5 // pred_check_branch
        %237 = sbr.rel (%p234) target = $region66
      $region65: #{cnn_forward.4} parent=5 // pred_region
        %s238 = ssub.s32 %s9, 1
        %s239 = sand.u32 %s22, 1
        %s240 = sand.u32 %s22, 1
        %s241 = smul.addr %s240, 128
        %s242 = scalar_lea.vmem [#allocation2], %s241
        // Predicated region
        $region67: #{cnn_forward.4} parent=65 // pred_check
          %p243 = pneg %p35
        $region68: #{cnn_forward.4} parent=65 // pred_check_branch
          %245 = sbr.rel (%p243) target = $region70
        $region69: #{cnn_forward.4} parent=65 // pred_region
          _
        $region70: #{cnn_forward.4} parent=65 // pred_fallthru
          _
        %s246 = sand.u32 %s22, 1
        %s247 = sand.u32 %s22, 1
        %s248 = smul.addr %s247, 128
        %s249 = scalar_lea.vmem [#allocation2], %s248
        %p250 = pneg %p35
        %p251 = pneg %p32
        %p252 = pneg %p56
        %p253 = pneg %p53
        %p254 = pneg %p77
        %p255 = pneg %p74
        %p256 = pneg %p103
        %p257 = pneg %p100
        %s258 = smul.u32 4, %s14
        %p259 = scmp.lt.s32.totalorder %s258, 7
        %s260 = scalar_select %p259, %s258, 7
        %s261 = smul.addr %s260, 4
        %s262 = scalar_lea.vmem %s3, %s261
        %s263 = smul.u32 4, %s14
        %s264 = smul.u32 4, %s14
        %p265 = scmp.lt.s32.totalorder %s264, 7
        %s266 = scalar_select %p265, %s264, 7
        %s267 = smul.addr %s266, 4
        %s268 = scalar_lea.vmem %s3, %s267
        %s269 = smul.u32 4, %s14
        %v271 = vld [vmem:[%s242] sm:$0xff]
        %v272 = vld [vmem:[%s242 + $0x8] sm:$0xff]
        %v273 = vld [vmem:[%s242 + $0x10] sm:$0xff]
        %v274 = vld [vmem:[%s242 + $0x18] sm:$0xff]
        %v275 = vld [vmem:[%s242 + $0x20] sm:$0xff]
        %v276 = vld [vmem:[%s242 + $0x28] sm:$0xff]
        %v277 = vld [vmem:[%s242 + $0x30] sm:$0xff]
        %v278 = vld [vmem:[%s242 + $0x38] sm:$0xff]
        %v279 = vld [vmem:[%s242 + $0x40] sm:$0xff]
        %v280 = vld [vmem:[%s242 + $0x48] sm:$0xff]
        %v281 = vld [vmem:[%s242 + $0x50] sm:$0xff]
        %v282 = vld [vmem:[%s242 + $0x58] sm:$0xff]
        %v283 = vld [vmem:[%s242 + $0x60] sm:$0xff]
        %v284 = vld [vmem:[%s242 + $0x68] sm:$0xff]
        %v285 = vld [vmem:[%s242 + $0x70] sm:$0xff]
        %v286 = vld [vmem:[%s242 + $0x78] sm:$0xff]
        %v287 = vld [vmem:[%s1] sm:$0xf]
        %v288 = vld [vmem:[%s1 + $0x4] sm:$0xf]
        %v289 = vld [vmem:[%s1 + $0x8] sm:$0xf]
        %v290 = vld [vmem:[%s1 + $0xc] sm:$0xf]
        %v291 = vld [vmem:[%s1 + $0x10] sm:$0xf]
        %v292 = vld [vmem:[%s1 + $0x14] sm:$0xf]
        %v293 = vld [vmem:[%s1 + $0x18] sm:$0xf]
        %v294 = vld [vmem:[%s1 + $0x1c] sm:$0xf]
        %v295 = vld [vmem:[%s1 + $0x20] sm:$0xf]
        %v296 = vld [vmem:[%s1 + $0x24] sm:$0xf]
        %v297 = vld [vmem:[%s1 + $0x28] sm:$0xf]
        %v298 = vld [vmem:[%s1 + $0x2c] sm:$0xf]
        %v299 = vld [vmem:[%s1 + $0x30] sm:$0xf]
        %v300 = vld [vmem:[%s1 + $0x34] sm:$0xf]
        %v301 = vld [vmem:[%s1 + $0x38] sm:$0xf]
        %v302 = vld [vmem:[%s1 + $0x3c] sm:$0xf]
        %v303 = vld [vmem:[%s1 + $0x40] sm:$0xf]
        %v304 = vld [vmem:[%s1 + $0x44] sm:$0xf]
        %v305 = vld [vmem:[%s1 + $0x48] sm:$0xf]
        %v306 = vld [vmem:[%s1 + $0x4c] sm:$0xf]
        %v307 = vld [vmem:[%s1 + $0x50] sm:$0xf]
        %v308 = vld [vmem:[%s1 + $0x54] sm:$0xf]
        %v309 = vld [vmem:[%s1 + $0x58] sm:$0xf]
        %v310 = vld [vmem:[%s1 + $0x5c] sm:$0xf]
        %v311 = vld [vmem:[%s1 + $0x60] sm:$0xf]
        %v312 = vld [vmem:[%s1 + $0x64] sm:$0xf]
        %v313 = vld [vmem:[%s1 + $0x68] sm:$0xf]
        %v314 = vld [vmem:[%s1 + $0x6c] sm:$0xf]
        %v315 = vld [vmem:[%s1 + $0x70] sm:$0xf]
        %v316 = vld [vmem:[%s1 + $0x74] sm:$0xf]
        %v317 = vld [vmem:[%s1 + $0x78] sm:$0xf]
        %v318 = vld [vmem:[%s1 + $0x7c] sm:$0xf]
        %v335 = vunpack.c.l.b16 %v271
        %v336 = vunpack.c.h.b16 %v271
        %v337 = vunpack.c.l.b16 %v272
        %v338 = vunpack.c.h.b16 %v272
        %v339 = vunpack.c.l.b16 %v273
        %v340 = vunpack.c.h.b16 %v273
        %v341 = vunpack.c.l.b16 %v274
        %v342 = vunpack.c.h.b16 %v274
        %v343 = vunpack.c.l.b16 %v275
        %v344 = vunpack.c.h.b16 %v275
        %v345 = vunpack.c.l.b16 %v276
        %v346 = vunpack.c.h.b16 %v276
        %v347 = vunpack.c.l.b16 %v277
        %v348 = vunpack.c.h.b16 %v277
        %v349 = vunpack.c.l.b16 %v278
        %v350 = vunpack.c.h.b16 %v278
        %v351 = vunpack.c.l.b16 %v279
        %v352 = vunpack.c.h.b16 %v279
        %v353 = vunpack.c.l.b16 %v280
        %v354 = vunpack.c.h.b16 %v280
        %v355 = vunpack.c.l.b16 %v281
        %v356 = vunpack.c.h.b16 %v281
        %v357 = vunpack.c.l.b16 %v282
        %v358 = vunpack.c.h.b16 %v282
        %v359 = vunpack.c.l.b16 %v283
        %v360 = vunpack.c.h.b16 %v283
        %v361 = vunpack.c.l.b16 %v284
        %v362 = vunpack.c.h.b16 %v284
        %v363 = vunpack.c.l.b16 %v285
        %v364 = vunpack.c.h.b16 %v285
        %v365 = vunpack.c.l.b16 %v286
        %v366 = vunpack.c.h.b16 %v286
        %v367 = vpack.c.b16 %v337, %v335
        %v368 = vpack.c.b16 %v338, %v336
        %v369 = vpack.c.b16 %v341, %v339
        %v370 = vpack.c.b16 %v342, %v340
        %v371 = vpack.c.b16 %v345, %v343
        %v372 = vpack.c.b16 %v346, %v344
        %v373 = vpack.c.b16 %v349, %v347
        %v374 = vpack.c.b16 %v350, %v348
        %v375 = vpack.c.b16 %v353, %v351
        %v376 = vpack.c.b16 %v354, %v352
        %v377 = vpack.c.b16 %v357, %v355
        %v378 = vpack.c.b16 %v358, %v356
        %v379 = vpack.c.b16 %v361, %v359
        %v380 = vpack.c.b16 %v362, %v360
        %v381 = vpack.c.b16 %v365, %v363
        %v382 = vpack.c.b16 %v366, %v364
        %v431 = vunpack.c.l.b16 %v287
        %v432 = vunpack.c.l.b16 %v288
        %v433 = vunpack.c.l.b16 %v289
        %v434 = vunpack.c.l.b16 %v290
        %v435 = vunpack.c.l.b16 %v291
        %v436 = vunpack.c.l.b16 %v292
        %v437 = vunpack.c.l.b16 %v293
        %v438 = vunpack.c.l.b16 %v294
        %v439 = vunpack.c.l.b16 %v295
        %v440 = vunpack.c.l.b16 %v296
        %v441 = vunpack.c.l.b16 %v297
        %v442 = vunpack.c.l.b16 %v298
        %v443 = vunpack.c.l.b16 %v299
        %v444 = vunpack.c.l.b16 %v300
        %v445 = vunpack.c.l.b16 %v301
        %v446 = vunpack.c.l.b16 %v302
        %v447 = vunpack.c.l.b16 %v303
        %v448 = vunpack.c.l.b16 %v304
        %v449 = vunpack.c.l.b16 %v305
        %v450 = vunpack.c.l.b16 %v306
        %v451 = vunpack.c.l.b16 %v307
        %v452 = vunpack.c.l.b16 %v308
        %v453 = vunpack.c.l.b16 %v309
        %v454 = vunpack.c.l.b16 %v310
        %v455 = vunpack.c.l.b16 %v311
        %v456 = vunpack.c.l.b16 %v312
        %v457 = vunpack.c.l.b16 %v313
        %v458 = vunpack.c.l.b16 %v314
        %v459 = vunpack.c.l.b16 %v315
        %v460 = vunpack.c.l.b16 %v316
        %v461 = vunpack.c.l.b16 %v317
        %v462 = vunpack.c.l.b16 %v318
        %v463 = vpack.c.b16 %v432, %v431
        %v464 = vpack.c.b16 %v434, %v433
        %v465 = vpack.c.b16 %v436, %v435
        %v466 = vpack.c.b16 %v438, %v437
        %v467 = vpack.c.b16 %v440, %v439
        %v468 = vpack.c.b16 %v442, %v441
        %v469 = vpack.c.b16 %v444, %v443
        %v470 = vpack.c.b16 %v446, %v445
        %v471 = vpack.c.b16 %v448, %v447
        %v472 = vpack.c.b16 %v450, %v449
        %v473 = vpack.c.b16 %v452, %v451
        %v474 = vpack.c.b16 %v454, %v453
        %v475 = vpack.c.b16 %v456, %v455
        %v476 = vpack.c.b16 %v458, %v457
        %v477 = vpack.c.b16 %v460, %v459
        %v478 = vpack.c.b16 %v462, %v461
        %495 = vmatprep.subr.bf16.mxu0 0
        %496 = vmatpush1.bf16.msra.mxu0 %v470
        %497 = vmatprep.subr.bf16.mxu0 0
        %498 = vmatpush1.bf16.msra.mxu0 %v469
        %499 = vmatprep.subr.bf16.mxu0 0
        %500 = vmatpush1.bf16.msra.mxu0 %v468
        %501 = vmatprep.subr.bf16.mxu0 0
        %502 = vmatpush1.bf16.msra.mxu0 %v467
        %503 = vmatprep.subr.bf16.mxu0 0
        %504 = vmatpush1.bf16.msra.mxu0 %v466
        %505 = vmatprep.subr.bf16.mxu0 0
        %506 = vmatpush1.bf16.msra.mxu0 %v465
        %507 = vmatprep.subr.bf16.mxu0 0
        %508 = vmatpush1.bf16.msra.mxu0 %v464
        %509 = vmatprep.subr.bf16.mxu0 0
        %510 = vmatpush1.bf16.msra.mxu0 %v463
        %511 = vmatprep.subr.bf16.mxu0 0
        %512 = vmatpush2.bf16.msra.mxu0 %v478
        %513 = vmatprep.subr.bf16.mxu0 0
        %514 = vmatpush2.bf16.msra.mxu0 %v477
        %515 = vmatprep.subr.bf16.mxu0 0
        %516 = vmatpush2.bf16.msra.mxu0 %v476
        %517 = vmatprep.subr.bf16.mxu0 0
        %518 = vmatpush2.bf16.msra.mxu0 %v475
        %519 = vmatprep.subr.bf16.mxu0 0
        %520 = vmatpush2.bf16.msra.mxu0 %v474
        %521 = vmatprep.subr.bf16.mxu0 0
        %522 = vmatpush2.bf16.msra.mxu0 %v473
        %523 = vmatprep.subr.bf16.mxu0 0
        %524 = vmatpush2.bf16.msra.mxu0 %v472
        %525 = vmatprep.subr.bf16.mxu0 0
        %526 = vmatpush2.bf16.msra.mxu0 %v471
        %527 = vmatprep.mubr.bf16.mxu0 %v368
        %528 = vmatmul.mubr.bf16.gmra.mxu0 %v367
        %v529 = vpop.f32.mrf.mxu0
        %v530 = vadd.f32 0.0, %v529
        %v531 = vpop.f32.mrf.mxu0
        %v532 = vpop.f32.mrf.mxu0
        %v533 = vadd.f32 0.0, %v532
        %v534 = vpop.f32.mrf.mxu0
        %535 = vmatprep.mubr.bf16.mxu0 %v370
        %536 = vmatmul.mubr.bf16.gmra.mxu0 %v369
        %v537 = vpop.f32.mrf.mxu0
        %v538 = vadd.f32 0.0, %v537
        %v539 = vpop.f32.mrf.mxu0
        %v540 = vpop.f32.mrf.mxu0
        %v541 = vadd.f32 0.0, %v540
        %v542 = vpop.f32.mrf.mxu0
        %543 = vmatprep.mubr.bf16.mxu0 %v372
        %544 = vmatmul.mubr.bf16.gmra.mxu0 %v371
        %v545 = vpop.f32.mrf.mxu0
        %v546 = vadd.f32 0.0, %v545
        %v547 = vpop.f32.mrf.mxu0
        %v548 = vpop.f32.mrf.mxu0
        %v549 = vadd.f32 0.0, %v548
        %v550 = vpop.f32.mrf.mxu0
        %551 = vmatprep.mubr.bf16.mxu0 %v374
        %552 = vmatmul.mubr.bf16.gmra.mxu0 %v373
        %v553 = vpop.f32.mrf.mxu0
        %v554 = vadd.f32 0.0, %v553
        %v555 = vpop.f32.mrf.mxu0
        %v556 = vpop.f32.mrf.mxu0
        %v557 = vadd.f32 0.0, %v556
        %v558 = vpop.f32.mrf.mxu0
        %559 = vmatprep.mubr.bf16.mxu0 %v376
        %560 = vmatmul.mubr.bf16.gmra.mxu0 %v375
        %v561 = vpop.f32.mrf.mxu0
        %v562 = vadd.f32 0.0, %v561
        %v563 = vpop.f32.mrf.mxu0
        %v564 = vpop.f32.mrf.mxu0
        %v565 = vadd.f32 0.0, %v564
        %v566 = vpop.f32.mrf.mxu0
        %567 = vmatprep.mubr.bf16.mxu0 %v378
        %568 = vmatmul.mubr.bf16.gmra.mxu0 %v377
        %v569 = vpop.f32.mrf.mxu0
        %v570 = vadd.f32 0.0, %v569
        %v571 = vpop.f32.mrf.mxu0
        %v572 = vpop.f32.mrf.mxu0
        %v573 = vadd.f32 0.0, %v572
        %v574 = vpop.f32.mrf.mxu0
        %575 = vmatprep.mubr.bf16.mxu0 %v380
        %576 = vmatmul.mubr.bf16.gmra.mxu0 %v379
        %v577 = vpop.f32.mrf.mxu0
        %v578 = vadd.f32 0.0, %v577
        %v579 = vpop.f32.mrf.mxu0
        %v580 = vpop.f32.mrf.mxu0
        %v581 = vadd.f32 0.0, %v580
        %v582 = vpop.f32.mrf.mxu0
        %583 = vmatprep.mubr.bf16.mxu0 %v382
        %584 = vmatmul.mubr.bf16.gmra.mxu0 %v381
        %v585 = vpop.f32.mrf.mxu0
        %v586 = vadd.f32 0.0, %v585
        %v587 = vpop.f32.mrf.mxu0
        %v588 = vpop.f32.mrf.mxu0
        %v589 = vadd.f32 0.0, %v588
        %v590 = vpop.f32.mrf.mxu0
        %591 = vdwg.mxu0
        %v592 = vmax.f32 %v530, %v546
        %v593 = vmax.f32 %v533, %v549
        %v594 = vmax.f32 %v538, %v554
        %v595 = vmax.f32 %v541, %v557
        %v596 = vmax.f32 %v562, %v578
        %v597 = vmax.f32 %v565, %v581
        %v598 = vmax.f32 %v570, %v586
        %v599 = vmax.f32 %v573, %v589
        %v600 = vmax.f32 %v592, %v596
        %v601 = vmax.f32 %v593, %v597
        %v602 = vmax.f32 %v594, %v598
        %v603 = vmax.f32 %v595, %v599
        %v604 = vld [vmem:[%s2] sm:$0x1]
        %v606 = vlaneseq
        %v607 = vshrl.u32 %v606, 7
        %v608 = vsub.s32 0, %v607
        %v609 = vrot.slane %v604, %v608
        %v611 = vadd.f32 %v600, %v609
        %v612 = vadd.f32 %v601, %v609
        %v613 = vadd.f32 %v602, %v609
        %v614 = vadd.f32 %v603, %v609
        %v615 = vmax.f32 %v611, 0.0
        %v616 = vmax.f32 %v612, 0.0
        %v617 = vmax.f32 %v613, 0.0
        %v618 = vmax.f32 %v614, 0.0
        %v619 = vpack.c.bf16 %v616, %v615
        %v620 = vpack.c.bf16 %v618, %v617
        %v623 = vunpack.c.l.b16 %v619
        %v624 = vunpack.c.h.b16 %v619
        %v625 = vunpack.c.l.b16 %v620
        %v626 = vunpack.c.h.b16 %v620
        %v627 = vpack.c.b16 %v623, %v623
        %v628 = vpack.c.b16 %v624, %v624
        %v629 = vpack.c.b16 %v625, %v625
        %v630 = vpack.c.b16 %v626, %v626
        %635 = vst [vmem:[%s268] sm:$0xf] %v627
        %636 = vst [vmem:[%s268 + $0x4] sm:$0xf] %v628
        %637 = vst [vmem:[%s268 + $0x8] sm:$0xf] %v629
        %638 = vst [vmem:[%s268 + $0xc] sm:$0xf] %v630
        %s639 = smul.u32 4, %s14
        %p640 = scmp.lt.s32.totalorder %s639, 7
        %s641 = scalar_select %p640, %s639, 7
        %s642 = smul.addr %s641, 4
        %s643 = scalar_lea.vmem %s3, %s642
        // Predicated region
        $region71: #{cnn_forward.4} parent=65 // pred_check
          %p644 = pneg %p100
        $region72: #{cnn_forward.4} parent=65 // pred_check_branch
          %646 = sbr.rel (%p644) target = $region74
        $region73: #{cnn_forward.4} parent=65 // pred_region
          %s647 = smul.u32 4, %s14
        $region74: #{cnn_forward.4} parent=65 // pred_fallthru
          _
      $region66: #{cnn_forward.4} parent=5 // pred_fallthru
        _
      %p648 = scmp.le.s32.totalorder 2, %s9
      // Predicated region
      $region75: #{cnn_forward.4} parent=5 // pred_check
        %p649 = pneg %p648
      $region76: #{cnn_forward.4} parent=5 // pred_check_branch
        %651 = sbr.rel (%p649) target = $region78
      $region77: #{cnn_forward.4} parent=5 // pred_region
        %s652 = ssub.s32 %s9, 2
        // Predicated region
        $region79: #{cnn_forward.4} parent=77 // pred_check
          %p653 = pneg %p106
        $region80: #{cnn_forward.4} parent=77 // pred_check_branch
          %655 = sbr.rel (%p653) target = $region82
        $region81: #{cnn_forward.4} parent=77 // pred_region
          %s656 = smul.u32 4, %s15
          %p657 = scmp.lt.s32.totalorder %s656, 7
          %s658 = scalar_select %p657, %s656, 7
          %s659 = smul.addr %s658, 4
          %s660 = scalar_lea.vmem %s3, %s659
        $region82: #{cnn_forward.4} parent=77 // pred_fallthru
          _
      $region78: #{cnn_forward.4} parent=5 // pred_fallthru
        _
    $region6: #{cnn_forward.4} parent=1 // loop_footer
      %s13 = sadd.s32 1, %s9
    $region7: #{cnn_forward.4} parent=1 // loop_footer_branch
      %8 = sbr.rel target = $region3
    $region8: #{cnn_forward.4} parent=1 // loop_exit
      _

// kernel: cnn_forward.5
$region0: #{cnn_forward.5}
  #allocation0 [shape = 'u32[]', space=smem, size = 0x4, offset = 0x4, fixed_abs, tag = 'smem constant byte address 0x4 - core index']
  #allocation1 [shape = 'u32[144,128]{1,0:T(1,128)}', space=vmem, size = 0x12000, scoped, tag = 'internal scratch']
  %s0 = inlined_call_operand.vmem [shape: bf16[8,3200], index: 0, kind: input, shape index: {}]
  %s1 = inlined_call_operand.vmem [shape: bf16[3200,128], index: 1, kind: input, shape index: {}]
  %s2 = inlined_call_operand.vmem [shape: f32[1,128], index: 2, kind: input, shape index: {}]
  %s3 = inlined_call_operand.vmem [shape: bf16[128,128], index: 3, kind: input, shape index: {}]
  %s4 = inlined_call_operand.vmem [shape: f32[1,128], index: 4, kind: input, shape index: {}]
  %s5 = inlined_call_operand.vmem [shape: bf16[128,128], index: 5, kind: input, shape index: {}]
  %s6 = inlined_call_operand.vmem [shape: f32[1,128], index: 6, kind: input, shape index: {}]
  %s7 = inlined_call_operand.vmem [shape: f32[8,128], index: 7, kind: output, shape index: {}]
  %s8 = sld [smem:[#allocation0]]
  $region38: #{cnn_forward.5} parent=0
    _
  %s10 = ssub.s32 1, %s8
  %s11 = scalar_select 0, %s10, %s8
  // Predicated region
  $region2: #{cnn_forward.5} parent=0 // pred_check
    _
  $region3: #{cnn_forward.5} parent=0 // pred_check_branch
    %13 = sbr.rel (0) target = $region5
  $region4: #{cnn_forward.5} parent=0 // pred_region
    _
  $region5: #{cnn_forward.5} parent=0 // pred_fallthru
    _
  // Predicated region
  $region6: #{cnn_forward.5} parent=0 // pred_check
    _
  $region7: #{cnn_forward.5} parent=0 // pred_check_branch
    %15 = sbr.rel (0) target = $region9
  $region8: #{cnn_forward.5} parent=0 // pred_region
    _
  $region9: #{cnn_forward.5} parent=0 // pred_fallthru
    _
  // Predicated region
  $region10: #{cnn_forward.5} parent=0 // pred_check
    _
  $region11: #{cnn_forward.5} parent=0 // pred_check_branch
    %17 = sbr.rel (0) target = $region13
  $region12: #{cnn_forward.5} parent=0 // pred_region
    _
  $region13: #{cnn_forward.5} parent=0 // pred_fallthru
    _
  // Predicated region
  $region14: #{cnn_forward.5} parent=0 // pred_check
    _
  $region15: #{cnn_forward.5} parent=0 // pred_check_branch
    %19 = sbr.rel (0) target = $region17
  $region16: #{cnn_forward.5} parent=0 // pred_region
    _
  $region17: #{cnn_forward.5} parent=0 // pred_fallthru
    _
  // Predicated region
  $region18: #{cnn_forward.5} parent=0 // pred_check
    _
  $region19: #{cnn_forward.5} parent=0 // pred_check_branch
    %21 = sbr.rel (0) target = $region21
  $region20: #{cnn_forward.5} parent=0 // pred_region
    _
  $region21: #{cnn_forward.5} parent=0 // pred_fallthru
    _
  // Predicated region
  $region22: #{cnn_forward.5} parent=0 // pred_check
    _
  $region23: #{cnn_forward.5} parent=0 // pred_check_branch
    %23 = sbr.rel (0) target = $region25
  $region24: #{cnn_forward.5} parent=0 // pred_region
    _
  $region25: #{cnn_forward.5} parent=0 // pred_fallthru
    _
  // Predicated region
  $region26: #{cnn_forward.5} parent=0 // pred_check
    _
  $region27: #{cnn_forward.5} parent=0 // pred_check_branch
    %25 = sbr.rel (0) target = $region29
  $region28: #{cnn_forward.5} parent=0 // pred_region
    _
  $region29: #{cnn_forward.5} parent=0 // pred_fallthru
    _
  %v27 = vld [vmem:[%s0] sm:$0xff]
  %v28 = vld [vmem:[%s0 + $0x8] sm:$0xff]
  %v29 = vld [vmem:[%s0 + $0x10] sm:$0xff]
  %v30 = vld [vmem:[%s0 + $0x18] sm:$0xff]
  %v31 = vld [vmem:[%s0 + $0x20] sm:$0xff]
  %v32 = vld [vmem:[%s0 + $0x28] sm:$0xff]
  %v33 = vld [vmem:[%s0 + $0x30] sm:$0xff]
  %v34 = vld [vmem:[%s0 + $0x38] sm:$0xff]
  %v35 = vld [vmem:[%s0 + $0x40] sm:$0xff]
  %v36 = vld [vmem:[%s0 + $0x48] sm:$0xff]
  %v37 = vld [vmem:[%s0 + $0x50] sm:$0xff]
  %v38 = vld [vmem:[%s0 + $0x58] sm:$0xff]
  %v39 = vld [vmem:[%s0 + $0x60] sm:$0xf]
  %v40 = vld [vmem:[%s1] sm:$0xf]
  %v41 = vld [vmem:[%s1 + $0x4] sm:$0xf]
  %v42 = vld [vmem:[%s1 + $0x8] sm:$0xf]
  %v43 = vld [vmem:[%s1 + $0xc] sm:$0xf]
  %v44 = vld [vmem:[%s1 + $0x10] sm:$0xf]
  %v45 = vld [vmem:[%s1 + $0x14] sm:$0xf]
  %v46 = vld [vmem:[%s1 + $0x18] sm:$0xf]
  %v47 = vld [vmem:[%s1 + $0x1c] sm:$0xf]
  %v48 = vld [vmem:[%s1 + $0x20] sm:$0xf]
  %v49 = vld [vmem:[%s1 + $0x24] sm:$0xf]
  %v50 = vld [vmem:[%s1 + $0x28] sm:$0xf]
  %v51 = vld [vmem:[%s1 + $0x2c] sm:$0xf]
  %v52 = vld [vmem:[%s1 + $0x30] sm:$0xf]
  %v53 = vld [vmem:[%s1 + $0x34] sm:$0xf]
  %v54 = vld [vmem:[%s1 + $0x38] sm:$0xf]
  %v55 = vld [vmem:[%s1 + $0x3c] sm:$0xf]
  %v56 = vld [vmem:[%s1 + $0x40] sm:$0xf]
  %v57 = vld [vmem:[%s1 + $0x44] sm:$0xf]
  %v58 = vld [vmem:[%s1 + $0x48] sm:$0xf]
  %v59 = vld [vmem:[%s1 + $0x4c] sm:$0xf]
  %v60 = vld [vmem:[%s1 + $0x50] sm:$0xf]
  %v61 = vld [vmem:[%s1 + $0x54] sm:$0xf]
  %v62 = vld [vmem:[%s1 + $0x58] sm:$0xf]
  %v63 = vld [vmem:[%s1 + $0x5c] sm:$0xf]
  %v64 = vld [vmem:[%s1 + $0x60] sm:$0xf]
  %v65 = vld [vmem:[%s1 + $0x64] sm:$0xf]
  %v66 = vld [vmem:[%s1 + $0x68] sm:$0xf]
  %v67 = vld [vmem:[%s1 + $0x6c] sm:$0xf]
  %v68 = vld [vmem:[%s1 + $0x70] sm:$0xf]
  %v69 = vld [vmem:[%s1 + $0x74] sm:$0xf]
  %v70 = vld [vmem:[%s1 + $0x78] sm:$0xf]
  %v71 = vld [vmem:[%s1 + $0x7c] sm:$0xf]
  %v72 = vld [vmem:[%s1 + $0x80] sm:$0xf]
  %v73 = vld [vmem:[%s1 + $0x84] sm:$0xf]
  %v74 = vld [vmem:[%s1 + $0x88] sm:$0xf]
  %v75 = vld [vmem:[%s1 + $0x8c] sm:$0xf]
  %v76 = vld [vmem:[%s1 + $0x90] sm:$0xf]
  %v77 = vld [vmem:[%s1 + $0x94] sm:$0xf]
  %v78 = vld [vmem:[%s1 + $0x98] sm:$0xf]
  %v79 = vld [vmem:[%s1 + $0x9c] sm:$0xf]
  %v80 = vld [vmem:[%s1 + $0xa0] sm:$0xf]
  %v81 = vld [vmem:[%s1 + $0xa4] sm:$0xf]
  %v82 = vld [vmem:[%s1 + $0xa8] sm:$0xf]
  %v83 = vld [vmem:[%s1 + $0xac] sm:$0xf]
  %v84 = vld [vmem:[%s1 + $0xb0] sm:$0xf]
  %v85 = vld [vmem:[%s1 + $0xb4] sm:$0xf]
  %v86 = vld [vmem:[%s1 + $0xb8] sm:$0xf]
  %v87 = vld [vmem:[%s1 + $0xbc] sm:$0xf]
  %v88 = vld [vmem:[%s1 + $0xc0] sm:$0xf]
  %v89 = vld [vmem:[%s1 + $0xc4] sm:$0xf]
  %v90 = vld [vmem:[%s1 + $0xc8] sm:$0xf]
  %v91 = vld [vmem:[%s1 + $0xcc] sm:$0xf]
  %v92 = vld [vmem:[%s1 + $0xd0] sm:$0xf]
  %v93 = vld [vmem:[%s1 + $0xd4] sm:$0xf]
  %v94 = vld [vmem:[%s1 + $0xd8] sm:$0xf]
  %v95 = vld [vmem:[%s1 + $0xdc] sm:$0xf]
  %v96 = vld [vmem:[%s1 + $0xe0] sm:$0xf]
  %v97 = vld [vmem:[%s1 + $0xe4] sm:$0xf]
  %v98 = vld [vmem:[%s1 + $0xe8] sm:$0xf]
  %v99 = vld [vmem:[%s1 + $0xec] sm:$0xf]
  %v100 = vld [vmem:[%s1 + $0xf0] sm:$0xf]
  %v101 = vld [vmem:[%s1 + $0xf4] sm:$0xf]
  %v102 = vld [vmem:[%s1 + $0xf8] sm:$0xf]
  %v103 = vld [vmem:[%s1 + $0xfc] sm:$0xf]
  %v104 = vld [vmem:[%s1 + $0x100] sm:$0xf]
  %v105 = vld [vmem:[%s1 + $0x104] sm:$0xf]
  %v106 = vld [vmem:[%s1 + $0x108] sm:$0xf]
  %v107 = vld [vmem:[%s1 + $0x10c] sm:$0xf]
  %v108 = vld [vmem:[%s1 + $0x110] sm:$0xf]
  %v109 = vld [vmem:[%s1 + $0x114] sm:$0xf]
  %v110 = vld [vmem:[%s1 + $0x118] sm:$0xf]
  %v111 = vld [vmem:[%s1 + $0x11c] sm:$0xf]
  %v112 = vld [vmem:[%s1 + $0x120] sm:$0xf]
  %v113 = vld [vmem:[%s1 + $0x124] sm:$0xf]
  %v114 = vld [vmem:[%s1 + $0x128] sm:$0xf]
  %v115 = vld [vmem:[%s1 + $0x12c] sm:$0xf]
  %v116 = vld [vmem:[%s1 + $0x130] sm:$0xf]
  %v117 = vld [vmem:[%s1 + $0x134] sm:$0xf]
  %v118 = vld [vmem:[%s1 + $0x138] sm:$0xf]
  %v119 = vld [vmem:[%s1 + $0x13c] sm:$0xf]
  %v120 = vld [vmem:[%s1 + $0x140] sm:$0xf]
  %v121 = vld [vmem:[%s1 + $0x144] sm:$0xf]
  %v122 = vld [vmem:[%s1 + $0x148] sm:$0xf]
  %v123 = vld [vmem:[%s1 + $0x14c] sm:$0xf]
  %v124 = vld [vmem:[%s1 + $0x150] sm:$0xf]
  %v125 = vld [vmem:[%s1 + $0x154] sm:$0xf]
  %v126 = vld [vmem:[%s1 + $0x158] sm:$0xf]
  %v127 = vld [vmem:[%s1 + $0x15c] sm:$0xf]
  %v128 = vld [vmem:[%s1 + $0x160] sm:$0xf]
  %v129 = vld [vmem:[%s1 + $0x164] sm:$0xf]
  %v130 = vld [vmem:[%s1 + $0x168] sm:$0xf]
  %v131 = vld [vmem:[%s1 + $0x16c] sm:$0xf]
  %v132 = vld [vmem:[%s1 + $0x170] sm:$0xf]
  %v133 = vld [vmem:[%s1 + $0x174] sm:$0xf]
  %v134 = vld [vmem:[%s1 + $0x178] sm:$0xf]
  %v135 = vld [vmem:[%s1 + $0x17c] sm:$0xf]
  %v136 = vld [vmem:[%s1 + $0x180] sm:$0xf]
  %v137 = vld [vmem:[%s1 + $0x184] sm:$0xf]
  %v138 = vld [vmem:[%s1 + $0x188] sm:$0xf]
  %v139 = vld [vmem:[%s1 + $0x18c] sm:$0xf]
  %v140 = vld [vmem:[%s1 + $0x190] sm:$0xf]
  %v141 = vld [vmem:[%s1 + $0x194] sm:$0xf]
  %v142 = vld [vmem:[%s1 + $0x198] sm:$0xf]
  %v143 = vld [vmem:[%s1 + $0x19c] sm:$0xf]
  %v144 = vld [vmem:[%s1 + $0x1a0] sm:$0xf]
  %v145 = vld [vmem:[%s1 + $0x1a4] sm:$0xf]
  %v146 = vld [vmem:[%s1 + $0x1a8] sm:$0xf]
  %v147 = vld [vmem:[%s1 + $0x1ac] sm:$0xf]
  %v148 = vld [vmem:[%s1 + $0x1b0] sm:$0xf]
  %v149 = vld [vmem:[%s1 + $0x1b4] sm:$0xf]
  %v150 = vld [vmem:[%s1 + $0x1b8] sm:$0xf]
  %v151 = vld [vmem:[%s1 + $0x1bc] sm:$0xf]
  %v152 = vld [vmem:[%s1 + $0x1c0] sm:$0xf]
  %v153 = vld [vmem:[%s1 + $0x1c4] sm:$0xf]
  %v154 = vld [vmem:[%s1 + $0x1c8] sm:$0xf]
  %v155 = vld [vmem:[%s1 + $0x1cc] sm:$0xf]
  %v156 = vld [vmem:[%s1 + $0x1d0] sm:$0xf]
  %v157 = vld [vmem:[%s1 + $0x1d4] sm:$0xf]
  %v158 = vld [vmem:[%s1 + $0x1d8] sm:$0xf]
  %v159 = vld [vmem:[%s1 + $0x1dc] sm:$0xf]
  %v160 = vld [vmem:[%s1 + $0x1e0] sm:$0xf]
  %v161 = vld [vmem:[%s1 + $0x1e4] sm:$0xf]
  %v162 = vld [vmem:[%s1 + $0x1e8] sm:$0xf]
  %v163 = vld [vmem:[%s1 + $0x1ec] sm:$0xf]
  %v164 = vld [vmem:[%s1 + $0x1f0] sm:$0xf]
  %v165 = vld [vmem:[%s1 + $0x1f4] sm:$0xf]
  %v166 = vld [vmem:[%s1 + $0x1f8] sm:$0xf]
  %v167 = vld [vmem:[%s1 + $0x1fc] sm:$0xf]
  %v168 = vld [vmem:[%s1 + $0x200] sm:$0xf]
  %v169 = vld [vmem:[%s1 + $0x204] sm:$0xf]
  %v170 = vld [vmem:[%s1 + $0x208] sm:$0xf]
  %v171 = vld [vmem:[%s1 + $0x20c] sm:$0xf]
  %v172 = vld [vmem:[%s1 + $0x210] sm:$0xf]
  %v173 = vld [vmem:[%s1 + $0x214] sm:$0xf]
  %v174 = vld [vmem:[%s1 + $0x218] sm:$0xf]
  %v175 = vld [vmem:[%s1 + $0x21c] sm:$0xf]
  %v176 = vld [vmem:[%s1 + $0x220] sm:$0xf]
  %v177 = vld [vmem:[%s1 + $0x224] sm:$0xf]
  %v178 = vld [vmem:[%s1 + $0x228] sm:$0xf]
  %v179 = vld [vmem:[%s1 + $0x22c] sm:$0xf]
  %v180 = vld [vmem:[%s1 + $0x230] sm:$0xf]
  %v181 = vld [vmem:[%s1 + $0x234] sm:$0xf]
  %v182 = vld [vmem:[%s1 + $0x238] sm:$0xf]
  %v183 = vld [vmem:[%s1 + $0x23c] sm:$0xf]
  %v184 = vld [vmem:[%s1 + $0x240] sm:$0xf]
  %v185 = vld [vmem:[%s1 + $0x244] sm:$0xf]
  %v186 = vld [vmem:[%s1 + $0x248] sm:$0xf]
  %v187 = vld [vmem:[%s1 + $0x24c] sm:$0xf]
  %v188 = vld [vmem:[%s1 + $0x250] sm:$0xf]
  %v189 = vld [vmem:[%s1 + $0x254] sm:$0xf]
  %v190 = vld [vmem:[%s1 + $0x258] sm:$0xf]
  %v191 = vld [vmem:[%s1 + $0x25c] sm:$0xf]
  %v192 = vld [vmem:[%s1 + $0x260] sm:$0xf]
  %v193 = vld [vmem:[%s1 + $0x264] sm:$0xf]
  %v194 = vld [vmem:[%s1 + $0x268] sm:$0xf]
  %v195 = vld [vmem:[%s1 + $0x26c] sm:$0xf]
  %v196 = vld [vmem:[%s1 + $0x270] sm:$0xf]
  %v197 = vld [vmem:[%s1 + $0x274] sm:$0xf]
  %v198 = vld [vmem:[%s1 + $0x278] sm:$0xf]
  %v199 = vld [vmem:[%s1 + $0x27c] sm:$0xf]
  %v200 = vld [vmem:[%s1 + $0x280] sm:$0xf]
  %v201 = vld [vmem:[%s1 + $0x284] sm:$0xf]
  %v202 = vld [vmem:[%s1 + $0x288] sm:$0xf]
  %v203 = vld [vmem:[%s1 + $0x28c] sm:$0xf]
  %v204 = vld [vmem:[%s1 + $0x290] sm:$0xf]
  %v205 = vld [vmem:[%s1 + $0x294] sm:$0xf]
  %v206 = vld [vmem:[%s1 + $0x298] sm:$0xf]
  %v207 = vld [vmem:[%s1 + $0x29c] sm:$0xf]
  %v208 = vld [vmem:[%s1 + $0x2a0] sm:$0xf]
  %v209 = vld [vmem:[%s1 + $0x2a4] sm:$0xf]
  %v210 = vld [vmem:[%s1 + $0x2a8] sm:$0xf]
  %v211 = vld [vmem:[%s1 + $0x2ac] sm:$0xf]
  %v212 = vld [vmem:[%s1 + $0x2b0] sm:$0xf]
  %v213 = vld [vmem:[%s1 + $0x2b4] sm:$0xf]
  %v214 = vld [vmem:[%s1 + $0x2b8] sm:$0xf]
  %v215 = vld [vmem:[%s1 + $0x2bc] sm:$0xf]
  %v216 = vld [vmem:[%s1 + $0x2c0] sm:$0xf]
  %v217 = vld [vmem:[%s1 + $0x2c4] sm:$0xf]
  %v218 = vld [vmem:[%s1 + $0x2c8] sm:$0xf]
  %v219 = vld [vmem:[%s1 + $0x2cc] sm:$0xf]
  %v220 = vld [vmem:[%s1 + $0x2d0] sm:$0xf]
  %v221 = vld [vmem:[%s1 + $0x2d4] sm:$0xf]
  %v222 = vld [vmem:[%s1 + $0x2d8] sm:$0xf]
  %v223 = vld [vmem:[%s1 + $0x2dc] sm:$0xf]
  %v224 = vld [vmem:[%s1 + $0x2e0] sm:$0xf]
  %v225 = vld [vmem:[%s1 + $0x2e4] sm:$0xf]
  %v226 = vld [vmem:[%s1 + $0x2e8] sm:$0xf]
  %v227 = vld [vmem:[%s1 + $0x2ec] sm:$0xf]
  %v228 = vld [vmem:[%s1 + $0x2f0] sm:$0xf]
  %v229 = vld [vmem:[%s1 + $0x2f4] sm:$0xf]
  %v230 = vld [vmem:[%s1 + $0x2f8] sm:$0xf]
  %v231 = vld [vmem:[%s1 + $0x2fc] sm:$0xf]
  %v232 = vld [vmem:[%s1 + $0x300] sm:$0xf]
  %v233 = vld [vmem:[%s1 + $0x304] sm:$0xf]
  %v234 = vld [vmem:[%s1 + $0x308] sm:$0xf]
  %v235 = vld [vmem:[%s1 + $0x30c] sm:$0xf]
  %v236 = vld [vmem:[%s1 + $0x310] sm:$0xf]
  %v237 = vld [vmem:[%s1 + $0x314] sm:$0xf]
  %v238 = vld [vmem:[%s1 + $0x318] sm:$0xf]
  %v239 = vld [vmem:[%s1 + $0x31c] sm:$0xf]
  %v240 = vld [vmem:[%s1 + $0x320] sm:$0xf]
  %v241 = vld [vmem:[%s1 + $0x324] sm:$0xf]
  %v242 = vld [vmem:[%s1 + $0x328] sm:$0xf]
  %v243 = vld [vmem:[%s1 + $0x32c] sm:$0xf]
  %v244 = vld [vmem:[%s1 + $0x330] sm:$0xf]
  %v245 = vld [vmem:[%s1 + $0x334] sm:$0xf]
  %v246 = vld [vmem:[%s1 + $0x338] sm:$0xf]
  %v247 = vld [vmem:[%s1 + $0x33c] sm:$0xf]
  %v248 = vld [vmem:[%s1 + $0x340] sm:$0xf]
  %v249 = vld [vmem:[%s1 + $0x344] sm:$0xf]
  %v250 = vld [vmem:[%s1 + $0x348] sm:$0xf]
  %v251 = vld [vmem:[%s1 + $0x34c] sm:$0xf]
  %v252 = vld [vmem:[%s1 + $0x350] sm:$0xf]
  %v253 = vld [vmem:[%s1 + $0x354] sm:$0xf]
  %v254 = vld [vmem:[%s1 + $0x358] sm:$0xf]
  %v255 = vld [vmem:[%s1 + $0x35c] sm:$0xf]
  %v256 = vld [vmem:[%s1 + $0x360] sm:$0xf]
  %v257 = vld [vmem:[%s1 + $0x364] sm:$0xf]
  %v258 = vld [vmem:[%s1 + $0x368] sm:$0xf]
  %v259 = vld [vmem:[%s1 + $0x36c] sm:$0xf]
  %v260 = vld [vmem:[%s1 + $0x370] sm:$0xf]
  %v261 = vld [vmem:[%s1 + $0x374] sm:$0xf]
  %v262 = vld [vmem:[%s1 + $0x378] sm:$0xf]
  %v263 = vld [vmem:[%s1 + $0x37c] sm:$0xf]
  %v264 = vld [vmem:[%s1 + $0x380] sm:$0xf]
  %v265 = vld [vmem:[%s1 + $0x384] sm:$0xf]
  %v266 = vld [vmem:[%s1 + $0x388] sm:$0xf]
  %v267 = vld [vmem:[%s1 + $0x38c] sm:$0xf]
  %v268 = vld [vmem:[%s1 + $0x390] sm:$0xf]
  %v269 = vld [vmem:[%s1 + $0x394] sm:$0xf]
  %v270 = vld [vmem:[%s1 + $0x398] sm:$0xf]
  %v271 = vld [vmem:[%s1 + $0x39c] sm:$0xf]
  %v272 = vld [vmem:[%s1 + $0x3a0] sm:$0xf]
  %v273 = vld [vmem:[%s1 + $0x3a4] sm:$0xf]
  %v274 = vld [vmem:[%s1 + $0x3a8] sm:$0xf]
  %v275 = vld [vmem:[%s1 + $0x3ac] sm:$0xf]
  %v276 = vld [vmem:[%s1 + $0x3b0] sm:$0xf]
  %v277 = vld [vmem:[%s1 + $0x3b4] sm:$0xf]
  %v278 = vld [vmem:[%s1 + $0x3b8] sm:$0xf]
  %v279 = vld [vmem:[%s1 + $0x3bc] sm:$0xf]
  %v280 = vld [vmem:[%s1 + $0x3c0] sm:$0xf]
  %v281 = vld [vmem:[%s1 + $0x3c4] sm:$0xf]
  %v282 = vld [vmem:[%s1 + $0x3c8] sm:$0xf]
  %v283 = vld [vmem:[%s1 + $0x3cc] sm:$0xf]
  %v284 = vld [vmem:[%s1 + $0x3d0] sm:$0xf]
  %v285 = vld [vmem:[%s1 + $0x3d4] sm:$0xf]
  %v286 = vld [vmem:[%s1 + $0x3d8] sm:$0xf]
  %v287 = vld [vmem:[%s1 + $0x3dc] sm:$0xf]
  %v288 = vld [vmem:[%s1 + $0x3e0] sm:$0xf]
  %v289 = vld [vmem:[%s1 + $0x3e4] sm:$0xf]
  %v290 = vld [vmem:[%s1 + $0x3e8] sm:$0xf]
  %v291 = vld [vmem:[%s1 + $0x3ec] sm:$0xf]
  %v292 = vld [vmem:[%s1 + $0x3f0] sm:$0xf]
  %v293 = vld [vmem:[%s1 + $0x3f4] sm:$0xf]
  %v294 = vld [vmem:[%s1 + $0x3f8] sm:$0xf]
  %v295 = vld [vmem:[%s1 + $0x3fc] sm:$0xf]
  %v296 = vld [vmem:[%s1 + $0x400] sm:$0xf]
  %v297 = vld [vmem:[%s1 + $0x404] sm:$0xf]
  %v298 = vld [vmem:[%s1 + $0x408] sm:$0xf]
  %v299 = vld [vmem:[%s1 + $0x40c] sm:$0xf]
  %v300 = vld [vmem:[%s1 + $0x410] sm:$0xf]
  %v301 = vld [vmem:[%s1 + $0x414] sm:$0xf]
  %v302 = vld [vmem:[%s1 + $0x418] sm:$0xf]
  %v303 = vld [vmem:[%s1 + $0x41c] sm:$0xf]
  %v304 = vld [vmem:[%s1 + $0x420] sm:$0xf]
  %v305 = vld [vmem:[%s1 + $0x424] sm:$0xf]
  %v306 = vld [vmem:[%s1 + $0x428] sm:$0xf]
  %v307 = vld [vmem:[%s1 + $0x42c] sm:$0xf]
  %v308 = vld [vmem:[%s1 + $0x430] sm:$0xf]
  %v309 = vld [vmem:[%s1 + $0x434] sm:$0xf]
  %v310 = vld [vmem:[%s1 + $0x438] sm:$0xf]
  %v311 = vld [vmem:[%s1 + $0x43c] sm:$0xf]
  %v312 = vld [vmem:[%s1 + $0x440] sm:$0xf]
  %v313 = vld [vmem:[%s1 + $0x444] sm:$0xf]
  %v314 = vld [vmem:[%s1 + $0x448] sm:$0xf]
  %v315 = vld [vmem:[%s1 + $0x44c] sm:$0xf]
  %v316 = vld [vmem:[%s1 + $0x450] sm:$0xf]
  %v317 = vld [vmem:[%s1 + $0x454] sm:$0xf]
  %v318 = vld [vmem:[%s1 + $0x458] sm:$0xf]
  %v319 = vld [vmem:[%s1 + $0x45c] sm:$0xf]
  %v320 = vld [vmem:[%s1 + $0x460] sm:$0xf]
  %v321 = vld [vmem:[%s1 + $0x464] sm:$0xf]
  %v322 = vld [vmem:[%s1 + $0x468] sm:$0xf]
  %v323 = vld [vmem:[%s1 + $0x46c] sm:$0xf]
  %v324 = vld [vmem:[%s1 + $0x470] sm:$0xf]
  %v325 = vld [vmem:[%s1 + $0x474] sm:$0xf]
  %v326 = vld [vmem:[%s1 + $0x478] sm:$0xf]
  %v327 = vld [vmem:[%s1 + $0x47c] sm:$0xf]
  %v328 = vld [vmem:[%s1 + $0x480] sm:$0xf]
  %v329 = vld [vmem:[%s1 + $0x484] sm:$0xf]
  %v330 = vld [vmem:[%s1 + $0x488] sm:$0xf]
  %v331 = vld [vmem:[%s1 + $0x48c] sm:$0xf]
  %v332 = vld [vmem:[%s1 + $0x490] sm:$0xf]
  %v333 = vld [vmem:[%s1 + $0x494] sm:$0xf]
  %v334 = vld [vmem:[%s1 + $0x498] sm:$0xf]
  %v335 = vld [vmem:[%s1 + $0x49c] sm:$0xf]
  %v336 = vld [vmem:[%s1 + $0x4a0] sm:$0xf]
  %v337 = vld [vmem:[%s1 + $0x4a4] sm:$0xf]
  %v338 = vld [vmem:[%s1 + $0x4a8] sm:$0xf]
  %v339 = vld [vmem:[%s1 + $0x4ac] sm:$0xf]
  %v340 = vld [vmem:[%s1 + $0x4b0] sm:$0xf]
  %v341 = vld [vmem:[%s1 + $0x4b4] sm:$0xf]
  %v342 = vld [vmem:[%s1 + $0x4b8] sm:$0xf]
  %v343 = vld [vmem:[%s1 + $0x4bc] sm:$0xf]
  %v344 = vld [vmem:[%s1 + $0x4c0] sm:$0xf]
  %v345 = vld [vmem:[%s1 + $0x4c4] sm:$0xf]
  %v346 = vld [vmem:[%s1 + $0x4c8] sm:$0xf]
  %v347 = vld [vmem:[%s1 + $0x4cc] sm:$0xf]
  %v348 = vld [vmem:[%s1 + $0x4d0] sm:$0xf]
  %v349 = vld [vmem:[%s1 + $0x4d4] sm:$0xf]
  %v350 = vld [vmem:[%s1 + $0x4d8] sm:$0xf]
  %v351 = vld [vmem:[%s1 + $0x4dc] sm:$0xf]
  %v352 = vld [vmem:[%s1 + $0x4e0] sm:$0xf]
  %v353 = vld [vmem:[%s1 + $0x4e4] sm:$0xf]
  %v354 = vld [vmem:[%s1 + $0x4e8] sm:$0xf]
  %v355 = vld [vmem:[%s1 + $0x4ec] sm:$0xf]
  %v356 = vld [vmem:[%s1 + $0x4f0] sm:$0xf]
  %v357 = vld [vmem:[%s1 + $0x4f4] sm:$0xf]
  %v358 = vld [vmem:[%s1 + $0x4f8] sm:$0xf]
  %v359 = vld [vmem:[%s1 + $0x4fc] sm:$0xf]
  %v360 = vld [vmem:[%s1 + $0x500] sm:$0xf]
  %v361 = vld [vmem:[%s1 + $0x504] sm:$0xf]
  %v362 = vld [vmem:[%s1 + $0x508] sm:$0xf]
  %v363 = vld [vmem:[%s1 + $0x50c] sm:$0xf]
  %v364 = vld [vmem:[%s1 + $0x510] sm:$0xf]
  %v365 = vld [vmem:[%s1 + $0x514] sm:$0xf]
  %v366 = vld [vmem:[%s1 + $0x518] sm:$0xf]
  %v367 = vld [vmem:[%s1 + $0x51c] sm:$0xf]
  %v368 = vld [vmem:[%s1 + $0x520] sm:$0xf]
  %v369 = vld [vmem:[%s1 + $0x524] sm:$0xf]
  %v370 = vld [vmem:[%s1 + $0x528] sm:$0xf]
  %v371 = vld [vmem:[%s1 + $0x52c] sm:$0xf]
  %v372 = vld [vmem:[%s1 + $0x530] sm:$0xf]
  %v373 = vld [vmem:[%s1 + $0x534] sm:$0xf]
  %v374 = vld [vmem:[%s1 + $0x538] sm:$0xf]
  %v375 = vld [vmem:[%s1 + $0x53c] sm:$0xf]
  %v376 = vld [vmem:[%s1 + $0x540] sm:$0xf]
  %v377 = vld [vmem:[%s1 + $0x544] sm:$0xf]
  %v378 = vld [vmem:[%s1 + $0x548] sm:$0xf]
  %v379 = vld [vmem:[%s1 + $0x54c] sm:$0xf]
  %v380 = vld [vmem:[%s1 + $0x550] sm:$0xf]
  %v381 = vld [vmem:[%s1 + $0x554] sm:$0xf]
  %v382 = vld [vmem:[%s1 + $0x558] sm:$0xf]
  %v383 = vld [vmem:[%s1 + $0x55c] sm:$0xf]
  %v384 = vld [vmem:[%s1 + $0x560] sm:$0xf]
  %v385 = vld [vmem:[%s1 + $0x564] sm:$0xf]
  %v386 = vld [vmem:[%s1 + $0x568] sm:$0xf]
  %v387 = vld [vmem:[%s1 + $0x56c] sm:$0xf]
  %v388 = vld [vmem:[%s1 + $0x570] sm:$0xf]
  %v389 = vld [vmem:[%s1 + $0x574] sm:$0xf]
  %v390 = vld [vmem:[%s1 + $0x578] sm:$0xf]
  %v391 = vld [vmem:[%s1 + $0x57c] sm:$0xf]
  %v392 = vld [vmem:[%s1 + $0x580] sm:$0xf]
  %v393 = vld [vmem:[%s1 + $0x584] sm:$0xf]
  %v394 = vld [vmem:[%s1 + $0x588] sm:$0xf]
  %v395 = vld [vmem:[%s1 + $0x58c] sm:$0xf]
  %v396 = vld [vmem:[%s1 + $0x590] sm:$0xf]
  %v397 = vld [vmem:[%s1 + $0x594] sm:$0xf]
  %v398 = vld [vmem:[%s1 + $0x598] sm:$0xf]
  %v399 = vld [vmem:[%s1 + $0x59c] sm:$0xf]
  %v400 = vld [vmem:[%s1 + $0x5a0] sm:$0xf]
  %v401 = vld [vmem:[%s1 + $0x5a4] sm:$0xf]
  %v402 = vld [vmem:[%s1 + $0x5a8] sm:$0xf]
  %v403 = vld [vmem:[%s1 + $0x5ac] sm:$0xf]
  %v404 = vld [vmem:[%s1 + $0x5b0] sm:$0xf]
  %v405 = vld [vmem:[%s1 + $0x5b4] sm:$0xf]
  %v406 = vld [vmem:[%s1 + $0x5b8] sm:$0xf]
  %v407 = vld [vmem:[%s1 + $0x5bc] sm:$0xf]
  %v408 = vld [vmem:[%s1 + $0x5c0] sm:$0xf]
  %v409 = vld [vmem:[%s1 + $0x5c4] sm:$0xf]
  %v410 = vld [vmem:[%s1 + $0x5c8] sm:$0xf]
  %v411 = vld [vmem:[%s1 + $0x5cc] sm:$0xf]
  %v412 = vld [vmem:[%s1 + $0x5d0] sm:$0xf]
  %v413 = vld [vmem:[%s1 + $0x5d4] sm:$0xf]
  %v414 = vld [vmem:[%s1 + $0x5d8] sm:$0xf]
  %v415 = vld [vmem:[%s1 + $0x5dc] sm:$0xf]
  %v416 = vld [vmem:[%s1 + $0x5e0] sm:$0xf]
  %v417 = vld [vmem:[%s1 + $0x5e4] sm:$0xf]
  %v418 = vld [vmem:[%s1 + $0x5e8] sm:$0xf]
  %v419 = vld [vmem:[%s1 + $0x5ec] sm:$0xf]
  %v420 = vld [vmem:[%s1 + $0x5f0] sm:$0xf]
  %v421 = vld [vmem:[%s1 + $0x5f4] sm:$0xf]
  %v422 = vld [vmem:[%s1 + $0x5f8] sm:$0xf]
  %v423 = vld [vmem:[%s1 + $0x5fc] sm:$0xf]
  %v424 = vld [vmem:[%s1 + $0x600] sm:$0xf]
  %v425 = vld [vmem:[%s1 + $0x604] sm:$0xf]
  %v426 = vld [vmem:[%s1 + $0x608] sm:$0xf]
  %v427 = vld [vmem:[%s1 + $0x60c] sm:$0xf]
  %v428 = vld [vmem:[%s1 + $0x610] sm:$0xf]
  %v429 = vld [vmem:[%s1 + $0x614] sm:$0xf]
  %v430 = vld [vmem:[%s1 + $0x618] sm:$0xf]
  %v431 = vld [vmem:[%s1 + $0x61c] sm:$0xf]
  %v432 = vld [vmem:[%s1 + $0x620] sm:$0xf]
  %v433 = vld [vmem:[%s1 + $0x624] sm:$0xf]
  %v434 = vld [vmem:[%s1 + $0x628] sm:$0xf]
  %v435 = vld [vmem:[%s1 + $0x62c] sm:$0xf]
  %v436 = vld [vmem:[%s1 + $0x630] sm:$0xf]
  %v437 = vld [vmem:[%s1 + $0x634] sm:$0xf]
  %v438 = vld [vmem:[%s1 + $0x638] sm:$0xf]
  %v439 = vld [vmem:[%s1 + $0x63c] sm:$0xf]
  %v440 = vld [vmem:[%s2] sm:$0x1]
  %v442 = vlaneseq
  %v443 = vshrl.u32 %v442, 7
  %v444 = vsub.s32 0, %v443
  %v445 = vrot.slane %v440, %v444
  %v460 = vunpack.c.l.b16 %v27
  %v461 = vunpack.c.h.b16 %v27
  %v462 = vunpack.c.l.b16 %v28
  %v463 = vunpack.c.h.b16 %v28
  %v464 = vunpack.c.l.b16 %v29
  %v465 = vunpack.c.h.b16 %v29
  %v466 = vunpack.c.l.b16 %v30
  %v467 = vunpack.c.h.b16 %v30
  %v468 = vunpack.c.l.b16 %v31
  %v469 = vunpack.c.h.b16 %v31
  %v470 = vunpack.c.l.b16 %v32
  %v471 = vunpack.c.h.b16 %v32
  %v472 = vunpack.c.l.b16 %v33
  %v473 = vunpack.c.h.b16 %v33
  %v474 = vunpack.c.l.b16 %v34
  %v475 = vunpack.c.h.b16 %v34
  %v476 = vunpack.c.l.b16 %v35
  %v477 = vunpack.c.h.b16 %v35
  %v478 = vunpack.c.l.b16 %v36
  %v479 = vunpack.c.h.b16 %v36
  %v480 = vunpack.c.l.b16 %v37
  %v481 = vunpack.c.h.b16 %v37
  %v482 = vunpack.c.l.b16 %v38
  %v483 = vunpack.c.h.b16 %v38
  %v484 = vunpack.c.l.b16 %v39
  %v485 = vpack.c.b16 %v460, %v460
  %v486 = vpack.c.b16 %v461, %v461
  %v487 = vpack.c.b16 %v462, %v462
  %v488 = vpack.c.b16 %v463, %v463
  %v489 = vpack.c.b16 %v464, %v464
  %v490 = vpack.c.b16 %v465, %v465
  %v491 = vpack.c.b16 %v466, %v466
  %v492 = vpack.c.b16 %v467, %v467
  %v493 = vpack.c.b16 %v468, %v468
  %v494 = vpack.c.b16 %v469, %v469
  %v495 = vpack.c.b16 %v470, %v470
  %v496 = vpack.c.b16 %v471, %v471
  %v497 = vpack.c.b16 %v472, %v472
  %v498 = vpack.c.b16 %v473, %v473
  %v499 = vpack.c.b16 %v474, %v474
  %v500 = vpack.c.b16 %v475, %v475
  %v501 = vpack.c.b16 %v476, %v476
  %v502 = vpack.c.b16 %v477, %v477
  %v503 = vpack.c.b16 %v478, %v478
  %v504 = vpack.c.b16 %v479, %v479
  %v505 = vpack.c.b16 %v480, %v480
  %v506 = vpack.c.b16 %v481, %v481
  %v507 = vpack.c.b16 %v482, %v482
  %v508 = vpack.c.b16 %v483, %v483
  %v509 = vpack.c.b16 %v484, %v484
  %v935 = vunpack.c.l.b16 %v40
  %v936 = vunpack.c.l.b16 %v41
  %v937 = vunpack.c.l.b16 %v42
  %v938 = vunpack.c.l.b16 %v43
  %v939 = vunpack.c.l.b16 %v44
  %v940 = vunpack.c.l.b16 %v45
  %v941 = vunpack.c.l.b16 %v46
  %v942 = vunpack.c.l.b16 %v47
  %v943 = vunpack.c.l.b16 %v48
  %v944 = vunpack.c.l.b16 %v49
  %v945 = vunpack.c.l.b16 %v50
  %v946 = vunpack.c.l.b16 %v51
  %v947 = vunpack.c.l.b16 %v52
  %v948 = vunpack.c.l.b16 %v53
  %v949 = vunpack.c.l.b16 %v54
  %v950 = vunpack.c.l.b16 %v55
  %v951 = vunpack.c.l.b16 %v56
  %v952 = vunpack.c.l.b16 %v57
  %v953 = vunpack.c.l.b16 %v58
  %v954 = vunpack.c.l.b16 %v59
  %v955 = vunpack.c.l.b16 %v60
  %v956 = vunpack.c.l.b16 %v61
  %v957 = vunpack.c.l.b16 %v62
  %v958 = vunpack.c.l.b16 %v63
  %v959 = vunpack.c.l.b16 %v64
  %v960 = vunpack.c.l.b16 %v65
  %v961 = vunpack.c.l.b16 %v66
  %v962 = vunpack.c.l.b16 %v67
  %v963 = vunpack.c.l.b16 %v68
  %v964 = vunpack.c.l.b16 %v69
  %v965 = vunpack.c.l.b16 %v70
  %v966 = vunpack.c.l.b16 %v71
  %v967 = vunpack.c.l.b16 %v72
  %v968 = vunpack.c.l.b16 %v73
  %v969 = vunpack.c.l.b16 %v74
  %v970 = vunpack.c.l.b16 %v75
  %v971 = vunpack.c.l.b16 %v76
  %v972 = vunpack.c.l.b16 %v77
  %v973 = vunpack.c.l.b16 %v78
  %v974 = vunpack.c.l.b16 %v79
  %v975 = vunpack.c.l.b16 %v80
  %v976 = vunpack.c.l.b16 %v81
  %v977 = vunpack.c.l.b16 %v82
  %v978 = vunpack.c.l.b16 %v83
  %v979 = vunpack.c.l.b16 %v84
  %v980 = vunpack.c.l.b16 %v85
  %v981 = vunpack.c.l.b16 %v86
  %v982 = vunpack.c.l.b16 %v87
  %v983 = vunpack.c.l.b16 %v88
  %v984 = vunpack.c.l.b16 %v89
  %v985 = vunpack.c.l.b16 %v90
  %v986 = vunpack.c.l.b16 %v91
  %v987 = vunpack.c.l.b16 %v92
  %v988 = vunpack.c.l.b16 %v93
  %v989 = vunpack.c.l.b16 %v94
  %v990 = vunpack.c.l.b16 %v95
  %v991 = vunpack.c.l.b16 %v96
  %v992 = vunpack.c.l.b16 %v97
  %v993 = vunpack.c.l.b16 %v98
  %v994 = vunpack.c.l.b16 %v99
  %v995 = vunpack.c.l.b16 %v100
  %v996 = vunpack.c.l.b16 %v101
  %v997 = vunpack.c.l.b16 %v102
  %v998 = vunpack.c.l.b16 %v103
  %v999 = vunpack.c.l.b16 %v104
  %v1000 = vunpack.c.l.b16 %v105
  %v1001 = vunpack.c.l.b16 %v106
  %v1002 = vunpack.c.l.b16 %v107
  %v1003 = vunpack.c.l.b16 %v108
  %v1004 = vunpack.c.l.b16 %v109
  %v1005 = vunpack.c.l.b16 %v110
  %v1006 = vunpack.c.l.b16 %v111
  %v1007 = vunpack.c.l.b16 %v112
  %v1008 = vunpack.c.l.b16 %v113
  %v1009 = vunpack.c.l.b16 %v114
  %v1010 = vunpack.c.l.b16 %v115
  %v1011 = vunpack.c.l.b16 %v116
  %v1012 = vunpack.c.l.b16 %v117
  %v1013 = vunpack.c.l.b16 %v118
  %v1014 = vunpack.c.l.b16 %v119
  %v1015 = vunpack.c.l.b16 %v120
  %v1016 = vunpack.c.l.b16 %v121
  %v1017 = vunpack.c.l.b16 %v122
  %v1018 = vunpack.c.l.b16 %v123
  %v1019 = vunpack.c.l.b16 %v124
  %v1020 = vunpack.c.l.b16 %v125
  %v1021 = vunpack.c.l.b16 %v126
  %v1022 = vunpack.c.l.b16 %v127
  %v1023 = vunpack.c.l.b16 %v128
  %v1024 = vunpack.c.l.b16 %v129
  %v1025 = vunpack.c.l.b16 %v130
  %v1026 = vunpack.c.l.b16 %v131
  %v1027 = vunpack.c.l.b16 %v132
  %v1028 = vunpack.c.l.b16 %v133
  %v1029 = vunpack.c.l.b16 %v134
  %v1030 = vunpack.c.l.b16 %v135
  %v1031 = vunpack.c.l.b16 %v136
  %v1032 = vunpack.c.l.b16 %v137
  %v1033 = vunpack.c.l.b16 %v138
  %v1034 = vunpack.c.l.b16 %v139
  %v1035 = vunpack.c.l.b16 %v140
  %v1036 = vunpack.c.l.b16 %v141
  %v1037 = vunpack.c.l.b16 %v142
  %v1038 = vunpack.c.l.b16 %v143
  %v1039 = vunpack.c.l.b16 %v144
  %v1040 = vunpack.c.l.b16 %v145
  %v1041 = vunpack.c.l.b16 %v146
  %v1042 = vunpack.c.l.b16 %v147
  %v1043 = vunpack.c.l.b16 %v148
  %v1044 = vunpack.c.l.b16 %v149
  %v1045 = vunpack.c.l.b16 %v150
  %v1046 = vunpack.c.l.b16 %v151
  %v1047 = vunpack.c.l.b16 %v152
  %v1048 = vunpack.c.l.b16 %v153
  %v1049 = vunpack.c.l.b16 %v154
  %v1050 = vunpack.c.l.b16 %v155
  %v1051 = vunpack.c.l.b16 %v156
  %v1052 = vunpack.c.l.b16 %v157
  %v1053 = vunpack.c.l.b16 %v158
  %v1054 = vunpack.c.l.b16 %v159
  %v1055 = vunpack.c.l.b16 %v160
  %v1056 = vunpack.c.l.b16 %v161
  %v1057 = vunpack.c.l.b16 %v162
  %v1058 = vunpack.c.l.b16 %v163
  %v1059 = vunpack.c.l.b16 %v164
  %v1060 = vunpack.c.l.b16 %v165
  %v1061 = vunpack.c.l.b16 %v166
  %v1062 = vunpack.c.l.b16 %v167
  %v1063 = vunpack.c.l.b16 %v168
  %v1064 = vunpack.c.l.b16 %v169
  %v1065 = vunpack.c.l.b16 %v170
  %v1066 = vunpack.c.l.b16 %v171
  %v1067 = vunpack.c.l.b16 %v172
  %v1068 = vunpack.c.l.b16 %v173
  %v1069 = vunpack.c.l.b16 %v174
  %v1070 = vunpack.c.l.b16 %v175
  %v1071 = vunpack.c.l.b16 %v176
  %v1072 = vunpack.c.l.b16 %v177
  %v1073 = vunpack.c.l.b16 %v178
  %v1074 = vunpack.c.l.b16 %v179
  %v1075 = vunpack.c.l.b16 %v180
  %v1076 = vunpack.c.l.b16 %v181
  %v1077 = vunpack.c.l.b16 %v182
  %v1078 = vunpack.c.l.b16 %v183
  %v1079 = vunpack.c.l.b16 %v184
  %v1080 = vunpack.c.l.b16 %v185
  %v1081 = vunpack.c.l.b16 %v186
  %v1082 = vunpack.c.l.b16 %v187
  %v1083 = vunpack.c.l.b16 %v188
  %v1084 = vunpack.c.l.b16 %v189
  %v1085 = vunpack.c.l.b16 %v190
  %v1086 = vunpack.c.l.b16 %v191
  %v1087 = vunpack.c.l.b16 %v192
  %v1088 = vunpack.c.l.b16 %v193
  %v1089 = vunpack.c.l.b16 %v194
  %v1090 = vunpack.c.l.b16 %v195
  %v1091 = vunpack.c.l.b16 %v196
  %v1092 = vunpack.c.l.b16 %v197
  %v1093 = vunpack.c.l.b16 %v198
  %v1094 = vunpack.c.l.b16 %v199
  %v1095 = vunpack.c.l.b16 %v200
  %v1096 = vunpack.c.l.b16 %v201
  %v1097 = vunpack.c.l.b16 %v202
  %v1098 = vunpack.c.l.b16 %v203
  %v1099 = vunpack.c.l.b16 %v204
  %v1100 = vunpack.c.l.b16 %v205
  %v1101 = vunpack.c.l.b16 %v206
  %v1102 = vunpack.c.l.b16 %v207
  %v1103 = vunpack.c.l.b16 %v208
  %v1104 = vunpack.c.l.b16 %v209
  %v1105 = vunpack.c.l.b16 %v210
  %v1106 = vunpack.c.l.b16 %v211
  %v1107 = vunpack.c.l.b16 %v212
  %v1108 = vunpack.c.l.b16 %v213
  %v1109 = vunpack.c.l.b16 %v214
  %v1110 = vunpack.c.l.b16 %v215
  %v1111 = vunpack.c.l.b16 %v216
  %v1112 = vunpack.c.l.b16 %v217
  %v1113 = vunpack.c.l.b16 %v218
  %v1114 = vunpack.c.l.b16 %v219
  %v1115 = vunpack.c.l.b16 %v220
  %v1116 = vunpack.c.l.b16 %v221
  %v1117 = vunpack.c.l.b16 %v222
  %v1118 = vunpack.c.l.b16 %v223
  %v1119 = vunpack.c.l.b16 %v224
  %v1120 = vunpack.c.l.b16 %v225
  %v1121 = vunpack.c.l.b16 %v226
  %v1122 = vunpack.c.l.b16 %v227
  %v1123 = vunpack.c.l.b16 %v228
  %v1124 = vunpack.c.l.b16 %v229
  %v1125 = vunpack.c.l.b16 %v230
  %v1126 = vunpack.c.l.b16 %v231
  %v1127 = vunpack.c.l.b16 %v232
  %v1128 = vunpack.c.l.b16 %v233
  %v1129 = vunpack.c.l.b16 %v234
  %v1130 = vunpack.c.l.b16 %v235
  %v1131 = vunpack.c.l.b16 %v236
  %v1132 = vunpack.c.l.b16 %v237
  %v1133 = vunpack.c.l.b16 %v238
  %v1134 = vunpack.c.l.b16 %v239
  %v1135 = vunpack.c.l.b16 %v240
  %v1136 = vunpack.c.l.b16 %v241
  %v1137 = vunpack.c.l.b16 %v242
  %v1138 = vunpack.c.l.b16 %v243
  %v1139 = vunpack.c.l.b16 %v244
  %v1140 = vunpack.c.l.b16 %v245
  %v1141 = vunpack.c.l.b16 %v246
  %v1142 = vunpack.c.l.b16 %v247
  %v1143 = vunpack.c.l.b16 %v248
  %v1144 = vunpack.c.l.b16 %v249
  %v1145 = vunpack.c.l.b16 %v250
  %v1146 = vunpack.c.l.b16 %v251
  %v1147 = vunpack.c.l.b16 %v252
  %v1148 = vunpack.c.l.b16 %v253
  %v1149 = vunpack.c.l.b16 %v254
  %v1150 = vunpack.c.l.b16 %v255
  %v1151 = vunpack.c.l.b16 %v256
  %v1152 = vunpack.c.l.b16 %v257
  %v1153 = vunpack.c.l.b16 %v258
  %v1154 = vunpack.c.l.b16 %v259
  %v1155 = vunpack.c.l.b16 %v260
  %v1156 = vunpack.c.l.b16 %v261
  %v1157 = vunpack.c.l.b16 %v262
  %v1158 = vunpack.c.l.b16 %v263
  %v1159 = vunpack.c.l.b16 %v264
  %v1160 = vunpack.c.l.b16 %v265
  %v1161 = vunpack.c.l.b16 %v266
  %v1162 = vunpack.c.l.b16 %v267
  %v1163 = vunpack.c.l.b16 %v268
  %v1164 = vunpack.c.l.b16 %v269
  %v1165 = vunpack.c.l.b16 %v270
  %v1166 = vunpack.c.l.b16 %v271
  %v1167 = vunpack.c.l.b16 %v272
  %v1168 = vunpack.c.l.b16 %v273
  %v1169 = vunpack.c.l.b16 %v274
  %v1170 = vunpack.c.l.b16 %v275
  %v1171 = vunpack.c.l.b16 %v276
  %v1172 = vunpack.c.l.b16 %v277
  %v1173 = vunpack.c.l.b16 %v278
  %v1174 = vunpack.c.l.b16 %v279
  %v1175 = vunpack.c.l.b16 %v280
  %v1176 = vunpack.c.l.b16 %v281
  %v1177 = vunpack.c.l.b16 %v282
  %v1178 = vunpack.c.l.b16 %v283
  %v1179 = vunpack.c.l.b16 %v284
  %v1180 = vunpack.c.l.b16 %v285
  %v1181 = vunpack.c.l.b16 %v286
  %v1182 = vunpack.c.l.b16 %v287
  %v1183 = vunpack.c.l.b16 %v288
  %v1184 = vunpack.c.l.b16 %v289
  %v1185 = vunpack.c.l.b16 %v290
  %v1186 = vunpack.c.l.b16 %v291
  %v1187 = vunpack.c.l.b16 %v292
  %v1188 = vunpack.c.l.b16 %v293
  %v1189 = vunpack.c.l.b16 %v294
  %v1190 = vunpack.c.l.b16 %v295
  %v1191 = vunpack.c.l.b16 %v296
  %v1192 = vunpack.c.l.b16 %v297
  %v1193 = vunpack.c.l.b16 %v298
  %v1194 = vunpack.c.l.b16 %v299
  %v1195 = vunpack.c.l.b16 %v300
  %v1196 = vunpack.c.l.b16 %v301
  %v1197 = vunpack.c.l.b16 %v302
  %v1198 = vunpack.c.l.b16 %v303
  %v1199 = vunpack.c.l.b16 %v304
  %v1200 = vunpack.c.l.b16 %v305
  %v1201 = vunpack.c.l.b16 %v306
  %v1202 = vunpack.c.l.b16 %v307
  %v1203 = vunpack.c.l.b16 %v308
  %v1204 = vunpack.c.l.b16 %v309
  %v1205 = vunpack.c.l.b16 %v310
  %v1206 = vunpack.c.l.b16 %v311
  %v1207 = vunpack.c.l.b16 %v312
  %v1208 = vunpack.c.l.b16 %v313
  %v1209 = vunpack.c.l.b16 %v314
  %v1210 = vunpack.c.l.b16 %v315
  %v1211 = vunpack.c.l.b16 %v316
  %v1212 = vunpack.c.l.b16 %v317
  %v1213 = vunpack.c.l.b16 %v318
  %v1214 = vunpack.c.l.b16 %v319
  %v1215 = vunpack.c.l.b16 %v320
  %v1216 = vunpack.c.l.b16 %v321
  %v1217 = vunpack.c.l.b16 %v322
  %v1218 = vunpack.c.l.b16 %v323
  %v1219 = vunpack.c.l.b16 %v324
  %v1220 = vunpack.c.l.b16 %v325
  %v1221 = vunpack.c.l.b16 %v326
  %v1222 = vunpack.c.l.b16 %v327
  %v1223 = vunpack.c.l.b16 %v328
  %v1224 = vunpack.c.l.b16 %v329
  %v1225 = vunpack.c.l.b16 %v330
  %v1226 = vunpack.c.l.b16 %v331
  %v1227 = vunpack.c.l.b16 %v332
  %v1228 = vunpack.c.l.b16 %v333
  %v1229 = vunpack.c.l.b16 %v334
  %v1230 = vunpack.c.l.b16 %v335
  %v1231 = vunpack.c.l.b16 %v336
  %v1232 = vunpack.c.l.b16 %v337
  %v1233 = vunpack.c.l.b16 %v338
  %v1234 = vunpack.c.l.b16 %v339
  %v1235 = vunpack.c.l.b16 %v340
  %v1236 = vunpack.c.l.b16 %v341
  %v1237 = vunpack.c.l.b16 %v342
  %v1238 = vunpack.c.l.b16 %v343
  %v1239 = vunpack.c.l.b16 %v344
  %v1240 = vunpack.c.l.b16 %v345
  %v1241 = vunpack.c.l.b16 %v346
  %v1242 = vunpack.c.l.b16 %v347
  %v1243 = vunpack.c.l.b16 %v348
  %v1244 = vunpack.c.l.b16 %v349
  %v1245 = vunpack.c.l.b16 %v350
  %v1246 = vunpack.c.l.b16 %v351
  %v1247 = vunpack.c.l.b16 %v352
  %v1248 = vunpack.c.l.b16 %v353
  %v1249 = vunpack.c.l.b16 %v354
  %v1250 = vunpack.c.l.b16 %v355
  %v1251 = vunpack.c.l.b16 %v356
  %v1252 = vunpack.c.l.b16 %v357
  %v1253 = vunpack.c.l.b16 %v358
  %v1254 = vunpack.c.l.b16 %v359
  %v1255 = vunpack.c.l.b16 %v360
  %v1256 = vunpack.c.l.b16 %v361
  %v1257 = vunpack.c.l.b16 %v362
  %v1258 = vunpack.c.l.b16 %v363
  %v1259 = vunpack.c.l.b16 %v364
  %v1260 = vunpack.c.l.b16 %v365
  %v1261 = vunpack.c.l.b16 %v366
  %v1262 = vunpack.c.l.b16 %v367
  %v1263 = vunpack.c.l.b16 %v368
  %v1264 = vunpack.c.l.b16 %v369
  %v1265 = vunpack.c.l.b16 %v370
  %v1266 = vunpack.c.l.b16 %v371
  %v1267 = vunpack.c.l.b16 %v372
  %v1268 = vunpack.c.l.b16 %v373
  %v1269 = vunpack.c.l.b16 %v374
  %v1270 = vunpack.c.l.b16 %v375
  %v1271 = vunpack.c.l.b16 %v376
  %v1272 = vunpack.c.l.b16 %v377
  %v1273 = vunpack.c.l.b16 %v378
  %v1274 = vunpack.c.l.b16 %v379
  %v1275 = vunpack.c.l.b16 %v380
  %v1276 = vunpack.c.l.b16 %v381
  %v1277 = vunpack.c.l.b16 %v382
  %v1278 = vunpack.c.l.b16 %v383
  %v1279 = vunpack.c.l.b16 %v384
  %v1280 = vunpack.c.l.b16 %v385
  %v1281 = vunpack.c.l.b16 %v386
  %v1282 = vunpack.c.l.b16 %v387
  %v1283 = vunpack.c.l.b16 %v388
  %v1284 = vunpack.c.l.b16 %v389
  %v1285 = vunpack.c.l.b16 %v390
  %v1286 = vunpack.c.l.b16 %v391
  %v1287 = vunpack.c.l.b16 %v392
  %v1288 = vunpack.c.l.b16 %v393
  %v1289 = vunpack.c.l.b16 %v394
  %v1290 = vunpack.c.l.b16 %v395
  %v1291 = vunpack.c.l.b16 %v396
  %v1292 = vunpack.c.l.b16 %v397
  %v1293 = vunpack.c.l.b16 %v398
  %v1294 = vunpack.c.l.b16 %v399
  %v1295 = vunpack.c.l.b16 %v400
  %v1296 = vunpack.c.l.b16 %v401
  %v1297 = vunpack.c.l.b16 %v402
  %v1298 = vunpack.c.l.b16 %v403
  %v1299 = vunpack.c.l.b16 %v404
  %v1300 = vunpack.c.l.b16 %v405
  %v1301 = vunpack.c.l.b16 %v406
  %v1302 = vunpack.c.l.b16 %v407
  %v1303 = vunpack.c.l.b16 %v408
  %v1304 = vunpack.c.l.b16 %v409
  %v1305 = vunpack.c.l.b16 %v410
  %v1306 = vunpack.c.l.b16 %v411
  %v1307 = vunpack.c.l.b16 %v412
  %v1308 = vunpack.c.l.b16 %v413
  %v1309 = vunpack.c.l.b16 %v414
  %v1310 = vunpack.c.l.b16 %v415
  %v1311 = vunpack.c.l.b16 %v416
  %v1312 = vunpack.c.l.b16 %v417
  %v1313 = vunpack.c.l.b16 %v418
  %v1314 = vunpack.c.l.b16 %v419
  %v1315 = vunpack.c.l.b16 %v420
  %v1316 = vunpack.c.l.b16 %v421
  %v1317 = vunpack.c.l.b16 %v422
  %v1318 = vunpack.c.l.b16 %v423
  %v1319 = vunpack.c.l.b16 %v424
  %v1320 = vunpack.c.l.b16 %v425
  %v1321 = vunpack.c.l.b16 %v426
  %v1322 = vunpack.c.l.b16 %v427
  %v1323 = vunpack.c.l.b16 %v428
  %v1324 = vunpack.c.l.b16 %v429
  %v1325 = vunpack.c.l.b16 %v430
  %v1326 = vunpack.c.l.b16 %v431
  %v1327 = vunpack.c.l.b16 %v432
  %v1328 = vunpack.c.l.b16 %v433
  %v1329 = vunpack.c.l.b16 %v434
  %v1330 = vunpack.c.l.b16 %v435
  %v1331 = vunpack.c.l.b16 %v436
  %v1332 = vunpack.c.l.b16 %v437
  %v1333 = vunpack.c.l.b16 %v438
  %v1334 = vunpack.c.l.b16 %v439
  %v1335 = vpack.c.b16 %v936, %v935
  %v1336 = vpack.c.b16 %v938, %v937
  %v1337 = vpack.c.b16 %v940, %v939
  %v1338 = vpack.c.b16 %v942, %v941
  %v1339 = vpack.c.b16 %v944, %v943
  %v1340 = vpack.c.b16 %v946, %v945
  %v1341 = vpack.c.b16 %v948, %v947
  %v1342 = vpack.c.b16 %v950, %v949
  %v1343 = vpack.c.b16 %v952, %v951
  %v1344 = vpack.c.b16 %v954, %v953
  %v1345 = vpack.c.b16 %v956, %v955
  %v1346 = vpack.c.b16 %v958, %v957
  %v1347 = vpack.c.b16 %v960, %v959
  %v1348 = vpack.c.b16 %v962, %v961
  %v1349 = vpack.c.b16 %v964, %v963
  %v1350 = vpack.c.b16 %v966, %v965
  %v1351 = vpack.c.b16 %v968, %v967
  %v1352 = vpack.c.b16 %v970, %v969
  %v1353 = vpack.c.b16 %v972, %v971
  %v1354 = vpack.c.b16 %v974, %v973
  %v1355 = vpack.c.b16 %v976, %v975
  %v1356 = vpack.c.b16 %v978, %v977
  %v1357 = vpack.c.b16 %v980, %v979
  %v1358 = vpack.c.b16 %v982, %v981
  %v1359 = vpack.c.b16 %v984, %v983
  %v1360 = vpack.c.b16 %v986, %v985
  %v1361 = vpack.c.b16 %v988, %v987
  %v1362 = vpack.c.b16 %v990, %v989
  %v1363 = vpack.c.b16 %v992, %v991
  %v1364 = vpack.c.b16 %v994, %v993
  %v1365 = vpack.c.b16 %v996, %v995
  %v1366 = vpack.c.b16 %v998, %v997
  %v1367 = vpack.c.b16 %v1000, %v999
  %v1368 = vpack.c.b16 %v1002, %v1001
  %v1369 = vpack.c.b16 %v1004, %v1003
  %v1370 = vpack.c.b16 %v1006, %v1005
  %v1371 = vpack.c.b16 %v1008, %v1007
  %v1372 = vpack.c.b16 %v1010, %v1009
  %v1373 = vpack.c.b16 %v1012, %v1011
  %v1374 = vpack.c.b16 %v1014, %v1013
  %v1375 = vpack.c.b16 %v1016, %v1015
  %v1376 = vpack.c.b16 %v1018, %v1017
  %v1377 = vpack.c.b16 %v1020, %v1019
  %v1378 = vpack.c.b16 %v1022, %v1021
  %v1379 = vpack.c.b16 %v1024, %v1023
  %v1380 = vpack.c.b16 %v1026, %v1025
  %v1381 = vpack.c.b16 %v1028, %v1027
  %v1382 = vpack.c.b16 %v1030, %v1029
  %v1383 = vpack.c.b16 %v1032, %v1031
  %v1384 = vpack.c.b16 %v1034, %v1033
  %v1385 = vpack.c.b16 %v1036, %v1035
  %v1386 = vpack.c.b16 %v1038, %v1037
  %v1387 = vpack.c.b16 %v1040, %v1039
  %v1388 = vpack.c.b16 %v1042, %v1041
  %v1389 = vpack.c.b16 %v1044, %v1043
  %v1390 = vpack.c.b16 %v1046, %v1045
  %v1391 = vpack.c.b16 %v1048, %v1047
  %v1392 = vpack.c.b16 %v1050, %v1049
  %v1393 = vpack.c.b16 %v1052, %v1051
  %v1394 = vpack.c.b16 %v1054, %v1053
  %v1395 = vpack.c.b16 %v1056, %v1055
  %v1396 = vpack.c.b16 %v1058, %v1057
  %v1397 = vpack.c.b16 %v1060, %v1059
  %v1398 = vpack.c.b16 %v1062, %v1061
  %v1399 = vpack.c.b16 %v1064, %v1063
  %v1400 = vpack.c.b16 %v1066, %v1065
  %v1401 = vpack.c.b16 %v1068, %v1067
  %v1402 = vpack.c.b16 %v1070, %v1069
  %v1403 = vpack.c.b16 %v1072, %v1071
  %v1404 = vpack.c.b16 %v1074, %v1073
  %v1405 = vpack.c.b16 %v1076, %v1075
  %v1406 = vpack.c.b16 %v1078, %v1077
  %v1407 = vpack.c.b16 %v1080, %v1079
  %v1408 = vpack.c.b16 %v1082, %v1081
  %v1409 = vpack.c.b16 %v1084, %v1083
  %v1410 = vpack.c.b16 %v1086, %v1085
  %v1411 = vpack.c.b16 %v1088, %v1087
  %v1412 = vpack.c.b16 %v1090, %v1089
  %v1413 = vpack.c.b16 %v1092, %v1091
  %v1414 = vpack.c.b16 %v1094, %v1093
  %v1415 = vpack.c.b16 %v1096, %v1095
  %v1416 = vpack.c.b16 %v1098, %v1097
  %v1417 = vpack.c.b16 %v1100, %v1099
  %v1418 = vpack.c.b16 %v1102, %v1101
  %v1419 = vpack.c.b16 %v1104, %v1103
  %v1420 = vpack.c.b16 %v1106, %v1105
  %v1421 = vpack.c.b16 %v1108, %v1107
  %v1422 = vpack.c.b16 %v1110, %v1109
  %v1423 = vpack.c.b16 %v1112, %v1111
  %v1424 = vpack.c.b16 %v1114, %v1113
  %v1425 = vpack.c.b16 %v1116, %v1115
  %v1426 = vpack.c.b16 %v1118, %v1117
  %v1427 = vpack.c.b16 %v1120, %v1119
  %v1428 = vpack.c.b16 %v1122, %v1121
  %v1429 = vpack.c.b16 %v1124, %v1123
  %v1430 = vpack.c.b16 %v1126, %v1125
  %v1431 = vpack.c.b16 %v1128, %v1127
  %v1432 = vpack.c.b16 %v1130, %v1129
  %v1433 = vpack.c.b16 %v1132, %v1131
  %v1434 = vpack.c.b16 %v1134, %v1133
  %v1435 = vpack.c.b16 %v1136, %v1135
  %v1436 = vpack.c.b16 %v1138, %v1137
  %v1437 = vpack.c.b16 %v1140, %v1139
  %v1438 = vpack.c.b16 %v1142, %v1141
  %v1439 = vpack.c.b16 %v1144, %v1143
  %v1440 = vpack.c.b16 %v1146, %v1145
  %v1441 = vpack.c.b16 %v1148, %v1147
  %v1442 = vpack.c.b16 %v1150, %v1149
  %v1443 = vpack.c.b16 %v1152, %v1151
  %v1444 = vpack.c.b16 %v1154, %v1153
  %v1445 = vpack.c.b16 %v1156, %v1155
  %v1446 = vpack.c.b16 %v1158, %v1157
  %v1447 = vpack.c.b16 %v1160, %v1159
  %v1448 = vpack.c.b16 %v1162, %v1161
  %v1449 = vpack.c.b16 %v1164, %v1163
  %v1450 = vpack.c.b16 %v1166, %v1165
  %v1451 = vpack.c.b16 %v1168, %v1167
  %v1452 = vpack.c.b16 %v1170, %v1169
  %v1453 = vpack.c.b16 %v1172, %v1171
  %v1454 = vpack.c.b16 %v1174, %v1173
  %v1455 = vpack.c.b16 %v1176, %v1175
  %v1456 = vpack.c.b16 %v1178, %v1177
  %v1457 = vpack.c.b16 %v1180, %v1179
  %v1458 = vpack.c.b16 %v1182, %v1181
  %v1459 = vpack.c.b16 %v1184, %v1183
  %v1460 = vpack.c.b16 %v1186, %v1185
  %v1461 = vpack.c.b16 %v1188, %v1187
  %v1462 = vpack.c.b16 %v1190, %v1189
  %v1463 = vpack.c.b16 %v1192, %v1191
  %v1464 = vpack.c.b16 %v1194, %v1193
  %v1465 = vpack.c.b16 %v1196, %v1195
  %v1466 = vpack.c.b16 %v1198, %v1197
  %v1467 = vpack.c.b16 %v1200, %v1199
  %v1468 = vpack.c.b16 %v1202, %v1201
  %v1469 = vpack.c.b16 %v1204, %v1203
  %v1470 = vpack.c.b16 %v1206, %v1205
  %v1471 = vpack.c.b16 %v1208, %v1207
  %v1472 = vpack.c.b16 %v1210, %v1209
  %v1473 = vpack.c.b16 %v1212, %v1211
  %v1474 = vpack.c.b16 %v1214, %v1213
  %v1475 = vpack.c.b16 %v1216, %v1215
  %v1476 = vpack.c.b16 %v1218, %v1217
  %v1477 = vpack.c.b16 %v1220, %v1219
  %v1478 = vpack.c.b16 %v1222, %v1221
  %v1479 = vpack.c.b16 %v1224, %v1223
  %v1480 = vpack.c.b16 %v1226, %v1225
  %v1481 = vpack.c.b16 %v1228, %v1227
  %v1482 = vpack.c.b16 %v1230, %v1229
  %v1483 = vpack.c.b16 %v1232, %v1231
  %v1484 = vpack.c.b16 %v1234, %v1233
  %v1485 = vpack.c.b16 %v1236, %v1235
  %v1486 = vpack.c.b16 %v1238, %v1237
  %v1487 = vpack.c.b16 %v1240, %v1239
  %v1488 = vpack.c.b16 %v1242, %v1241
  %v1489 = vpack.c.b16 %v1244, %v1243
  %v1490 = vpack.c.b16 %v1246, %v1245
  %v1491 = vpack.c.b16 %v1248, %v1247
  %v1492 = vpack.c.b16 %v1250, %v1249
  %v1493 = vpack.c.b16 %v1252, %v1251
  %v1494 = vpack.c.b16 %v1254, %v1253
  %v1495 = vpack.c.b16 %v1256, %v1255
  %v1496 = vpack.c.b16 %v1258, %v1257
  %v1497 = vpack.c.b16 %v1260, %v1259
  %v1498 = vpack.c.b16 %v1262, %v1261
  %v1499 = vpack.c.b16 %v1264, %v1263
  %v1500 = vpack.c.b16 %v1266, %v1265
  %v1501 = vpack.c.b16 %v1268, %v1267
  %v1502 = vpack.c.b16 %v1270, %v1269
  %v1503 = vpack.c.b16 %v1272, %v1271
  %v1504 = vpack.c.b16 %v1274, %v1273
  %v1505 = vpack.c.b16 %v1276, %v1275
  %v1506 = vpack.c.b16 %v1278, %v1277
  %v1507 = vpack.c.b16 %v1280, %v1279
  %v1508 = vpack.c.b16 %v1282, %v1281
  %v1509 = vpack.c.b16 %v1284, %v1283
  %v1510 = vpack.c.b16 %v1286, %v1285
  %v1511 = vpack.c.b16 %v1288, %v1287
  %v1512 = vpack.c.b16 %v1290, %v1289
  %v1513 = vpack.c.b16 %v1292, %v1291
  %v1514 = vpack.c.b16 %v1294, %v1293
  %v1515 = vpack.c.b16 %v1296, %v1295
  %v1516 = vpack.c.b16 %v1298, %v1297
  %v1517 = vpack.c.b16 %v1300, %v1299
  %v1518 = vpack.c.b16 %v1302, %v1301
  %v1519 = vpack.c.b16 %v1304, %v1303
  %v1520 = vpack.c.b16 %v1306, %v1305
  %v1521 = vpack.c.b16 %v1308, %v1307
  %v1522 = vpack.c.b16 %v1310, %v1309
  %v1523 = vpack.c.b16 %v1312, %v1311
  %v1524 = vpack.c.b16 %v1314, %v1313
  %v1525 = vpack.c.b16 %v1316, %v1315
  %v1526 = vpack.c.b16 %v1318, %v1317
  %v1527 = vpack.c.b16 %v1320, %v1319
  %v1528 = vpack.c.b16 %v1322, %v1321
  %v1529 = vpack.c.b16 %v1324, %v1323
  %v1530 = vpack.c.b16 %v1326, %v1325
  %v1531 = vpack.c.b16 %v1328, %v1327
  %v1532 = vpack.c.b16 %v1330, %v1329
  %v1533 = vpack.c.b16 %v1332, %v1331
  %v1534 = vpack.c.b16 %v1334, %v1333
  %1735 = vmatprep.subr.bf16.mxu0 0
  %1736 = vmatpush1.bf16.msra.mxu0 %v1342
  %1737 = vmatprep.subr.bf16.mxu0 0
  %1738 = vmatpush1.bf16.msra.mxu0 %v1341
  %1739 = vmatprep.subr.bf16.mxu0 0
  %1740 = vmatpush1.bf16.msra.mxu0 %v1340
  %1741 = vmatprep.subr.bf16.mxu0 0
  %1742 = vmatpush1.bf16.msra.mxu0 %v1339
  %1743 = vmatprep.subr.bf16.mxu0 0
  %1744 = vmatpush1.bf16.msra.mxu0 %v1338
  %1745 = vmatprep.subr.bf16.mxu0 0
  %1746 = vmatpush1.bf16.msra.mxu0 %v1337
  %1747 = vmatprep.subr.bf16.mxu0 0
  %1748 = vmatpush1.bf16.msra.mxu0 %v1336
  %1749 = vmatprep.subr.bf16.mxu0 0
  %1750 = vmatpush1.bf16.msra.mxu0 %v1335
  %1751 = vmatprep.subr.bf16.mxu0 0
  %1752 = vmatpush2.bf16.msra.mxu0 %v1350
  %1753 = vmatprep.subr.bf16.mxu0 0
  %1754 = vmatpush2.bf16.msra.mxu0 %v1349
  %1755 = vmatprep.subr.bf16.mxu0 0
  %1756 = vmatpush2.bf16.msra.mxu0 %v1348
  %1757 = vmatprep.subr.bf16.mxu0 0
  %1758 = vmatpush2.bf16.msra.mxu0 %v1347
  %1759 = vmatprep.subr.bf16.mxu0 0
  %1760 = vmatpush2.bf16.msra.mxu0 %v1346
  %1761 = vmatprep.subr.bf16.mxu0 0
  %1762 = vmatpush2.bf16.msra.mxu0 %v1345
  %1763 = vmatprep.subr.bf16.mxu0 0
  %1764 = vmatpush2.bf16.msra.mxu0 %v1344
  %1765 = vmatprep.subr.bf16.mxu0 0
  %1766 = vmatpush2.bf16.msra.mxu0 %v1343
  %1767 = vmatprep.mubr.bf16.mxu0 %v486
  %1768 = vmatmul.mubr.bf16.gmra.mxu0 %v485
  %v1769 = vpop.f32.mrf.mxu0
  %v1770 = vadd.f32 %v445, %v1769
  %v1771 = vpop.f32.mrf.mxu0
  %v1772 = vpop.f32.mrf.mxu0
  %v1773 = vpop.f32.mrf.mxu0
  %1774 = vdwg.mxu0
  %1775 = vmatprep.subr.bf16.mxu0 0
  %1776 = vmatpush1.bf16.msra.mxu0 %v1358
  %1777 = vmatprep.subr.bf16.mxu0 0
  %1778 = vmatpush1.bf16.msra.mxu0 %v1357
  %1779 = vmatprep.subr.bf16.mxu0 0
  %1780 = vmatpush1.bf16.msra.mxu0 %v1356
  %1781 = vmatprep.subr.bf16.mxu0 0
  %1782 = vmatpush1.bf16.msra.mxu0 %v1355
  %1783 = vmatprep.subr.bf16.mxu0 0
  %1784 = vmatpush1.bf16.msra.mxu0 %v1354
  %1785 = vmatprep.subr.bf16.mxu0 0
  %1786 = vmatpush1.bf16.msra.mxu0 %v1353
  %1787 = vmatprep.subr.bf16.mxu0 0
  %1788 = vmatpush1.bf16.msra.mxu0 %v1352
  %1789 = vmatprep.subr.bf16.mxu0 0
  %1790 = vmatpush1.bf16.msra.mxu0 %v1351
  %1791 = vmatprep.subr.bf16.mxu0 0
  %1792 = vmatpush2.bf16.msra.mxu0 %v1366
  %1793 = vmatprep.subr.bf16.mxu0 0
  %1794 = vmatpush2.bf16.msra.mxu0 %v1365
  %1795 = vmatprep.subr.bf16.mxu0 0
  %1796 = vmatpush2.bf16.msra.mxu0 %v1364
  %1797 = vmatprep.subr.bf16.mxu0 0
  %1798 = vmatpush2.bf16.msra.mxu0 %v1363
  %1799 = vmatprep.subr.bf16.mxu0 0
  %1800 = vmatpush2.bf16.msra.mxu0 %v1362
  %1801 = vmatprep.subr.bf16.mxu0 0
  %1802 = vmatpush2.bf16.msra.mxu0 %v1361
  %1803 = vmatprep.subr.bf16.mxu0 0
  %1804 = vmatpush2.bf16.msra.mxu0 %v1360
  %1805 = vmatprep.subr.bf16.mxu0 0
  %1806 = vmatpush2.bf16.msra.mxu0 %v1359
  %1807 = vmatprep.mubr.bf16.mxu0 %v488
  %1808 = vmatmul.mubr.bf16.gmra.mxu0 %v487
  %v1809 = vpop.f32.mrf.mxu0
  %v1810 = vadd.f32 %v1770, %v1809
  %v1811 = vpop.f32.mrf.mxu0
  %v1812 = vpop.f32.mrf.mxu0
  %v1813 = vpop.f32.mrf.mxu0
  %1814 = vdwg.mxu0
  %1815 = vmatprep.subr.bf16.mxu0 0
  %1816 = vmatpush1.bf16.msra.mxu0 %v1374
  %1817 = vmatprep.subr.bf16.mxu0 0
  %1818 = vmatpush1.bf16.msra.mxu0 %v1373
  %1819 = vmatprep.subr.bf16.mxu0 0
  %1820 = vmatpush1.bf16.msra.mxu0 %v1372
  %1821 = vmatprep.subr.bf16.mxu0 0
  %1822 = vmatpush1.bf16.msra.mxu0 %v1371
  %1823 = vmatprep.subr.bf16.mxu0 0
  %1824 = vmatpush1.bf16.msra.mxu0 %v1370
  %1825 = vmatprep.subr.bf16.mxu0 0
  %1826 = vmatpush1.bf16.msra.mxu0 %v1369
  %1827 = vmatprep.subr.bf16.mxu0 0
  %1828 = vmatpush1.bf16.msra.mxu0 %v1368
  %1829 = vmatprep.subr.bf16.mxu0 0
  %1830 = vmatpush1.bf16.msra.mxu0 %v1367
  %1831 = vmatprep.subr.bf16.mxu0 0
  %1832 = vmatpush2.bf16.msra.mxu0 %v1382
  %1833 = vmatprep.subr.bf16.mxu0 0
  %1834 = vmatpush2.bf16.msra.mxu0 %v1381
  %1835 = vmatprep.subr.bf16.mxu0 0
  %1836 = vmatpush2.bf16.msra.mxu0 %v1380
  %1837 = vmatprep.subr.bf16.mxu0 0
  %1838 = vmatpush2.bf16.msra.mxu0 %v1379
  %1839 = vmatprep.subr.bf16.mxu0 0
  %1840 = vmatpush2.bf16.msra.mxu0 %v1378
  %1841 = vmatprep.subr.bf16.mxu0 0
  %1842 = vmatpush2.bf16.msra.mxu0 %v1377
  %1843 = vmatprep.subr.bf16.mxu0 0
  %1844 = vmatpush2.bf16.msra.mxu0 %v1376
  %1845 = vmatprep.subr.bf16.mxu0 0
  %1846 = vmatpush2.bf16.msra.mxu0 %v1375
  %1847 = vmatprep.mubr.bf16.mxu0 %v490
  %1848 = vmatmul.mubr.bf16.gmra.mxu0 %v489
  %v1849 = vpop.f32.mrf.mxu0
  %v1850 = vadd.f32 %v1810, %v1849
  %v1851 = vpop.f32.mrf.mxu0
  %v1852 = vpop.f32.mrf.mxu0
  %v1853 = vpop.f32.mrf.mxu0
  %1854 = vdwg.mxu0
  %1855 = vmatprep.subr.bf16.mxu0 0
  %1856 = vmatpush1.bf16.msra.mxu0 %v1390
  %1857 = vmatprep.subr.bf16.mxu0 0
  %1858 = vmatpush1.bf16.msra.mxu0 %v1389
  %1859 = vmatprep.subr.bf16.mxu0 0
  %1860 = vmatpush1.bf16.msra.mxu0 %v1388
  %1861 = vmatprep.subr.bf16.mxu0 0
  %1862 = vmatpush1.bf16.msra.mxu0 %v1387
  %1863 = vmatprep.subr.bf16.mxu0 0
  %1864 = vmatpush1.bf16.msra.mxu0 %v1386
  %1865 = vmatprep.subr.bf16.mxu0 0
  %1866 = vmatpush1.bf16.msra.mxu0 %v1385
  %1867 = vmatprep.subr.bf16.mxu0 0
  %1868 = vmatpush1.bf16.msra.mxu0 %v1384
  %1869 = vmatprep.subr.bf16.mxu0 0
  %1870 = vmatpush1.bf16.msra.mxu0 %v1383
  %1871 = vmatprep.subr.bf16.mxu0 0
  %1872 = vmatpush2.bf16.msra.mxu0 %v1398
  %1873 = vmatprep.subr.bf16.mxu0 0
  %1874 = vmatpush2.bf16.msra.mxu0 %v1397
  %1875 = vmatprep.subr.bf16.mxu0 0
  %1876 = vmatpush2.bf16.msra.mxu0 %v1396
  %1877 = vmatprep.subr.bf16.mxu0 0
  %1878 = vmatpush2.bf16.msra.mxu0 %v1395
  %1879 = vmatprep.subr.bf16.mxu0 0
  %1880 = vmatpush2.bf16.msra.mxu0 %v1394
  %1881 = vmatprep.subr.bf16.mxu0 0
  %1882 = vmatpush2.bf16.msra.mxu0 %v1393
  %1883 = vmatprep.subr.bf16.mxu0 0
  %1884 = vmatpush2.bf16.msra.mxu0 %v1392
  %1885 = vmatprep.subr.bf16.mxu0 0
  %1886 = vmatpush2.bf16.msra.mxu0 %v1391
  %1887 = vmatprep.mubr.bf16.mxu0 %v492
  %1888 = vmatmul.mubr.bf16.gmra.mxu0 %v491
  %v1889 = vpop.f32.mrf.mxu0
  %v1890 = vadd.f32 %v1850, %v1889
  %v1891 = vpop.f32.mrf.mxu0
  %v1892 = vpop.f32.mrf.mxu0
  %v1893 = vpop.f32.mrf.mxu0
  %1894 = vdwg.mxu0
  %1895 = vmatprep.subr.bf16.mxu0 0
  %1896 = vmatpush1.bf16.msra.mxu0 %v1406
  %1897 = vmatprep.subr.bf16.mxu0 0
  %1898 = vmatpush1.bf16.msra.mxu0 %v1405
  %1899 = vmatprep.subr.bf16.mxu0 0
  %1900 = vmatpush1.bf16.msra.mxu0 %v1404
  %1901 = vmatprep.subr.bf16.mxu0 0
  %1902 = vmatpush1.bf16.msra.mxu0 %v1403
  %1903 = vmatprep.subr.bf16.mxu0 0
  %1904 = vmatpush1.bf16.msra.mxu0 %v1402
  %1905 = vmatprep.subr.bf16.mxu0 0
  %1906 = vmatpush1.bf16.msra.mxu0 %v1401
  %1907 = vmatprep.subr.bf16.mxu0 0
  %1908 = vmatpush1.bf16.msra.mxu0 %v1400
  %1909 = vmatprep.subr.bf16.mxu0 0
  %1910 = vmatpush1.bf16.msra.mxu0 %v1399
  %1911 = vmatprep.subr.bf16.mxu0 0
  %1912 = vmatpush2.bf16.msra.mxu0 %v1414
  %1913 = vmatprep.subr.bf16.mxu0 0
  %1914 = vmatpush2.bf16.msra.mxu0 %v1413
  %1915 = vmatprep.subr.bf16.mxu0 0
  %1916 = vmatpush2.bf16.msra.mxu0 %v1412
  %1917 = vmatprep.subr.bf16.mxu0 0
  %1918 = vmatpush2.bf16.msra.mxu0 %v1411
  %1919 = vmatprep.subr.bf16.mxu0 0
  %1920 = vmatpush2.bf16.msra.mxu0 %v1410
  %1921 = vmatprep.subr.bf16.mxu0 0
  %1922 = vmatpush2.bf16.msra.mxu0 %v1409
  %1923 = vmatprep.subr.bf16.mxu0 0
  %1924 = vmatpush2.bf16.msra.mxu0 %v1408
  %1925 = vmatprep.subr.bf16.mxu0 0
  %1926 = vmatpush2.bf16.msra.mxu0 %v1407
  %1927 = vmatprep.mubr.bf16.mxu0 %v494
  %1928 = vmatmul.mubr.bf16.gmra.mxu0 %v493
  %v1929 = vpop.f32.mrf.mxu0
  %v1930 = vadd.f32 %v1890, %v1929
  %v1931 = vpop.f32.mrf.mxu0
  %v1932 = vpop.f32.mrf.mxu0
  %v1933 = vpop.f32.mrf.mxu0
  %1934 = vdwg.mxu0
  %1935 = vmatprep.subr.bf16.mxu0 0
  %1936 = vmatpush1.bf16.msra.mxu0 %v1422
  %1937 = vmatprep.subr.bf16.mxu0 0
  %1938 = vmatpush1.bf16.msra.mxu0 %v1421
  %1939 = vmatprep.subr.bf16.mxu0 0
  %1940 = vmatpush1.bf16.msra.mxu0 %v1420
  %1941 = vmatprep.subr.bf16.mxu0 0
  %1942 = vmatpush1.bf16.msra.mxu0 %v1419
  %1943 = vmatprep.subr.bf16.mxu0 0
  %1944 = vmatpush1.bf16.msra.mxu0 %v1418
  %1945 = vmatprep.subr.bf16.mxu0 0
  %1946 = vmatpush1.bf16.msra.mxu0 %v1417
  %1947 = vmatprep.subr.bf16.mxu0 0
  %1948 = vmatpush1.bf16.msra.mxu0 %v1416
  %1949 = vmatprep.subr.bf16.mxu0 0
  %1950 = vmatpush1.bf16.msra.mxu0 %v1415
  %1951 = vmatprep.subr.bf16.mxu0 0
  %1952 = vmatpush2.bf16.msra.mxu0 %v1430
  %1953 = vmatprep.subr.bf16.mxu0 0
  %1954 = vmatpush2.bf16.msra.mxu0 %v1429
  %1955 = vmatprep.subr.bf16.mxu0 0
  %1956 = vmatpush2.bf16.msra.mxu0 %v1428
  %1957 = vmatprep.subr.bf16.mxu0 0
  %1958 = vmatpush2.bf16.msra.mxu0 %v1427
  %1959 = vmatprep.subr.bf16.mxu0 0
  %1960 = vmatpush2.bf16.msra.mxu0 %v1426
  %1961 = vmatprep.subr.bf16.mxu0 0
  %1962 = vmatpush2.bf16.msra.mxu0 %v1425
  %1963 = vmatprep.subr.bf16.mxu0 0
  %1964 = vmatpush2.bf16.msra.mxu0 %v1424
  %1965 = vmatprep.subr.bf16.mxu0 0
  %1966 = vmatpush2.bf16.msra.mxu0 %v1423
  %1967 = vmatprep.mubr.bf16.mxu0 %v496
  %1968 = vmatmul.mubr.bf16.gmra.mxu0 %v495
  %v1969 = vpop.f32.mrf.mxu0
  %v1970 = vadd.f32 %v1930, %v1969
  %v1971 = vpop.f32.mrf.mxu0
  %v1972 = vpop.f32.mrf.mxu0
  %v1973 = vpop.f32.mrf.mxu0
  %1974 = vdwg.mxu0
  %1975 = vmatprep.subr.bf16.mxu0 0
  %1976 = vmatpush1.bf16.msra.mxu0 %v1438
  %1977 = vmatprep.subr.bf16.mxu0 0
  %1978 = vmatpush1.bf16.msra.mxu0 %v1437
  %1979 = vmatprep.subr.bf16.mxu0 0
  %1980 = vmatpush1.bf16.msra.mxu0 %v1436
  %1981 = vmatprep.subr.bf16.mxu0 0
  %1982 = vmatpush1.bf16.msra.mxu0 %v1435
  %1983 = vmatprep.subr.bf16.mxu0 0
  %1984 = vmatpush1.bf16.msra.mxu0 %v1434
  %1985 = vmatprep.subr.bf16.mxu0 0
  %1986 = vmatpush1.bf16.msra.mxu0 %v1433
  %1987 = vmatprep.subr.bf16.mxu0 0
  %1988 = vmatpush1.bf16.msra.mxu0 %v1432
  %1989 = vmatprep.subr.bf16.mxu0 0
  %1990 = vmatpush1.bf16.msra.mxu0 %v1431
  %1991 = vmatprep.subr.bf16.mxu0 0
  %1992 = vmatpush2.bf16.msra.mxu0 %v1446
  %1993 = vmatprep.subr.bf16.mxu0 0
  %1994 = vmatpush2.bf16.msra.mxu0 %v1445
  %1995 = vmatprep.subr.bf16.mxu0 0
  %1996 = vmatpush2.bf16.msra.mxu0 %v1444
  %1997 = vmatprep.subr.bf16.mxu0 0
  %1998 = vmatpush2.bf16.msra.mxu0 %v1443
  %1999 = vmatprep.subr.bf16.mxu0 0
  %2000 = vmatpush2.bf16.msra.mxu0 %v1442
  %2001 = vmatprep.subr.bf16.mxu0 0
  %2002 = vmatpush2.bf16.msra.mxu0 %v1441
  %2003 = vmatprep.subr.bf16.mxu0 0
  %2004 = vmatpush2.bf16.msra.mxu0 %v1440
  %2005 = vmatprep.subr.bf16.mxu0 0
  %2006 = vmatpush2.bf16.msra.mxu0 %v1439
  %2007 = vmatprep.mubr.bf16.mxu0 %v498
  %2008 = vmatmul.mubr.bf16.gmra.mxu0 %v497
  %v2009 = vpop.f32.mrf.mxu0
  %v2010 = vadd.f32 %v1970, %v2009
  %v2011 = vpop.f32.mrf.mxu0
  %v2012 = vpop.f32.mrf.mxu0
  %v2013 = vpop.f32.mrf.mxu0
  %2014 = vdwg.mxu0
  %2015 = vmatprep.subr.bf16.mxu0 0
  %2016 = vmatpush1.bf16.msra.mxu0 %v1454
  %2017 = vmatprep.subr.bf16.mxu0 0
  %2018 = vmatpush1.bf16.msra.mxu0 %v1453
  %2019 = vmatprep.subr.bf16.mxu0 0
  %2020 = vmatpush1.bf16.msra.mxu0 %v1452
  %2021 = vmatprep.subr.bf16.mxu0 0
  %2022 = vmatpush1.bf16.msra.mxu0 %v1451
  %2023 = vmatprep.subr.bf16.mxu0 0
  %2024 = vmatpush1.bf16.msra.mxu0 %v1450
  %2025 = vmatprep.subr.bf16.mxu0 0
  %2026 = vmatpush1.bf16.msra.mxu0 %v1449
  %2027 = vmatprep.subr.bf16.mxu0 0
  %2028 = vmatpush1.bf16.msra.mxu0 %v1448
  %2029 = vmatprep.subr.bf16.mxu0 0
  %2030 = vmatpush1.bf16.msra.mxu0 %v1447
  %2031 = vmatprep.subr.bf16.mxu0 0
  %2032 = vmatpush2.bf16.msra.mxu0 %v1462
  %2033 = vmatprep.subr.bf16.mxu0 0
  %2034 = vmatpush2.bf16.msra.mxu0 %v1461
  %2035 = vmatprep.subr.bf16.mxu0 0
  %2036 = vmatpush2.bf16.msra.mxu0 %v1460
  %2037 = vmatprep.subr.bf16.mxu0 0
  %2038 = vmatpush2.bf16.msra.mxu0 %v1459
  %2039 = vmatprep.subr.bf16.mxu0 0
  %2040 = vmatpush2.bf16.msra.mxu0 %v1458
  %2041 = vmatprep.subr.bf16.mxu0 0
  %2042 = vmatpush2.bf16.msra.mxu0 %v1457
  %2043 = vmatprep.subr.bf16.mxu0 0
  %2044 = vmatpush2.bf16.msra.mxu0 %v1456
  %2045 = vmatprep.subr.bf16.mxu0 0
  %2046 = vmatpush2.bf16.msra.mxu0 %v1455
  %2047 = vmatprep.mubr.bf16.mxu0 %v500
  %2048 = vmatmul.mubr.bf16.gmra.mxu0 %v499
  %v2049 = vpop.f32.mrf.mxu0
  %v2050 = vadd.f32 %v2010, %v2049
  %v2051 = vpop.f32.mrf.mxu0
  %v2052 = vpop.f32.mrf.mxu0
  %v2053 = vpop.f32.mrf.mxu0
  %2054 = vdwg.mxu0
  %2055 = vmatprep.subr.bf16.mxu0 0
  %2056 = vmatpush1.bf16.msra.mxu0 %v1470
  %2057 = vmatprep.subr.bf16.mxu0 0
  %2058 = vmatpush1.bf16.msra.mxu0 %v1469
  %2059 = vmatprep.subr.bf16.mxu0 0
  %2060 = vmatpush1.bf16.msra.mxu0 %v1468
  %2061 = vmatprep.subr.bf16.mxu0 0
  %2062 = vmatpush1.bf16.msra.mxu0 %v1467
  %2063 = vmatprep.subr.bf16.mxu0 0
  %2064 = vmatpush1.bf16.msra.mxu0 %v1466
  %2065 = vmatprep.subr.bf16.mxu0 0
  %2066 = vmatpush1.bf16.msra.mxu0 %v1465
  %2067 = vmatprep.subr.bf16.mxu0 0
  %2068 = vmatpush1.bf16.msra.mxu0 %v1464
  %2069 = vmatprep.subr.bf16.mxu0 0
  %2070 = vmatpush1.bf16.msra.mxu0 %v1463
  %2071 = vmatprep.subr.bf16.mxu0 0
  %2072 = vmatpush2.bf16.msra.mxu0 %v1478
  %2073 = vmatprep.subr.bf16.mxu0 0
  %2074 = vmatpush2.bf16.msra.mxu0 %v1477
  %2075 = vmatprep.subr.bf16.mxu0 0
  %2076 = vmatpush2.bf16.msra.mxu0 %v1476
  %2077 = vmatprep.subr.bf16.mxu0 0
  %2078 = vmatpush2.bf16.msra.mxu0 %v1475
  %2079 = vmatprep.subr.bf16.mxu0 0
  %2080 = vmatpush2.bf16.msra.mxu0 %v1474
  %2081 = vmatprep.subr.bf16.mxu0 0
  %2082 = vmatpush2.bf16.msra.mxu0 %v1473
  %2083 = vmatprep.subr.bf16.mxu0 0
  %2084 = vmatpush2.bf16.msra.mxu0 %v1472
  %2085 = vmatprep.subr.bf16.mxu0 0
  %2086 = vmatpush2.bf16.msra.mxu0 %v1471
  %2087 = vmatprep.mubr.bf16.mxu0 %v502
  %2088 = vmatmul.mubr.bf16.gmra.mxu0 %v501
  %v2089 = vpop.f32.mrf.mxu0
  %v2090 = vadd.f32 %v2050, %v2089
  %v2091 = vpop.f32.mrf.mxu0
  %v2092 = vpop.f32.mrf.mxu0
  %v2093 = vpop.f32.mrf.mxu0
  %2094 = vdwg.mxu0
  %2095 = vmatprep.subr.bf16.mxu0 0
  %2096 = vmatpush1.bf16.msra.mxu0 %v1486
  %2097 = vmatprep.subr.bf16.mxu0 0
  %2098 = vmatpush1.bf16.msra.mxu0 %v1485
  %2099 = vmatprep.subr.bf16.mxu0 0
  %2100 = vmatpush1.bf16.msra.mxu0 %v1484
  %2101 = vmatprep.subr.bf16.mxu0 0
  %2102 = vmatpush1.bf16.msra.mxu0 %v1483
  %2103 = vmatprep.subr.bf16.mxu0 0
  %2104 = vmatpush1.bf16.msra.mxu0 %v1482
  %2105 = vmatprep.subr.bf16.mxu0 0
  %2106 = vmatpush1.bf16.msra.mxu0 %v1481
  %2107 = vmatprep.subr.bf16.mxu0 0
  %2108 = vmatpush1.bf16.msra.mxu0 %v1480
  %2109 = vmatprep.subr.bf16.mxu0 0
  %2110 = vmatpush1.bf16.msra.mxu0 %v1479
  %2111 = vmatprep.subr.bf16.mxu0 0
  %2112 = vmatpush2.bf16.msra.mxu0 %v1494
  %2113 = vmatprep.subr.bf16.mxu0 0
  %2114 = vmatpush2.bf16.msra.mxu0 %v1493
  %2115 = vmatprep.subr.bf16.mxu0 0
  %2116 = vmatpush2.bf16.msra.mxu0 %v1492
  %2117 = vmatprep.subr.bf16.mxu0 0
  %2118 = vmatpush2.bf16.msra.mxu0 %v1491
  %2119 = vmatprep.subr.bf16.mxu0 0
  %2120 = vmatpush2.bf16.msra.mxu0 %v1490
  %2121 = vmatprep.subr.bf16.mxu0 0
  %2122 = vmatpush2.bf16.msra.mxu0 %v1489
  %2123 = vmatprep.subr.bf16.mxu0 0
  %2124 = vmatpush2.bf16.msra.mxu0 %v1488
  %2125 = vmatprep.subr.bf16.mxu0 0
  %2126 = vmatpush2.bf16.msra.mxu0 %v1487
  %2127 = vmatprep.mubr.bf16.mxu0 %v504
  %2128 = vmatmul.mubr.bf16.gmra.mxu0 %v503
  %v2129 = vpop.f32.mrf.mxu0
  %v2130 = vadd.f32 %v2090, %v2129
  %v2131 = vpop.f32.mrf.mxu0
  %v2132 = vpop.f32.mrf.mxu0
  %v2133 = vpop.f32.mrf.mxu0
  %2134 = vdwg.mxu0
  %2135 = vmatprep.subr.bf16.mxu0 0
  %2136 = vmatpush1.bf16.msra.mxu0 %v1502
  %2137 = vmatprep.subr.bf16.mxu0 0
  %2138 = vmatpush1.bf16.msra.mxu0 %v1501
  %2139 = vmatprep.subr.bf16.mxu0 0
  %2140 = vmatpush1.bf16.msra.mxu0 %v1500
  %2141 = vmatprep.subr.bf16.mxu0 0
  %2142 = vmatpush1.bf16.msra.mxu0 %v1499
  %2143 = vmatprep.subr.bf16.mxu0 0
  %2144 = vmatpush1.bf16.msra.mxu0 %v1498
  %2145 = vmatprep.subr.bf16.mxu0 0
  %2146 = vmatpush1.bf16.msra.mxu0 %v1497
  %2147 = vmatprep.subr.bf16.mxu0 0
  %2148 = vmatpush1.bf16.msra.mxu0 %v1496
  %2149 = vmatprep.subr.bf16.mxu0 0
  %2150 = vmatpush1.bf16.msra.mxu0 %v1495
  %2151 = vmatprep.subr.bf16.mxu0 0
  %2152 = vmatpush2.bf16.msra.mxu0 %v1510
  %2153 = vmatprep.subr.bf16.mxu0 0
  %2154 = vmatpush2.bf16.msra.mxu0 %v1509
  %2155 = vmatprep.subr.bf16.mxu0 0
  %2156 = vmatpush2.bf16.msra.mxu0 %v1508
  %2157 = vmatprep.subr.bf16.mxu0 0
  %2158 = vmatpush2.bf16.msra.mxu0 %v1507
  %2159 = vmatprep.subr.bf16.mxu0 0
  %2160 = vmatpush2.bf16.msra.mxu0 %v1506
  %2161 = vmatprep.subr.bf16.mxu0 0
  %2162 = vmatpush2.bf16.msra.mxu0 %v1505
  %2163 = vmatprep.subr.bf16.mxu0 0
  %2164 = vmatpush2.bf16.msra.mxu0 %v1504
  %2165 = vmatprep.subr.bf16.mxu0 0
  %2166 = vmatpush2.bf16.msra.mxu0 %v1503
  %2167 = vmatprep.mubr.bf16.mxu0 %v506
  %2168 = vmatmul.mubr.bf16.gmra.mxu0 %v505
  %v2169 = vpop.f32.mrf.mxu0
  %v2170 = vadd.f32 %v2130, %v2169
  %v2171 = vpop.f32.mrf.mxu0
  %v2172 = vpop.f32.mrf.mxu0
  %v2173 = vpop.f32.mrf.mxu0
  %2174 = vdwg.mxu0
  %2175 = vmatprep.subr.bf16.mxu0 0
  %2176 = vmatpush1.bf16.msra.mxu0 %v1518
  %2177 = vmatprep.subr.bf16.mxu0 0
  %2178 = vmatpush1.bf16.msra.mxu0 %v1517
  %2179 = vmatprep.subr.bf16.mxu0 0
  %2180 = vmatpush1.bf16.msra.mxu0 %v1516
  %2181 = vmatprep.subr.bf16.mxu0 0
  %2182 = vmatpush1.bf16.msra.mxu0 %v1515
  %2183 = vmatprep.subr.bf16.mxu0 0
  %2184 = vmatpush1.bf16.msra.mxu0 %v1514
  %2185 = vmatprep.subr.bf16.mxu0 0
  %2186 = vmatpush1.bf16.msra.mxu0 %v1513
  %2187 = vmatprep.subr.bf16.mxu0 0
  %2188 = vmatpush1.bf16.msra.mxu0 %v1512
  %2189 = vmatprep.subr.bf16.mxu0 0
  %2190 = vmatpush1.bf16.msra.mxu0 %v1511
  %2191 = vmatprep.subr.bf16.mxu0 0
  %2192 = vmatpush2.bf16.msra.mxu0 %v1526
  %2193 = vmatprep.subr.bf16.mxu0 0
  %2194 = vmatpush2.bf16.msra.mxu0 %v1525
  %2195 = vmatprep.subr.bf16.mxu0 0
  %2196 = vmatpush2.bf16.msra.mxu0 %v1524
  %2197 = vmatprep.subr.bf16.mxu0 0
  %2198 = vmatpush2.bf16.msra.mxu0 %v1523
  %2199 = vmatprep.subr.bf16.mxu0 0
  %2200 = vmatpush2.bf16.msra.mxu0 %v1522
  %2201 = vmatprep.subr.bf16.mxu0 0
  %2202 = vmatpush2.bf16.msra.mxu0 %v1521
  %2203 = vmatprep.subr.bf16.mxu0 0
  %2204 = vmatpush2.bf16.msra.mxu0 %v1520
  %2205 = vmatprep.subr.bf16.mxu0 0
  %2206 = vmatpush2.bf16.msra.mxu0 %v1519
  %2207 = vmatprep.mubr.bf16.mxu0 %v508
  %2208 = vmatmul.mubr.bf16.gmra.mxu0 %v507
  %v2209 = vpop.f32.mrf.mxu0
  %v2210 = vadd.f32 %v2170, %v2209
  %v2211 = vpop.f32.mrf.mxu0
  %v2212 = vpop.f32.mrf.mxu0
  %v2213 = vpop.f32.mrf.mxu0
  %2214 = vdwg.mxu0
  %2215 = vmatprep.subr.bf16.mxu0 0
  %2216 = vmatpush1.bf16.msra.mxu0 %v1534
  %2217 = vmatprep.subr.bf16.mxu0 0
  %2218 = vmatpush1.bf16.msra.mxu0 %v1533
  %2219 = vmatprep.subr.bf16.mxu0 0
  %2220 = vmatpush1.bf16.msra.mxu0 %v1532
  %2221 = vmatprep.subr.bf16.mxu0 0
  %2222 = vmatpush1.bf16.msra.mxu0 %v1531
  %2223 = vmatprep.subr.bf16.mxu0 0
  %2224 = vmatpush1.bf16.msra.mxu0 %v1530
  %2225 = vmatprep.subr.bf16.mxu0 0
  %2226 = vmatpush1.bf16.msra.mxu0 %v1529
  %2227 = vmatprep.subr.bf16.mxu0 0
  %2228 = vmatpush1.bf16.msra.mxu0 %v1528
  %2229 = vmatprep.subr.bf16.mxu0 0
  %2230 = vmatpush1.bf16.msra.mxu0 %v1527
  %2231 = vmatprep.subr.bf16.mxu0 0
  %2232 = vmatpush2.bf16.msra.mxu0 0
  %2233 = vmatprep.subr.bf16.mxu0 0
  %2234 = vmatpush2.bf16.msra.mxu0 0
  %2235 = vmatprep.subr.bf16.mxu0 0
  %2236 = vmatpush2.bf16.msra.mxu0 0
  %2237 = vmatprep.subr.bf16.mxu0 0
  %2238 = vmatpush2.bf16.msra.mxu0 0
  %2239 = vmatprep.subr.bf16.mxu0 0
  %2240 = vmatpush2.bf16.msra.mxu0 0
  %2241 = vmatprep.subr.bf16.mxu0 0
  %2242 = vmatpush2.bf16.msra.mxu0 0
  %2243 = vmatprep.subr.bf16.mxu0 0
  %2244 = vmatpush2.bf16.msra.mxu0 0
  %2245 = vmatprep.subr.bf16.mxu0 0
  %2246 = vmatpush2.bf16.msra.mxu0 0
  %2247 = vmatprep.mubr.bf16.mxu0 0
  %2248 = vmatmul.mubr.bf16.gmra.mxu0 %v509
  %v2249 = vpop.f32.mrf.mxu0
  %v2250 = vadd.f32 %v2210, %v2249
  %v2251 = vpop.f32.mrf.mxu0
  %v2252 = vpop.f32.mrf.mxu0
  %v2253 = vpop.f32.mrf.mxu0
  %2254 = vdwg.mxu0
  %v2255 = vmax.f32 %v2250, 0.0
  %v2256 = vpack.c.bf16 %v2255, %v2255
  %v2257 = vld [vmem:[%s3] sm:$0xf]
  %v2258 = vld [vmem:[%s3 + $0x4] sm:$0xf]
  %v2259 = vld [vmem:[%s3 + $0x8] sm:$0xf]
  %v2260 = vld [vmem:[%s3 + $0xc] sm:$0xf]
  %v2261 = vld [vmem:[%s3 + $0x10] sm:$0xf]
  %v2262 = vld [vmem:[%s3 + $0x14] sm:$0xf]
  %v2263 = vld [vmem:[%s3 + $0x18] sm:$0xf]
  %v2264 = vld [vmem:[%s3 + $0x1c] sm:$0xf]
  %v2265 = vld [vmem:[%s3 + $0x20] sm:$0xf]
  %v2266 = vld [vmem:[%s3 + $0x24] sm:$0xf]
  %v2267 = vld [vmem:[%s3 + $0x28] sm:$0xf]
  %v2268 = vld [vmem:[%s3 + $0x2c] sm:$0xf]
  %v2269 = vld [vmem:[%s3 + $0x30] sm:$0xf]
  %v2270 = vld [vmem:[%s3 + $0x34] sm:$0xf]
  %v2271 = vld [vmem:[%s3 + $0x38] sm:$0xf]
  %v2272 = vld [vmem:[%s3 + $0x3c] sm:$0xf]
  %v2273 = vld [vmem:[%s4] sm:$0x1]
  %v2275 = vlaneseq
  %v2276 = vshrl.u32 %v2275, 7
  %v2277 = vsub.s32 0, %v2276
  %v2278 = vrot.slane %v2273, %v2277
  %v2296 = vunpack.c.l.b16 %v2257
  %v2297 = vunpack.c.l.b16 %v2258
  %v2298 = vunpack.c.l.b16 %v2259
  %v2299 = vunpack.c.l.b16 %v2260
  %v2300 = vunpack.c.l.b16 %v2261
  %v2301 = vunpack.c.l.b16 %v2262
  %v2302 = vunpack.c.l.b16 %v2263
  %v2303 = vunpack.c.l.b16 %v2264
  %v2304 = vunpack.c.l.b16 %v2265
  %v2305 = vunpack.c.l.b16 %v2266
  %v2306 = vunpack.c.l.b16 %v2267
  %v2307 = vunpack.c.l.b16 %v2268
  %v2308 = vunpack.c.l.b16 %v2269
  %v2309 = vunpack.c.l.b16 %v2270
  %v2310 = vunpack.c.l.b16 %v2271
  %v2311 = vunpack.c.l.b16 %v2272
  %v2312 = vpack.c.b16 %v2297, %v2296
  %v2313 = vpack.c.b16 %v2299, %v2298
  %v2314 = vpack.c.b16 %v2301, %v2300
  %v2315 = vpack.c.b16 %v2303, %v2302
  %v2316 = vpack.c.b16 %v2305, %v2304
  %v2317 = vpack.c.b16 %v2307, %v2306
  %v2318 = vpack.c.b16 %v2309, %v2308
  %v2319 = vpack.c.b16 %v2311, %v2310
  %2328 = vmatprep.subr.bf16.mxu0 0
  %2329 = vmatpush1.bf16.msra.mxu0 %v2319
  %2330 = vmatprep.subr.bf16.mxu0 0
  %2331 = vmatpush1.bf16.msra.mxu0 %v2318
  %2332 = vmatprep.subr.bf16.mxu0 0
  %2333 = vmatpush1.bf16.msra.mxu0 %v2317
  %2334 = vmatprep.subr.bf16.mxu0 0
  %2335 = vmatpush1.bf16.msra.mxu0 %v2316
  %2336 = vmatprep.subr.bf16.mxu0 0
  %2337 = vmatpush1.bf16.msra.mxu0 %v2315
  %2338 = vmatprep.subr.bf16.mxu0 0
  %2339 = vmatpush1.bf16.msra.mxu0 %v2314
  %2340 = vmatprep.subr.bf16.mxu0 0
  %2341 = vmatpush1.bf16.msra.mxu0 %v2313
  %2342 = vmatprep.subr.bf16.mxu0 0
  %2343 = vmatpush1.bf16.msra.mxu0 %v2312
  %2344 = vmatprep.subr.bf16.mxu0 0
  %2345 = vmatpush2.bf16.msra.mxu0 0
  %2346 = vmatprep.subr.bf16.mxu0 0
  %2347 = vmatpush2.bf16.msra.mxu0 0
  %2348 = vmatprep.subr.bf16.mxu0 0
  %2349 = vmatpush2.bf16.msra.mxu0 0
  %2350 = vmatprep.subr.bf16.mxu0 0
  %2351 = vmatpush2.bf16.msra.mxu0 0
  %2352 = vmatprep.subr.bf16.mxu0 0
  %2353 = vmatpush2.bf16.msra.mxu0 0
  %2354 = vmatprep.subr.bf16.mxu0 0
  %2355 = vmatpush2.bf16.msra.mxu0 0
  %2356 = vmatprep.subr.bf16.mxu0 0
  %2357 = vmatpush2.bf16.msra.mxu0 0
  %2358 = vmatprep.subr.bf16.mxu0 0
  %2359 = vmatpush2.bf16.msra.mxu0 0
  %2360 = vmatprep.mubr.bf16.mxu0 0
  %2361 = vmatmul.mubr.bf16.gmra.mxu0 %v2256
  %v2362 = vpop.f32.mrf.mxu0
  %v2363 = vadd.f32 %v2278, %v2362
  %v2364 = vpop.f32.mrf.mxu0
  %v2365 = vpop.f32.mrf.mxu0
  %v2366 = vpop.f32.mrf.mxu0
  %2367 = vdwg.mxu0
  %v2368 = vmax.f32 %v2363, 0.0
  %v2369 = vpack.c.bf16 %v2368, %v2368
  %v2370 = vld [vmem:[%s5] sm:$0xf]
  %v2371 = vld [vmem:[%s5 + $0x4] sm:$0xf]
  %v2372 = vld [vmem:[%s5 + $0x8] sm:$0xf]
  %v2373 = vld [vmem:[%s5 + $0xc] sm:$0xf]
  %v2374 = vld [vmem:[%s5 + $0x10] sm:$0xf]
  %v2375 = vld [vmem:[%s5 + $0x14] sm:$0xf]
  %v2376 = vld [vmem:[%s5 + $0x18] sm:$0xf]
  %v2377 = vld [vmem:[%s5 + $0x1c] sm:$0xf]
  %v2378 = vld [vmem:[%s5 + $0x20] sm:$0xf]
  %v2379 = vld [vmem:[%s5 + $0x24] sm:$0xf]
  %v2380 = vld [vmem:[%s5 + $0x28] sm:$0xf]
  %v2381 = vld [vmem:[%s5 + $0x2c] sm:$0xf]
  %v2382 = vld [vmem:[%s5 + $0x30] sm:$0xf]
  %v2383 = vld [vmem:[%s5 + $0x34] sm:$0xf]
  %v2384 = vld [vmem:[%s5 + $0x38] sm:$0xf]
  %v2385 = vld [vmem:[%s5 + $0x3c] sm:$0xf]
  %v2386 = vld [vmem:[%s6] sm:$0x1]
  %v2388 = vlaneseq
  %v2389 = vshrl.u32 %v2388, 7
  %v2390 = vsub.s32 0, %v2389
  %v2391 = vrot.slane %v2386, %v2390
  %v2409 = vunpack.c.l.b16 %v2370
  %v2410 = vunpack.c.l.b16 %v2371
  %v2411 = vunpack.c.l.b16 %v2372
  %v2412 = vunpack.c.l.b16 %v2373
  %v2413 = vunpack.c.l.b16 %v2374
  %v2414 = vunpack.c.l.b16 %v2375
  %v2415 = vunpack.c.l.b16 %v2376
  %v2416 = vunpack.c.l.b16 %v2377
  %v2417 = vunpack.c.l.b16 %v2378
  %v2418 = vunpack.c.l.b16 %v2379
  %v2419 = vunpack.c.l.b16 %v2380
  %v2420 = vunpack.c.l.b16 %v2381
  %v2421 = vunpack.c.l.b16 %v2382
  %v2422 = vunpack.c.l.b16 %v2383
  %v2423 = vunpack.c.l.b16 %v2384
  %v2424 = vunpack.c.l.b16 %v2385
  %v2425 = vpack.c.b16 %v2410, %v2409
  %v2426 = vpack.c.b16 %v2412, %v2411
  %v2427 = vpack.c.b16 %v2414, %v2413
  %v2428 = vpack.c.b16 %v2416, %v2415
  %v2429 = vpack.c.b16 %v2418, %v2417
  %v2430 = vpack.c.b16 %v2420, %v2419
  %v2431 = vpack.c.b16 %v2422, %v2421
  %v2432 = vpack.c.b16 %v2424, %v2423
  %2441 = vmatprep.subr.bf16.mxu0 0
  %2442 = vmatpush1.bf16.msra.mxu0 %v2432
  %2443 = vmatprep.subr.bf16.mxu0 0
  %2444 = vmatpush1.bf16.msra.mxu0 %v2431
  %2445 = vmatprep.subr.bf16.mxu0 0
  %2446 = vmatpush1.bf16.msra.mxu0 %v2430
  %2447 = vmatprep.subr.bf16.mxu0 0
  %2448 = vmatpush1.bf16.msra.mxu0 %v2429
  %2449 = vmatprep.subr.bf16.mxu0 0
  %2450 = vmatpush1.bf16.msra.mxu0 %v2428
  %2451 = vmatprep.subr.bf16.mxu0 0
  %2452 = vmatpush1.bf16.msra.mxu0 %v2427
  %2453 = vmatprep.subr.bf16.mxu0 0
  %2454 = vmatpush1.bf16.msra.mxu0 %v2426
  %2455 = vmatprep.subr.bf16.mxu0 0
  %2456 = vmatpush1.bf16.msra.mxu0 %v2425
  %2457 = vmatprep.subr.bf16.mxu0 0
  %2458 = vmatpush2.bf16.msra.mxu0 0
  %2459 = vmatprep.subr.bf16.mxu0 0
  %2460 = vmatpush2.bf16.msra.mxu0 0
  %2461 = vmatprep.subr.bf16.mxu0 0
  %2462 = vmatpush2.bf16.msra.mxu0 0
  %2463 = vmatprep.subr.bf16.mxu0 0
  %2464 = vmatpush2.bf16.msra.mxu0 0
  %2465 = vmatprep.subr.bf16.mxu0 0
  %2466 = vmatpush2.bf16.msra.mxu0 0
  %2467 = vmatprep.subr.bf16.mxu0 0
  %2468 = vmatpush2.bf16.msra.mxu0 0
  %2469 = vmatprep.subr.bf16.mxu0 0
  %2470 = vmatpush2.bf16.msra.mxu0 0
  %2471 = vmatprep.subr.bf16.mxu0 0
  %2472 = vmatpush2.bf16.msra.mxu0 0
  %2473 = vmatprep.mubr.bf16.mxu0 0
  %2474 = vmatmul.mubr.bf16.gmra.mxu0 %v2369
  %v2475 = vpop.f32.mrf.mxu0
  %v2476 = vadd.f32 %v2391, %v2475
  %v2477 = vpop.f32.mrf.mxu0
  %v2478 = vpop.f32.mrf.mxu0
  %v2479 = vpop.f32.mrf.mxu0
  %2480 = vdwg.mxu0
  %2481 = vst [vmem:[%s7] sm:$0xff] %v2476
  // Predicated region
  $region30: #{cnn_forward.5} parent=0 // pred_check
    _
  $region31: #{cnn_forward.5} parent=0 // pred_check_branch
    %2483 = sbr.rel (0) target = $region33
  $region32: #{cnn_forward.5} parent=0 // pred_region
    _
  $region33: #{cnn_forward.5} parent=0 // pred_fallthru
    _
  // Predicated region
  $region34: #{cnn_forward.5} parent=0 // pred_check
    _
  $region35: #{cnn_forward.5} parent=0 // pred_check_branch
    %2485 = sbr.rel (0) target = $region37
  $region36: #{cnn_forward.5} parent=0 // pred_region
    _
  $region37: #{cnn_forward.5} parent=0 // pred_fallthru
    _

</llo_original>
